<compile_context>
chip_gen: v7x
topology: tpu7x:2x2x1
jax: 0.10.0
libtpu: 0.0.40
codegen_flags: <defaults>
</compile_context>

<pallas_src>
import functools

import jax
import jax.numpy as jnp
from jax import lax
from jax.experimental import pallas as pl
from jax.experimental.pallas import tpu as pltpu


_EPS = 1e-6
_NEG_INF = -1e9
_VMEM_LIMIT = 48 * 1024 * 1024  # > v5e 16MiB / v6e-v7x 32MiB defaults, < any physical cap


# ----------------------------- tiling helpers -----------------------------

def _row_tile(m):
    for t in (1024, 512, 256):          # 256-multiples keep the 2x256^2 MXU fed
        if m >= t:
            return t
    return ((m + 7) // 8) * 8           # tiny: single sublane-aligned block


def _seq_tile(l):
    for t in (256, 128):
        if l >= t:
            return t
    return ((l + 7) // 8) * 8


def _pad_rows(x, m_pad):
    if x.shape[0] == m_pad:
        return x
    pad = [(0, m_pad - x.shape[0])] + [(0, 0)] * (x.ndim - 1)
    return jnp.pad(x, pad)


# ----------------------------- LayerNorm kernels -----------------------------

def _layernorm_body(y, g, b, eps):
    mean = jnp.mean(y, axis=-1, keepdims=True)
    var = jnp.mean(jnp.square(y - mean), axis=-1, keepdims=True)
    return (y - mean) * lax.rsqrt(var + eps) * g + b


def _ln_kernel(x_ref, g_ref, b_ref, o_ref, *, eps):
    y = x_ref[...].astype(jnp.float32)
    o_ref[...] = _layernorm_body(y, g_ref[...], b_ref[...], eps).astype(o_ref.dtype)


def layernorm(x, gamma, beta, eps=_EPS):
    """LayerNorm over last dim.  x: (M, D)."""
    M, D = x.shape
    tm = _row_tile(M)
    mp = pl.cdiv(M, tm) * tm
    y = pl.pallas_call(
        functools.partial(_ln_kernel, eps=eps),
        out_shape=jax.ShapeDtypeStruct((mp, D), x.dtype),
        grid=(mp // tm,),
        in_specs=[
            pl.BlockSpec((tm, D), lambda i: (i, 0)),
            pl.BlockSpec((1, D), lambda i: (0, 0)),
            pl.BlockSpec((1, D), lambda i: (0, 0)),
        ],
        out_specs=pl.BlockSpec((tm, D), lambda i: (i, 0)),
        compiler_params=pltpu.CompilerParams(dimension_semantics=("parallel",)),
    )(_pad_rows(x, mp), gamma, beta)
    return y[:M]


# ----------------- fc projection + residual + LayerNorm (fused) -----------------

def _proj_add_ln_kernel(x_ref, w_ref, r_ref, g_ref, b_ref, o_ref, *, eps):
    # y = LayerNorm(x @ w + residual); bf16 operands, f32 accumulation & LN math.
    y = jnp.dot(x_ref[...].astype(jnp.bfloat16), w_ref[...],
                preferred_element_type=jnp.float32)
    y = y + r_ref[...].astype(jnp.float32)
    o_ref[...] = _layernorm_body(y, g_ref[...], b_ref[...], eps).astype(o_ref.dtype)


def proj_add_layernorm(x, w, residual, gamma, beta, eps=_EPS):
    """LayerNorm(x @ w + residual).  x: (M, K) f32, w: (K, D) bf16, residual: (M, D)."""
    M, K = x.shape
    D = w.shape[1]
    tm = _row_tile(M)
    mp = pl.cdiv(M, tm) * tm
    y = pl.pallas_call(
        functools.partial(_proj_add_ln_kernel, eps=eps),
        out_shape=jax.ShapeDtypeStruct((mp, D), residual.dtype),
        grid=(mp // tm,),
        in_specs=[
            pl.BlockSpec((tm, K), lambda i: (i, 0)),
            pl.BlockSpec((K, D), lambda i: (0, 0)),
            pl.BlockSpec((tm, D), lambda i: (i, 0)),
            pl.BlockSpec((1, D), lambda i: (0, 0)),
            pl.BlockSpec((1, D), lambda i: (0, 0)),
        ],
        out_specs=pl.BlockSpec((tm, D), lambda i: (i, 0)),
        compiler_params=pltpu.CompilerParams(
            dimension_semantics=("parallel",), vmem_limit_bytes=_VMEM_LIMIT),
    )(_pad_rows(x, mp), w, _pad_rows(residual, mp), gamma, beta)
    return y[:M]


# ----------------------------- fused FFN sublayer -----------------------------

def _ffn_kernel(x_ref, w1_ref, b1_ref, w2_ref, b2_ref, g_ref, b_ref, o_ref, *, eps):
    # y = LayerNorm(relu(x @ w1 + b1) @ w2 + b2 + x); bf16 matmul operands, f32 math.
    x = x_ref[...].astype(jnp.float32)
    h = jnp.dot(x.astype(jnp.bfloat16), w1_ref[...],
                preferred_element_type=jnp.float32) + b1_ref[...]
    h = jnp.maximum(h, 0.0)
    # TODO(synk): stream d_inner chunks as an "arbitrary" reduction axis for d_inner>=4096.
    y = jnp.dot(h.astype(jnp.bfloat16), w2_ref[...],
                preferred_element_type=jnp.float32)
    y = y + b2_ref[...] + x
    o_ref[...] = _layernorm_body(y, g_ref[...], b_ref[...], eps).astype(o_ref.dtype)


def positionwise_ffn(p, x):
    """Whole FFN sublayer (w1 -> ReLU -> w2 -> +residual -> LN) in one kernel."""
    B, L, D = x.shape
    M = B * L
    Din = p["w1"].shape[1]
    tm = _row_tile(M)
    mp = pl.cdiv(M, tm) * tm
    y = pl.pallas_call(
        functools.partial(_ffn_kernel, eps=_EPS),
        out_shape=jax.ShapeDtypeStruct((mp, D), x.dtype),
        grid=(mp // tm,),
        in_specs=[
            pl.BlockSpec((tm, D), lambda i: (i, 0)),
            pl.BlockSpec((D, Din), lambda i: (0, 0)),
            pl.BlockSpec((1, Din), lambda i: (0, 0)),
            pl.BlockSpec((Din, D), lambda i: (0, 0)),
            pl.BlockSpec((1, D), lambda i: (0, 0)),
            pl.BlockSpec((1, D), lambda i: (0, 0)),
            pl.BlockSpec((1, D), lambda i: (0, 0)),
        ],
        out_specs=pl.BlockSpec((tm, D), lambda i: (i, 0)),
        compiler_params=pltpu.CompilerParams(
            dimension_semantics=("parallel",), vmem_limit_bytes=_VMEM_LIMIT),
    )(_pad_rows(x.reshape(M, D), mp), p["w1"], p["b1"], p["w2"], p["b2"],
      p["ln_g"], p["ln_b"])
    return y[:M].reshape(B, L, D)


# ------------------- fused QKV-projection + attention kernel -------------------

def _fused_attn_kernel(xq_ref, xkv_ref, mask_ref, wq_ref, wk_ref, wv_ref, o_ref,
                       q_s, k_s, v_s, *, n_head, d_k, d_v, causal, tq):
    # Project q/k/v in VMEM (bf16 operands, f32 accumulation), stash as bf16 scratch.
    xq = xq_ref[0].astype(jnp.bfloat16)                     # (tq, D)
    xkv = xkv_ref[0].astype(jnp.bfloat16)                   # (Lk, D)
    q_s[...] = jnp.dot(xq, wq_ref[...],
                       preferred_element_type=jnp.float32).astype(jnp.bfloat16)
    k_s[...] = jnp.dot(xkv, wk_ref[...],
                       preferred_element_type=jnp.float32).astype(jnp.bfloat16)
    v_s[...] = jnp.dot(xkv, wv_ref[...],
                       preferred_element_type=jnp.float32).astype(jnp.bfloat16)

    lk = xkv_ref.shape[1]
    # Additive mask bias built in-kernel: key padding (from the compact int32 mask)
    # plus, for self-attention, the causal structure via broadcasted_iota.
    key_ok = mask_ref[0]                                    # (1, Lk) int32
    bias = jnp.where(key_ok != 0, 0.0, _NEG_INF).astype(jnp.float32)  # (1, Lk)
    if causal:
        q_pos = pl.program_id(1) * tq + lax.broadcasted_iota(jnp.int32, (tq, lk), 0)
        k_pos = lax.broadcasted_iota(jnp.int32, (tq, lk), 1)
        bias = bias + jnp.where(k_pos <= q_pos, 0.0, _NEG_INF).astype(jnp.float32)

    for h in range(n_head):
        qh = q_s[:, h * d_k:(h + 1) * d_k]                  # Ref slices (static)
        kh = k_s[:, h * d_k:(h + 1) * d_k]
        vh = v_s[:, h * d_v:(h + 1) * d_v]
        # Q.K^T: contract last dims -> no in-kernel transpose.  1/sqrt(d_k) already
        # folded into wq.
        s = lax.dot_general(qh, kh, (((1,), (1,)), ((), ())),
                            preferred_element_type=jnp.float32)      # (tq, Lk) f32
        s = s + bias
        s = s - jnp.max(s, axis=-1, keepdims=True)
        p = jnp.exp(s)
        p = p * pl.reciprocal(jnp.sum(p, axis=-1, keepdims=True), approx=True)
        oh = jnp.dot(p.astype(jnp.bfloat16), vh, preferred_element_type=jnp.float32)
        o_ref[0, :, h * d_v:(h + 1) * d_v] = oh.astype(o_ref.dtype)  # direct per-head store


def _attn_cost(B, H, Lq, Lk, d_k, d_v, D):
    flops = 2 * B * (Lq * D * H * d_k + Lk * D * H * (d_k + d_v)
                     + H * Lq * Lk * (d_k + d_v))
    bytes_accessed = (4 * B * (Lq * D + Lk * D + Lq * H * d_v)
                      + 2 * D * H * (2 * d_k + d_v) + 4 * B * Lk)
    return pl.CostEstimate(flops=flops, transcendentals=B * H * Lq * Lk,
                           bytes_accessed=bytes_accessed)


def fused_attention(x_q, x_kv, key_mask, wq, wk, wv, n_head, d_k, d_v, causal):
    """Fused projection + multi-head attention.

    x_q: (B, Lq, D) f32, x_kv: (B, Lk, D) f32, key_mask: (B, 1, Lk) int32,
    wq/wk: (D, H*d_k) bf16, wv: (D, H*d_v) bf16.  Returns (B, Lq, H*d_v) f32.
    TODO(synk): add an online-softmax Lk grid axis for very long Lk (flash style).
    """
    B, Lq, D = x_q.shape
    Lk = x_kv.shape[1]
    hdk, hdv = n_head * d_k, n_head * d_v
    tq = _seq_tile(Lq)
    lq_pad = pl.cdiv(Lq, tq) * tq
    if lq_pad != Lq:
        x_q = jnp.pad(x_q, ((0, 0), (0, lq_pad - Lq), (0, 0)))

    kern = functools.partial(_fused_attn_kernel, n_head=n_head, d_k=d_k, d_v=d_v,
                             causal=causal, tq=tq)
    out = pl.pallas_call(
        kern,
        out_shape=jax.ShapeDtypeStruct((B, lq_pad, hdv), x_q.dtype),
        grid=(B, lq_pad // tq),
        in_specs=[
            pl.BlockSpec((1, tq, D), lambda b, qi: (b, qi, 0)),
            pl.BlockSpec((1, Lk, D), lambda b, qi: (b, 0, 0)),
            pl.BlockSpec((1, 1, Lk), lambda b, qi: (b, 0, 0)),
            pl.BlockSpec((D, hdk), lambda b, qi: (0, 0)),
            pl.BlockSpec((D, hdk), lambda b, qi: (0, 0)),
            pl.BlockSpec((D, hdv), lambda b, qi: (0, 0)),
        ],
        out_specs=pl.BlockSpec((1, tq, hdv), lambda b, qi: (b, qi, 0)),
        scratch_shapes=[
            pltpu.VMEM((tq, hdk), jnp.bfloat16),
            pltpu.VMEM((Lk, hdk), jnp.bfloat16),
            pltpu.VMEM((Lk, hdv), jnp.bfloat16),
        ],
        compiler_params=pltpu.CompilerParams(
            dimension_semantics=("parallel", "parallel"),
            vmem_limit_bytes=_VMEM_LIMIT),
        cost_estimate=_attn_cost(B, n_head, lq_pad, Lk, d_k, d_v, D),
    )(x_q, x_kv, key_mask, wq, wk, wv)
    return out[:, :Lq, :]


# ----------------------------- model glue (plain JAX) -----------------------------

def multi_head_attention(p, x_q, x_kv, key_mask, n_head, d_k, d_v, causal):
    B, Lq, D = x_q.shape
    o = fused_attention(x_q, x_kv, key_mask, p["wq"], p["wk"], p["wv"],
                        n_head, d_k, d_v, causal)
    out = proj_add_layernorm(o.reshape(B * Lq, n_head * d_v), p["fc"],
                             x_q.reshape(B * Lq, D), p["ln_g"], p["ln_b"])
    return out.reshape(B, Lq, D)


def decoder_layer(p, dec_input, enc_output, trg_key_mask, src_key_mask,
                  n_head, d_k, d_v):
    x = multi_head_attention(p["slf"], dec_input, dec_input, trg_key_mask,
                             n_head, d_k, d_v, causal=True)
    x = multi_head_attention(p["enc"], x, enc_output, src_key_mask,
                             n_head, d_k, d_v, causal=False)
    return positionwise_ffn(p["ffn"], x)


def decoder_forward(params, trg_seq, trg_mask, enc_output, src_mask,
                    n_head, d_k, d_v, scale_emb=False):
    d_model = params["emb"].shape[1]
    B, L = trg_seq.shape
    # TODO(synk): embedding gather + positional-table add stay in plain JAX (pure gather).
    x = params["emb"][trg_seq]
    if scale_emb:
        x = x * (d_model ** 0.5)
    x = x + params["pos_table"][:L][None, :, :]
    # dropout(p=0.1) -> identity at inference.
    x = layernorm(x.reshape(B * L, d_model), params["ln_g"],
                  params["ln_b"]).reshape(B, L, d_model)

    # Compact (B, 1, Lk) int32 key-padding masks; the causal structure and the -1e9
    # additive bias are rebuilt in-kernel, so no (B, Lq, Lk) f32 bias touches HBM.
    trg_key_mask = (jnp.max(trg_mask, axis=1, keepdims=True) != 0).astype(jnp.int32)
    Ls = enc_output.shape[1]
    src_key_mask = (src_mask != 0).astype(jnp.int32).reshape(B, 1, Ls)

    for layer_p in params["layers"]:
        x = decoder_layer(layer_p, x, enc_output, trg_key_mask, src_key_mask,
                          n_head, d_k, d_v)
    return (x,)


# ----------------------------- parameter init -----------------------------

def sinusoid_table(n_position, d_hid):
    pos = jnp.arange(n_position, dtype=jnp.float32)[:, None]
    i = jnp.arange(d_hid)
    rates = 1.0 / jnp.power(10000.0, (2 * (i // 2)).astype(jnp.float32) / d_hid)
    angles = pos * rates[None, :]
    table = jnp.zeros((n_position, d_hid), jnp.float32)
    table = table.at[:, 0::2].set(jnp.sin(angles[:, 0::2]))
    table = table.at[:, 1::2].set(jnp.cos(angles[:, 1::2]))
    return table


def init_params(key, n_trg_vocab, d_word_vec, n_layers, n_head, d_k, d_v,
                d_model, d_inner, pad_idx, n_position):
    def nrm(k, shape, scale=0.02):
        return scale * jax.random.normal(k, shape, jnp.float32)

    keys = jax.random.split(key, 2 + n_layers)
    emb = nrm(keys[0], (n_trg_vocab, d_word_vec))
    emb = emb.at[pad_idx].set(0.0)                     # padding_idx row is zero

    params = {
        "emb": emb,
        "pos_table": sinusoid_table(n_position, d_word_vec),
        "ln_g": jnp.ones((1, d_model), jnp.float32),
        "ln_b": jnp.zeros((1, d_model), jnp.float32),
        "layers": [],
    }

    def mha_params(k):
        ks = jax.random.split(k, 4)
        return {
            # 1/sqrt(d_k) softmax temperature folded into wq; MXU weights stored bf16.
            "wq": (nrm(ks[0], (d_model, n_head * d_k)) * (d_k ** -0.5)).astype(jnp.bfloat16),
            "wk": nrm(ks[1], (d_model, n_head * d_k)).astype(jnp.bfloat16),
            "wv": nrm(ks[2], (d_model, n_head * d_v)).astype(jnp.bfloat16),
            "fc": nrm(ks[3], (n_head * d_v, d_model)).astype(jnp.bfloat16),
            "ln_g": jnp.ones((1, d_model), jnp.float32),
            "ln_b": jnp.zeros((1, d_model), jnp.float32),
        }

    for li in range(n_layers):
        ks = jax.random.split(keys[2 + li], 4)
        params["layers"].append({
            "slf": mha_params(ks[0]),
            "enc": mha_params(ks[1]),
            "ffn": {
                "w1": nrm(ks[2], (d_model, d_inner)).astype(jnp.bfloat16),
                "b1": jnp.zeros((1, d_inner), jnp.float32),
                "w2": nrm(ks[3], (d_inner, d_model)).astype(jnp.bfloat16),
                "b2": jnp.zeros((1, d_model), jnp.float32),
                "ln_g": jnp.ones((1, d_model), jnp.float32),
                "ln_b": jnp.zeros((1, d_model), jnp.float32),
            },
        })
    return params


# ----------------------------- main -----------------------------

if __name__ == "__main__":
    # Small config consistent with the module signature.
    n_trg_vocab = 50
    d_word_vec = d_model = 32
    n_layers = 2
    n_head = 2
    d_k = d_v = 16
    d_inner = 64
    pad_idx = 0
    n_position = 200

    B, L_trg, L_src = 2, 8, 8

    root = jax.random.PRNGKey(0)
    kp, ks, ke = jax.random.split(root, 3)

    params = init_params(kp, n_trg_vocab, d_word_vec, n_layers, n_head, d_k, d_v,
                         d_model, d_inner, pad_idx, n_position)

    trg_seq = jax.random.randint(ks, (B, L_trg), 1, n_trg_vocab, dtype=jnp.int32)
    trg_seq = trg_seq.at[:, -2:].set(pad_idx)          # some padding tokens

    # trg_mask = pad_mask & subsequent(causal) mask  -> (B, L_trg, L_trg)
    pad_mask = (trg_seq != pad_idx)[:, None, :]                       # (B, 1, L)
    sub_mask = jnp.tril(jnp.ones((1, L_trg, L_trg), jnp.bool_))       # (1, L, L)
    trg_mask = (pad_mask & sub_mask).astype(jnp.float32)              # (B, L, L)

    enc_output = jax.random.normal(ke, (B, L_src, d_model), jnp.float32)
    src_mask = jnp.ones((B, 1, L_src), jnp.float32)                   # (B, 1, L_src)

    fwd = jax.jit(functools.partial(decoder_forward, n_head=n_head, d_k=d_k,
                                    d_v=d_v, scale_emb=False))
    (dec_output,) = fwd(params, trg_seq, trg_mask, enc_output, src_mask)
    dec_output = jax.block_until_ready(dec_output)

    assert dec_output.shape == (B, L_trg, d_model)
    assert bool(jnp.all(jnp.isfinite(dec_output)))
    print("KERNEL_OK")
</pallas_src>

<mosaic_0001>
module attributes {stable_mosaic.version = 11 : i64} {
  func.func @_ln_kernel(%arg0: i32, %arg1: memref<16x32xf32, #tpu.memory_space<vmem>>, %arg2: memref<1x32xf32, #tpu.memory_space<vmem>>, %arg3: memref<1x32xf32, #tpu.memory_space<vmem>>, %arg4: memref<16x32xf32, #tpu.memory_space<vmem>>) attributes {dimension_semantics = [#tpu.dimension_semantics<parallel>], iteration_bounds = array<i64: 1>, scalar_prefetch = 0 : i64, scratch_operands = 0 : i64, tpu.core_type = #tpu.core_type<tc>, window_params = [{transform_indices = @transform_0, window_bounds = array<i64: 16, 32>}, {pipeline_mode = #tpu.pipeline_mode<synchronous>, transform_indices = @transform_1, window_bounds = array<i64: 1, 32>}, {pipeline_mode = #tpu.pipeline_mode<synchronous>, transform_indices = @transform_2, window_bounds = array<i64: 1, 32>}, {transform_indices = @transform_3, window_bounds = array<i64: 16, 32>}]} {
    %c0 = arith.constant 0 : index
    %c0_0 = arith.constant 0 : index
    %0 = vector.load %arg1[%c0, %c0_0] : memref<16x32xf32, #tpu.memory_space<vmem>>, vector<16x32xf32>
    %c0_1 = arith.constant 0 : index
    %c0_2 = arith.constant 0 : index
    %1 = vector.load %arg2[%c0_1, %c0_2] : memref<1x32xf32, #tpu.memory_space<vmem>>, vector<1x32xf32>
    %c0_3 = arith.constant 0 : index
    %c0_4 = arith.constant 0 : index
    %2 = vector.load %arg3[%c0_3, %c0_4] : memref<1x32xf32, #tpu.memory_space<vmem>>, vector<1x32xf32>
    %cst = arith.constant dense<0.000000e+00> : vector<16xf32>
    %3 = vector.multi_reduction <add>, %0, %cst [1] : vector<16x32xf32> to vector<16xf32>
    %4 = vector.shape_cast %3 : vector<16xf32> to vector<16x1xf32>
    %cst_5 = arith.constant 3.200000e+01 : f32
    %5 = vector.broadcast %cst_5 : f32 to vector<16x1xf32>
    %6 = arith.divf %4, %5 : vector<16x1xf32>
    %7 = vector.broadcast %6 : vector<16x1xf32> to vector<16x32xf32>
    %8 = arith.subf %0, %7 : vector<16x32xf32>
    %9 = arith.mulf %8, %8 : vector<16x32xf32>
    %cst_6 = arith.constant dense<0.000000e+00> : vector<16xf32>
    %10 = vector.multi_reduction <add>, %9, %cst_6 [1] : vector<16x32xf32> to vector<16xf32>
    %11 = vector.shape_cast %10 : vector<16xf32> to vector<16x1xf32>
    %cst_7 = arith.constant 3.200000e+01 : f32
    %12 = vector.broadcast %cst_7 : f32 to vector<16x1xf32>
    %13 = arith.divf %11, %12 : vector<16x1xf32>
    %14 = vector.broadcast %6 : vector<16x1xf32> to vector<16x32xf32>
    %15 = arith.subf %0, %14 : vector<16x32xf32>
    %cst_8 = arith.constant 9.99999997E-7 : f32
    %16 = vector.broadcast %cst_8 : f32 to vector<16x1xf32>
    %17 = arith.addf %13, %16 : vector<16x1xf32>
    %18 = math.rsqrt %17 : vector<16x1xf32>
    %19 = vector.broadcast %18 : vector<16x1xf32> to vector<16x32xf32>
    %20 = arith.mulf %15, %19 : vector<16x32xf32>
    %21 = vector.broadcast %1 : vector<1x32xf32> to vector<16x32xf32>
    %22 = arith.mulf %20, %21 : vector<16x32xf32>
    %23 = vector.broadcast %2 : vector<1x32xf32> to vector<16x32xf32>
    %24 = arith.addf %22, %23 : vector<16x32xf32>
    %c0_9 = arith.constant 0 : index
    %c0_10 = arith.constant 0 : index
    %25 = vector.load %arg4[%c0_9, %c0_10] : memref<16x32xf32, #tpu.memory_space<vmem>>, vector<16x32xf32>
    tpu.vector_store %arg4[%c0_9, %c0_10], %24 {strides = array<i32>} : memref<16x32xf32, #tpu.memory_space<vmem>>, vector<16x32xf32>,
    return
  }
  func.func @transform_0(%arg0: i32) -> (i32, i32) {
    %c0_i32 = arith.constant 0 : i32
    %c0_i32_0 = arith.constant 0 : i32
    return %arg0, %c0_i32 : i32, i32
  }
  func.func @transform_1(%arg0: i32) -> (i32, i32) {
    %c0_i32 = arith.constant 0 : i32
    %c0_i32_0 = arith.constant 0 : i32
    %c0_i32_1 = arith.constant 0 : i32
    return %c0_i32, %c0_i32_0 : i32, i32
  }
  func.func @transform_2(%arg0: i32) -> (i32, i32) {
    %c0_i32 = arith.constant 0 : i32
    %c0_i32_0 = arith.constant 0 : i32
    %c0_i32_1 = arith.constant 0 : i32
    return %c0_i32, %c0_i32_0 : i32, i32
  }
  func.func @transform_3(%arg0: i32) -> (i32, i32) {
    %c0_i32 = arith.constant 0 : i32
    %c0_i32_0 = arith.constant 0 : i32
    return %arg0, %c0_i32 : i32, i32
  }
}

module attributes {stable_mosaic.version = 11 : i64} {
  func.func @_proj_add_ln_kernel(%arg0: i32, %arg1: memref<16x32xf32, #tpu.memory_space<vmem>>, %arg2: memref<32x32xbf16, #tpu.memory_space<vmem>>, %arg3: memref<16x32xf32, #tpu.memory_space<vmem>>, %arg4: memref<1x32xf32, #tpu.memory_space<vmem>>, %arg5: memref<1x32xf32, #tpu.memory_space<vmem>>, %arg6: memref<16x32xf32, #tpu.memory_space<vmem>>) attributes {dimension_semantics = [#tpu.dimension_semantics<parallel>], iteration_bounds = array<i64: 1>, scalar_prefetch = 0 : i64, scratch_operands = 0 : i64, tpu.core_type = #tpu.core_type<tc>, window_params = [{transform_indices = @transform_0, window_bounds = array<i64: 16, 32>}, {pipeline_mode = #tpu.pipeline_mode<synchronous>, transform_indices = @transform_1, window_bounds = array<i64: 32, 32>}, {transform_indices = @transform_2, window_bounds = array<i64: 16, 32>}, {pipeline_mode = #tpu.pipeline_mode<synchronous>, transform_indices = @transform_3, window_bounds = array<i64: 1, 32>}, {pipeline_mode = #tpu.pipeline_mode<synchronous>, transform_indices = @transform_4, window_bounds = array<i64: 1, 32>}, {transform_indices = @transform_5, window_bounds = array<i64: 16, 32>}]} {
    %c0 = arith.constant 0 : index
    %c0_0 = arith.constant 0 : index
    %0 = vector.load %arg1[%c0, %c0_0] : memref<16x32xf32, #tpu.memory_space<vmem>>, vector<16x32xf32>
    %1 = arith.truncf %0 : vector<16x32xf32> to vector<16x32xbf16>
    %c0_1 = arith.constant 0 : index
    %c0_2 = arith.constant 0 : index
    %2 = vector.load %arg2[%c0_1, %c0_2] : memref<32x32xbf16, #tpu.memory_space<vmem>>, vector<32x32xbf16>
    %cst = arith.constant dense<0.000000e+00> : vector<16x32xf32>
    %3 = tpu.matmul %1, %2, %cst {dimension_numbers = #tpu.dot_dimension_numbers<[1], [0], [0], [1], [0, 0, 1, 1], [], []>} : vector<16x32xbf16>, vector<32x32xbf16>, vector<16x32xf32> -> vector<16x32xf32>
    %c0_3 = arith.constant 0 : index
    %c0_4 = arith.constant 0 : index
    %4 = vector.load %arg3[%c0_3, %c0_4] : memref<16x32xf32, #tpu.memory_space<vmem>>, vector<16x32xf32>
    %5 = arith.addf %3, %4 : vector<16x32xf32>
    %c0_5 = arith.constant 0 : index
    %c0_6 = arith.constant 0 : index
    %6 = vector.load %arg4[%c0_5, %c0_6] : memref<1x32xf32, #tpu.memory_space<vmem>>, vector<1x32xf32>
    %c0_7 = arith.constant 0 : index
    %c0_8 = arith.constant 0 : index
    %7 = vector.load %arg5[%c0_7, %c0_8] : memref<1x32xf32, #tpu.memory_space<vmem>>, vector<1x32xf32>
    %cst_9 = arith.constant dense<0.000000e+00> : vector<16xf32>
    %8 = vector.multi_reduction <add>, %5, %cst_9 [1] : vector<16x32xf32> to vector<16xf32>
    %9 = vector.shape_cast %8 : vector<16xf32> to vector<16x1xf32>
    %cst_10 = arith.constant 3.200000e+01 : f32
    %10 = vector.broadcast %cst_10 : f32 to vector<16x1xf32>
    %11 = arith.divf %9, %10 : vector<16x1xf32>
    %12 = vector.broadcast %11 : vector<16x1xf32> to vector<16x32xf32>
    %13 = arith.subf %5, %12 : vector<16x32xf32>
    %14 = arith.mulf %13, %13 : vector<16x32xf32>
    %cst_11 = arith.constant dense<0.000000e+00> : vector<16xf32>
    %15 = vector.multi_reduction <add>, %14, %cst_11 [1] : vector<16x32xf32> to vector<16xf32>
    %16 = vector.shape_cast %15 : vector<16xf32> to vector<16x1xf32>
    %cst_12 = arith.constant 3.200000e+01 : f32
    %17 = vector.broadcast %cst_12 : f32 to vector<16x1xf32>
    %18 = arith.divf %16, %17 : vector<16x1xf32>
    %19 = vector.broadcast %11 : vector<16x1xf32> to vector<16x32xf32>
    %20 = arith.subf %5, %19 : vector<16x32xf32>
    %cst_13 = arith.constant 9.99999997E-7 : f32
    %21 = vector.broadcast %cst_13 : f32 to vector<16x1xf32>
    %22 = arith.addf %18, %21 : vector<16x1xf32>
    %23 = math.rsqrt %22 : vector<16x1xf32>
    %24 = vector.broadcast %23 : vector<16x1xf32> to vector<16x32xf32>
    %25 = arith.mulf %20, %24 : vector<16x32xf32>
    %26 = vector.broadcast %6 : vector<1x32xf32> to vector<16x32xf32>
    %27 = arith.mulf %25, %26 : vector<16x32xf32>
    %28 = vector.broadcast %7 : vector<1x32xf32> to vector<16x32xf32>
    %29 = arith.addf %27, %28 : vector<16x32xf32>
    %c0_14 = arith.constant 0 : index
    %c0_15 = arith.constant 0 : index
    %30 = vector.load %arg6[%c0_14, %c0_15] : memref<16x32xf32, #tpu.memory_space<vmem>>, vector<16x32xf32>
    tpu.vector_store %arg6[%c0_14, %c0_15], %29 {strides = array<i32>} : memref<16x32xf32, #tpu.memory_space<vmem>>, vector<16x32xf32>,
    return
  }
  func.func @transform_0(%arg0: i32) -> (i32, i32) {
    %c0_i32 = arith.constant 0 : i32
    %c0_i32_0 = arith.constant 0 : i32
    return %arg0, %c0_i32 : i32, i32
  }
  func.func @transform_1(%arg0: i32) -> (i32, i32) {
    %c0_i32 = arith.constant 0 : i32
    %c0_i32_0 = arith.constant 0 : i32
    %c0_i32_1 = arith.constant 0 : i32
    return %c0_i32, %c0_i32_0 : i32, i32
  }
  func.func @transform_2(%arg0: i32) -> (i32, i32) {
    %c0_i32 = arith.constant 0 : i32
    %c0_i32_0 = arith.constant 0 : i32
    return %arg0, %c0_i32 : i32, i32
  }
  func.func @transform_3(%arg0: i32) -> (i32, i32) {
    %c0_i32 = arith.constant 0 : i32
    %c0_i32_0 = arith.constant 0 : i32
    %c0_i32_1 = arith.constant 0 : i32
    return %c0_i32, %c0_i32_0 : i32, i32
  }
  func.func @transform_4(%arg0: i32) -> (i32, i32) {
    %c0_i32 = arith.constant 0 : i32
    %c0_i32_0 = arith.constant 0 : i32
    %c0_i32_1 = arith.constant 0 : i32
    return %c0_i32, %c0_i32_0 : i32, i32
  }
  func.func @transform_5(%arg0: i32) -> (i32, i32) {
    %c0_i32 = arith.constant 0 : i32
    %c0_i32_0 = arith.constant 0 : i32
    return %arg0, %c0_i32 : i32, i32
  }
}

module attributes {stable_mosaic.version = 11 : i64} {
  func.func @_fused_attn_kernel(%arg0: i32, %arg1: i32, %arg2: memref<1x8x32xf32, #tpu.memory_space<vmem>>, %arg3: memref<1x8x32xf32, #tpu.memory_space<vmem>>, %arg4: memref<1x1x8xi32, #tpu.memory_space<vmem>>, %arg5: memref<32x32xbf16, #tpu.memory_space<vmem>>, %arg6: memref<32x32xbf16, #tpu.memory_space<vmem>>, %arg7: memref<32x32xbf16, #tpu.memory_space<vmem>>, %arg8: memref<1x8x32xf32, #tpu.memory_space<vmem>>, %arg9: memref<8x32xbf16, #tpu.memory_space<vmem>>, %arg10: memref<8x32xbf16, #tpu.memory_space<vmem>>, %arg11: memref<8x32xbf16, #tpu.memory_space<vmem>>) attributes {dimension_semantics = [#tpu.dimension_semantics<parallel>, #tpu.dimension_semantics<parallel>], iteration_bounds = array<i64: 2, 1>, scalar_prefetch = 0 : i64, scratch_operands = 3 : i64, tpu.core_type = #tpu.core_type<tc>, window_params = [{transform_indices = @transform_0, window_bounds = array<i64: 1, 8, 32>}, {transform_indices = @transform_1, window_bounds = array<i64: 1, 8, 32>}, {transform_indices = @transform_2, window_bounds = array<i64: 1, 1, 8>}, {pipeline_mode = #tpu.pipeline_mode<synchronous>, transform_indices = @transform_3, window_bounds = array<i64: 32, 32>}, {pipeline_mode = #tpu.pipeline_mode<synchronous>, transform_indices = @transform_4, window_bounds = array<i64: 32, 32>}, {pipeline_mode = #tpu.pipeline_mode<synchronous>, transform_indices = @transform_5, window_bounds = array<i64: 32, 32>}, {transform_indices = @transform_6, window_bounds = array<i64: 1, 8, 32>}]} {
    %c0 = arith.constant 0 : index
    %c0_0 = arith.constant 0 : index
    %c0_1 = arith.constant 0 : index
    %0 = vector.load %arg2[%c0, %c0_0, %c0_1] : memref<1x8x32xf32, #tpu.memory_space<vmem>>, vector<1x8x32xf32>
    %1 = vector.shape_cast %0 : vector<1x8x32xf32> to vector<8x32xf32>
    %2 = arith.truncf %1 : vector<8x32xf32> to vector<8x32xbf16>
    %c0_2 = arith.constant 0 : index
    %c0_3 = arith.constant 0 : index
    %c0_4 = arith.constant 0 : index
    %3 = vector.load %arg3[%c0_2, %c0_3, %c0_4] : memref<1x8x32xf32, #tpu.memory_space<vmem>>, vector<1x8x32xf32>
    %4 = vector.shape_cast %3 : vector<1x8x32xf32> to vector<8x32xf32>
    %5 = arith.truncf %4 : vector<8x32xf32> to vector<8x32xbf16>
    %c0_5 = arith.constant 0 : index
    %c0_6 = arith.constant 0 : index
    %6 = vector.load %arg5[%c0_5, %c0_6] : memref<32x32xbf16, #tpu.memory_space<vmem>>, vector<32x32xbf16>
    %cst = arith.constant dense<0.000000e+00> : vector<8x32xf32>
    %7 = tpu.matmul %2, %6, %cst {dimension_numbers = #tpu.dot_dimension_numbers<[1], [0], [0], [1], [0, 0, 1, 1], [], []>} : vector<8x32xbf16>, vector<32x32xbf16>, vector<8x32xf32> -> vector<8x32xf32>
    %8 = arith.truncf %7 : vector<8x32xf32> to vector<8x32xbf16>
    %c0_7 = arith.constant 0 : index
    %c0_8 = arith.constant 0 : index
    %9 = vector.load %arg9[%c0_7, %c0_8] : memref<8x32xbf16, #tpu.memory_space<vmem>>, vector<8x32xbf16>
    tpu.vector_store %arg9[%c0_7, %c0_8], %8 {strides = array<i32>} : memref<8x32xbf16, #tpu.memory_space<vmem>>, vector<8x32xbf16>,
    %c0_9 = arith.constant 0 : index
    %c0_10 = arith.constant 0 : index
    %10 = vector.load %arg6[%c0_9, %c0_10] : memref<32x32xbf16, #tpu.memory_space<vmem>>, vector<32x32xbf16>
    %cst_11 = arith.constant dense<0.000000e+00> : vector<8x32xf32>
    %11 = tpu.matmul %5, %10, %cst_11 {dimension_numbers = #tpu.dot_dimension_numbers<[1], [0], [0], [1], [0, 0, 1, 1], [], []>} : vector<8x32xbf16>, vector<32x32xbf16>, vector<8x32xf32> -> vector<8x32xf32>
    %12 = arith.truncf %11 : vector<8x32xf32> to vector<8x32xbf16>
    %c0_12 = arith.constant 0 : index
    %c0_13 = arith.constant 0 : index
    %13 = vector.load %arg10[%c0_12, %c0_13] : memref<8x32xbf16, #tpu.memory_space<vmem>>, vector<8x32xbf16>
    tpu.vector_store %arg10[%c0_12, %c0_13], %12 {strides = array<i32>} : memref<8x32xbf16, #tpu.memory_space<vmem>>, vector<8x32xbf16>,
    %c0_14 = arith.constant 0 : index
    %c0_15 = arith.constant 0 : index
    %14 = vector.load %arg7[%c0_14, %c0_15] : memref<32x32xbf16, #tpu.memory_space<vmem>>, vector<32x32xbf16>
    %cst_16 = arith.constant dense<0.000000e+00> : vector<8x32xf32>
    %15 = tpu.matmul %5, %14, %cst_16 {dimension_numbers = #tpu.dot_dimension_numbers<[1], [0], [0], [1], [0, 0, 1, 1], [], []>} : vector<8x32xbf16>, vector<32x32xbf16>, vector<8x32xf32> -> vector<8x32xf32>
    %16 = arith.truncf %15 : vector<8x32xf32> to vector<8x32xbf16>
    %c0_17 = arith.constant 0 : index
    %c0_18 = arith.constant 0 : index
    %17 = vector.load %arg11[%c0_17, %c0_18] : memref<8x32xbf16, #tpu.memory_space<vmem>>, vector<8x32xbf16>
    tpu.vector_store %arg11[%c0_17, %c0_18], %16 {strides = array<i32>} : memref<8x32xbf16, #tpu.memory_space<vmem>>, vector<8x32xbf16>,
    %c0_19 = arith.constant 0 : index
    %c0_20 = arith.constant 0 : index
    %c0_21 = arith.constant 0 : index
    %18 = vector.load %arg4[%c0_19, %c0_20, %c0_21] : memref<1x1x8xi32, #tpu.memory_space<vmem>>, vector<1x1x8xi32>
    %19 = vector.shape_cast %18 : vector<1x1x8xi32> to vector<1x8xi32>
    %c0_i32 = arith.constant 0 : i32
    %20 = vector.broadcast %c0_i32 : i32 to vector<1x8xi32>
    %21 = arith.cmpi ne, %19, %20 : vector<1x8xi32>
    %cst_22 = arith.constant 0.000000e+00 : f32
    %cst_23 = arith.constant -1.000000e+09 : f32
    %22 = vector.broadcast %cst_22 : f32 to vector<1x8xf32>
    %23 = vector.broadcast %cst_23 : f32 to vector<1x8xf32>
    %24 = arith.select %21, %22, %23 : vector<1x8xi1>, vector<1x8xf32>
    %c8_i32 = arith.constant 8 : i32
    %25 = arith.muli %arg1, %c8_i32 : i32
    %26 = tpu.iota {dimensions = array<i32: 0>} : vector<8x8xi32>
    %27 = vector.broadcast %25 : i32 to vector<8x8xi32>
    %28 = arith.addi %27, %26 : vector<8x8xi32>
    %29 = tpu.iota {dimensions = array<i32: 1>} : vector<8x8xi32>
    %30 = arith.cmpi sle, %29, %28 : vector<8x8xi32>
    %cst_24 = arith.constant 0.000000e+00 : f32
    %cst_25 = arith.constant -1.000000e+09 : f32
    %31 = vector.broadcast %cst_24 : f32 to vector<8x8xf32>
    %32 = vector.broadcast %cst_25 : f32 to vector<8x8xf32>
    %33 = arith.select %30, %31, %32 : vector<8x8xi1>, vector<8x8xf32>
    %34 = vector.broadcast %24 : vector<1x8xf32> to vector<8x8xf32>
    %35 = arith.addf %34, %33 : vector<8x8xf32>
    %c0_26 = arith.constant 0 : index
    %c0_27 = arith.constant 0 : index
    %36 = vector.load %arg9[%c0_26, %c0_27] : memref<8x32xbf16, #tpu.memory_space<vmem>>, vector<8x16xbf16>
    %c0_28 = arith.constant 0 : index
    %c0_29 = arith.constant 0 : index
    %37 = vector.load %arg10[%c0_28, %c0_29] : memref<8x32xbf16, #tpu.memory_space<vmem>>, vector<8x16xbf16>
    %c0_30 = arith.constant 0 : index
    %c0_31 = arith.constant 0 : index
    %38 = vector.load %arg11[%c0_30, %c0_31] : memref<8x32xbf16, #tpu.memory_space<vmem>>, vector<8x16xbf16>
    %cst_32 = arith.constant dense<0.000000e+00> : vector<8x8xf32>
    %39 = tpu.matmul %36, %37, %cst_32 {dimension_numbers = #tpu.dot_dimension_numbers<[1], [1], [0], [0], [0, 0, 1, 0], [], []>} : vector<8x16xbf16>, vector<8x16xbf16>, vector<8x8xf32> -> vector<8x8xf32>
    %40 = arith.addf %39, %35 : vector<8x8xf32>
    %cst_33 = arith.constant dense<0xFF800000> : vector<8xf32>
    %41 = vector.multi_reduction <maximumf>, %40, %cst_33 [1] : vector<8x8xf32> to vector<8xf32>
    %42 = vector.shape_cast %41 : vector<8xf32> to vector<8x1xf32>
    %43 = vector.broadcast %42 : vector<8x1xf32> to vector<8x8xf32>
    %44 = arith.subf %40, %43 : vector<8x8xf32>
    %45 = math.exp %44 : vector<8x8xf32>
    %cst_34 = arith.constant dense<0.000000e+00> : vector<8xf32>
    %46 = vector.multi_reduction <add>, %45, %cst_34 [1] : vector<8x8xf32> to vector<8xf32>
    %47 = vector.shape_cast %46 : vector<8xf32> to vector<8x1xf32>
    %48 = tpu.reciprocal %47 {approx = true} : vector<8x1xf32> -> vector<8x1xf32>
    %49 = vector.broadcast %48 : vector<8x1xf32> to vector<8x8xf32>
    %50 = arith.mulf %45, %49 : vector<8x8xf32>
    %51 = arith.truncf %50 : vector<8x8xf32> to vector<8x8xbf16>
    %cst_35 = arith.constant dense<0.000000e+00> : vector<8x16xf32>
    %52 = tpu.matmul %51, %38, %cst_35 {dimension_numbers = #tpu.dot_dimension_numbers<[1], [0], [0], [1], [0, 0, 1, 1], [], []>} : vector<8x8xbf16>, vector<8x16xbf16>, vector<8x16xf32> -> vector<8x16xf32>
    %c0_36 = arith.constant 0 : index
    %c0_37 = arith.constant 0 : index
    %c0_38 = arith.constant 0 : index
    %53 = vector.load %arg8[%c0_36, %c0_37, %c0_38] : memref<1x8x32xf32, #tpu.memory_space<vmem>>, vector<1x8x16xf32>
    %54 = vector.shape_cast %53 : vector<1x8x16xf32> to vector<8x16xf32>
    %55 = vector.shape_cast %52 : vector<8x16xf32> to vector<1x8x16xf32>
    tpu.vector_store %arg8[%c0_36, %c0_37, %c0_38], %55 {strides = array<i32>} : memref<1x8x32xf32, #tpu.memory_space<vmem>>, vector<1x8x16xf32>,
    %c0_39 = arith.constant 0 : index
    %c16 = arith.constant 16 : index
    %56 = vector.load %arg9[%c0_39, %c16] : memref<8x32xbf16, #tpu.memory_space<vmem>>, vector<8x16xbf16>
    %c0_40 = arith.constant 0 : index
    %c16_41 = arith.constant 16 : index
    %57 = vector.load %arg10[%c0_40, %c16_41] : memref<8x32xbf16, #tpu.memory_space<vmem>>, vector<8x16xbf16>
    %c0_42 = arith.constant 0 : index
    %c16_43 = arith.constant 16 : index
    %58 = vector.load %arg11[%c0_42, %c16_43] : memref<8x32xbf16, #tpu.memory_space<vmem>>, vector<8x16xbf16>
    %cst_44 = arith.constant dense<0.000000e+00> : vector<8x8xf32>
    %59 = tpu.matmul %56, %57, %cst_44 {dimension_numbers = #tpu.dot_dimension_numbers<[1], [1], [0], [0], [0, 0, 1, 0], [], []>} : vector<8x16xbf16>, vector<8x16xbf16>, vector<8x8xf32> -> vector<8x8xf32>
    %60 = arith.addf %59, %35 : vector<8x8xf32>
    %cst_45 = arith.constant dense<0xFF800000> : vector<8xf32>
    %61 = vector.multi_reduction <maximumf>, %60, %cst_45 [1] : vector<8x8xf32> to vector<8xf32>
    %62 = vector.shape_cast %61 : vector<8xf32> to vector<8x1xf32>
    %63 = vector.broadcast %62 : vector<8x1xf32> to vector<8x8xf32>
    %64 = arith.subf %60, %63 : vector<8x8xf32>
    %65 = math.exp %64 : vector<8x8xf32>
    %cst_46 = arith.constant dense<0.000000e+00> : vector<8xf32>
    %66 = vector.multi_reduction <add>, %65, %cst_46 [1] : vector<8x8xf32> to vector<8xf32>
    %67 = vector.shape_cast %66 : vector<8xf32> to vector<8x1xf32>
    %68 = tpu.reciprocal %67 {approx = true} : vector<8x1xf32> -> vector<8x1xf32>
    %69 = vector.broadcast %68 : vector<8x1xf32> to vector<8x8xf32>
    %70 = arith.mulf %65, %69 : vector<8x8xf32>
    %71 = arith.truncf %70 : vector<8x8xf32> to vector<8x8xbf16>
    %cst_47 = arith.constant dense<0.000000e+00> : vector<8x16xf32>
    %72 = tpu.matmul %71, %58, %cst_47 {dimension_numbers = #tpu.dot_dimension_numbers<[1], [0], [0], [1], [0, 0, 1, 1], [], []>} : vector<8x8xbf16>, vector<8x16xbf16>, vector<8x16xf32> -> vector<8x16xf32>
    %c0_48 = arith.constant 0 : index
    %c0_49 = arith.constant 0 : index
    %c16_50 = arith.constant 16 : index
    %73 = vector.load %arg8[%c0_48, %c0_49, %c16_50] : memref<1x8x32xf32, #tpu.memory_space<vmem>>, vector<1x8x16xf32>
    %74 = vector.shape_cast %73 : vector<1x8x16xf32> to vector<8x16xf32>
    %75 = vector.shape_cast %72 : vector<8x16xf32> to vector<1x8x16xf32>
    tpu.vector_store %arg8[%c0_48, %c0_49, %c16_50], %75 {strides = array<i32>} : memref<1x8x32xf32, #tpu.memory_space<vmem>>, vector<1x8x16xf32>,
    return
  }
  func.func @transform_0(%arg0: i32, %arg1: i32) -> (i32, i32, i32) {
    %c0_i32 = arith.constant 0 : i32
    %c0_i32_0 = arith.constant 0 : i32
    return %arg0, %arg1, %c0_i32 : i32, i32, i32
  }
  func.func @transform_1(%arg0: i32, %arg1: i32) -> (i32, i32, i32) {
    %c0_i32 = arith.constant 0 : i32
    %c0_i32_0 = arith.constant 0 : i32
    %c0_i32_1 = arith.constant 0 : i32
    return %arg0, %c0_i32, %c0_i32_0 : i32, i32, i32
  }
  func.func @transform_2(%arg0: i32, %arg1: i32) -> (i32, i32, i32) {
    %c0_i32 = arith.constant 0 : i32
    %c0_i32_0 = arith.constant 0 : i32
    %c0_i32_1 = arith.constant 0 : i32
    return %arg0, %c0_i32, %c0_i32_0 : i32, i32, i32
  }
  func.func @transform_3(%arg0: i32, %arg1: i32) -> (i32, i32) {
    %c0_i32 = arith.constant 0 : i32
    %c0_i32_0 = arith.constant 0 : i32
    %c0_i32_1 = arith.constant 0 : i32
    return %c0_i32, %c0_i32_0 : i32, i32
  }
  func.func @transform_4(%arg0: i32, %arg1: i32) -> (i32, i32) {
    %c0_i32 = arith.constant 0 : i32
    %c0_i32_0 = arith.constant 0 : i32
    %c0_i32_1 = arith.constant 0 : i32
    return %c0_i32, %c0_i32_0 : i32, i32
  }
  func.func @transform_5(%arg0: i32, %arg1: i32) -> (i32, i32) {
    %c0_i32 = arith.constant 0 : i32
    %c0_i32_0 = arith.constant 0 : i32
    %c0_i32_1 = arith.constant 0 : i32
    return %c0_i32, %c0_i32_0 : i32, i32
  }
  func.func @transform_6(%arg0: i32, %arg1: i32) -> (i32, i32, i32) {
    %c0_i32 = arith.constant 0 : i32
    %c0_i32_0 = arith.constant 0 : i32
    return %arg0, %arg1, %c0_i32 : i32, i32, i32
  }
}

module attributes {stable_mosaic.version = 11 : i64} {
  func.func @_fused_attn_kernel(%arg0: i32, %arg1: i32, %arg2: memref<1x8x32xf32, #tpu.memory_space<vmem>>, %arg3: memref<1x8x32xf32, #tpu.memory_space<vmem>>, %arg4: memref<1x1x8xi32, #tpu.memory_space<vmem>>, %arg5: memref<32x32xbf16, #tpu.memory_space<vmem>>, %arg6: memref<32x32xbf16, #tpu.memory_space<vmem>>, %arg7: memref<32x32xbf16, #tpu.memory_space<vmem>>, %arg8: memref<1x8x32xf32, #tpu.memory_space<vmem>>, %arg9: memref<8x32xbf16, #tpu.memory_space<vmem>>, %arg10: memref<8x32xbf16, #tpu.memory_space<vmem>>, %arg11: memref<8x32xbf16, #tpu.memory_space<vmem>>) attributes {dimension_semantics = [#tpu.dimension_semantics<parallel>, #tpu.dimension_semantics<parallel>], iteration_bounds = array<i64: 2, 1>, scalar_prefetch = 0 : i64, scratch_operands = 3 : i64, tpu.core_type = #tpu.core_type<tc>, window_params = [{transform_indices = @transform_0, window_bounds = array<i64: 1, 8, 32>}, {transform_indices = @transform_1, window_bounds = array<i64: 1, 8, 32>}, {transform_indices = @transform_2, window_bounds = array<i64: 1, 1, 8>}, {pipeline_mode = #tpu.pipeline_mode<synchronous>, transform_indices = @transform_3, window_bounds = array<i64: 32, 32>}, {pipeline_mode = #tpu.pipeline_mode<synchronous>, transform_indices = @transform_4, window_bounds = array<i64: 32, 32>}, {pipeline_mode = #tpu.pipeline_mode<synchronous>, transform_indices = @transform_5, window_bounds = array<i64: 32, 32>}, {transform_indices = @transform_6, window_bounds = array<i64: 1, 8, 32>}]} {
    %c0 = arith.constant 0 : index
    %c0_0 = arith.constant 0 : index
    %c0_1 = arith.constant 0 : index
    %0 = vector.load %arg2[%c0, %c0_0, %c0_1] : memref<1x8x32xf32, #tpu.memory_space<vmem>>, vector<1x8x32xf32>
    %1 = vector.shape_cast %0 : vector<1x8x32xf32> to vector<8x32xf32>
    %2 = arith.truncf %1 : vector<8x32xf32> to vector<8x32xbf16>
    %c0_2 = arith.constant 0 : index
    %c0_3 = arith.constant 0 : index
    %c0_4 = arith.constant 0 : index
    %3 = vector.load %arg3[%c0_2, %c0_3, %c0_4] : memref<1x8x32xf32, #tpu.memory_space<vmem>>, vector<1x8x32xf32>
    %4 = vector.shape_cast %3 : vector<1x8x32xf32> to vector<8x32xf32>
    %5 = arith.truncf %4 : vector<8x32xf32> to vector<8x32xbf16>
    %c0_5 = arith.constant 0 : index
    %c0_6 = arith.constant 0 : index
    %6 = vector.load %arg5[%c0_5, %c0_6] : memref<32x32xbf16, #tpu.memory_space<vmem>>, vector<32x32xbf16>
    %cst = arith.constant dense<0.000000e+00> : vector<8x32xf32>
    %7 = tpu.matmul %2, %6, %cst {dimension_numbers = #tpu.dot_dimension_numbers<[1], [0], [0], [1], [0, 0, 1, 1], [], []>} : vector<8x32xbf16>, vector<32x32xbf16>, vector<8x32xf32> -> vector<8x32xf32>
    %8 = arith.truncf %7 : vector<8x32xf32> to vector<8x32xbf16>
    %c0_7 = arith.constant 0 : index
    %c0_8 = arith.constant 0 : index
    %9 = vector.load %arg9[%c0_7, %c0_8] : memref<8x32xbf16, #tpu.memory_space<vmem>>, vector<8x32xbf16>
    tpu.vector_store %arg9[%c0_7, %c0_8], %8 {strides = array<i32>} : memref<8x32xbf16, #tpu.memory_space<vmem>>, vector<8x32xbf16>,
    %c0_9 = arith.constant 0 : index
    %c0_10 = arith.constant 0 : index
    %10 = vector.load %arg6[%c0_9, %c0_10] : memref<32x32xbf16, #tpu.memory_space<vmem>>, vector<32x32xbf16>
    %cst_11 = arith.constant dense<0.000000e+00> : vector<8x32xf32>
    %11 = tpu.matmul %5, %10, %cst_11 {dimension_numbers = #tpu.dot_dimension_numbers<[1], [0], [0], [1], [0, 0, 1, 1], [], []>} : vector<8x32xbf16>, vector<32x32xbf16>, vector<8x32xf32> -> vector<8x32xf32>
    %12 = arith.truncf %11 : vector<8x32xf32> to vector<8x32xbf16>
    %c0_12 = arith.constant 0 : index
    %c0_13 = arith.constant 0 : index
    %13 = vector.load %arg10[%c0_12, %c0_13] : memref<8x32xbf16, #tpu.memory_space<vmem>>, vector<8x32xbf16>
    tpu.vector_store %arg10[%c0_12, %c0_13], %12 {strides = array<i32>} : memref<8x32xbf16, #tpu.memory_space<vmem>>, vector<8x32xbf16>,
    %c0_14 = arith.constant 0 : index
    %c0_15 = arith.constant 0 : index
    %14 = vector.load %arg7[%c0_14, %c0_15] : memref<32x32xbf16, #tpu.memory_space<vmem>>, vector<32x32xbf16>
    %cst_16 = arith.constant dense<0.000000e+00> : vector<8x32xf32>
    %15 = tpu.matmul %5, %14, %cst_16 {dimension_numbers = #tpu.dot_dimension_numbers<[1], [0], [0], [1], [0, 0, 1, 1], [], []>} : vector<8x32xbf16>, vector<32x32xbf16>, vector<8x32xf32> -> vector<8x32xf32>
    %16 = arith.truncf %15 : vector<8x32xf32> to vector<8x32xbf16>
    %c0_17 = arith.constant 0 : index
    %c0_18 = arith.constant 0 : index
    %17 = vector.load %arg11[%c0_17, %c0_18] : memref<8x32xbf16, #tpu.memory_space<vmem>>, vector<8x32xbf16>
    tpu.vector_store %arg11[%c0_17, %c0_18], %16 {strides = array<i32>} : memref<8x32xbf16, #tpu.memory_space<vmem>>, vector<8x32xbf16>,
    %c0_19 = arith.constant 0 : index
    %c0_20 = arith.constant 0 : index
    %c0_21 = arith.constant 0 : index
    %18 = vector.load %arg4[%c0_19, %c0_20, %c0_21] : memref<1x1x8xi32, #tpu.memory_space<vmem>>, vector<1x1x8xi32>
    %19 = vector.shape_cast %18 : vector<1x1x8xi32> to vector<1x8xi32>
    %c0_i32 = arith.constant 0 : i32
    %20 = vector.broadcast %c0_i32 : i32 to vector<1x8xi32>
    %21 = arith.cmpi ne, %19, %20 : vector<1x8xi32>
    %cst_22 = arith.constant 0.000000e+00 : f32
    %cst_23 = arith.constant -1.000000e+09 : f32
    %22 = vector.broadcast %cst_22 : f32 to vector<1x8xf32>
    %23 = vector.broadcast %cst_23 : f32 to vector<1x8xf32>
    %24 = arith.select %21, %22, %23 : vector<1x8xi1>, vector<1x8xf32>
    %c0_24 = arith.constant 0 : index
    %c0_25 = arith.constant 0 : index
    %25 = vector.load %arg9[%c0_24, %c0_25] : memref<8x32xbf16, #tpu.memory_space<vmem>>, vector<8x16xbf16>
    %c0_26 = arith.constant 0 : index
    %c0_27 = arith.constant 0 : index
    %26 = vector.load %arg10[%c0_26, %c0_27] : memref<8x32xbf16, #tpu.memory_space<vmem>>, vector<8x16xbf16>
    %c0_28 = arith.constant 0 : index
    %c0_29 = arith.constant 0 : index
    %27 = vector.load %arg11[%c0_28, %c0_29] : memref<8x32xbf16, #tpu.memory_space<vmem>>, vector<8x16xbf16>
    %cst_30 = arith.constant dense<0.000000e+00> : vector<8x8xf32>
    %28 = tpu.matmul %25, %26, %cst_30 {dimension_numbers = #tpu.dot_dimension_numbers<[1], [1], [0], [0], [0, 0, 1, 0], [], []>} : vector<8x16xbf16>, vector<8x16xbf16>, vector<8x8xf32> -> vector<8x8xf32>
    %29 = vector.broadcast %24 : vector<1x8xf32> to vector<8x8xf32>
    %30 = arith.addf %28, %29 : vector<8x8xf32>
    %cst_31 = arith.constant dense<0xFF800000> : vector<8xf32>
    %31 = vector.multi_reduction <maximumf>, %30, %cst_31 [1] : vector<8x8xf32> to vector<8xf32>
    %32 = vector.shape_cast %31 : vector<8xf32> to vector<8x1xf32>
    %33 = vector.broadcast %32 : vector<8x1xf32> to vector<8x8xf32>
    %34 = arith.subf %30, %33 : vector<8x8xf32>
    %35 = math.exp %34 : vector<8x8xf32>
    %cst_32 = arith.constant dense<0.000000e+00> : vector<8xf32>
    %36 = vector.multi_reduction <add>, %35, %cst_32 [1] : vector<8x8xf32> to vector<8xf32>
    %37 = vector.shape_cast %36 : vector<8xf32> to vector<8x1xf32>
    %38 = tpu.reciprocal %37 {approx = true} : vector<8x1xf32> -> vector<8x1xf32>
    %39 = vector.broadcast %38 : vector<8x1xf32> to vector<8x8xf32>
    %40 = arith.mulf %35, %39 : vector<8x8xf32>
    %41 = arith.truncf %40 : vector<8x8xf32> to vector<8x8xbf16>
    %cst_33 = arith.constant dense<0.000000e+00> : vector<8x16xf32>
    %42 = tpu.matmul %41, %27, %cst_33 {dimension_numbers = #tpu.dot_dimension_numbers<[1], [0], [0], [1], [0, 0, 1, 1], [], []>} : vector<8x8xbf16>, vector<8x16xbf16>, vector<8x16xf32> -> vector<8x16xf32>
    %c0_34 = arith.constant 0 : index
    %c0_35 = arith.constant 0 : index
    %c0_36 = arith.constant 0 : index
    %43 = vector.load %arg8[%c0_34, %c0_35, %c0_36] : memref<1x8x32xf32, #tpu.memory_space<vmem>>, vector<1x8x16xf32>
    %44 = vector.shape_cast %43 : vector<1x8x16xf32> to vector<8x16xf32>
    %45 = vector.shape_cast %42 : vector<8x16xf32> to vector<1x8x16xf32>
    tpu.vector_store %arg8[%c0_34, %c0_35, %c0_36], %45 {strides = array<i32>} : memref<1x8x32xf32, #tpu.memory_space<vmem>>, vector<1x8x16xf32>,
    %c0_37 = arith.constant 0 : index
    %c16 = arith.constant 16 : index
    %46 = vector.load %arg9[%c0_37, %c16] : memref<8x32xbf16, #tpu.memory_space<vmem>>, vector<8x16xbf16>
    %c0_38 = arith.constant 0 : index
    %c16_39 = arith.constant 16 : index
    %47 = vector.load %arg10[%c0_38, %c16_39] : memref<8x32xbf16, #tpu.memory_space<vmem>>, vector<8x16xbf16>
    %c0_40 = arith.constant 0 : index
    %c16_41 = arith.constant 16 : index
    %48 = vector.load %arg11[%c0_40, %c16_41] : memref<8x32xbf16, #tpu.memory_space<vmem>>, vector<8x16xbf16>
    %cst_42 = arith.constant dense<0.000000e+00> : vector<8x8xf32>
    %49 = tpu.matmul %46, %47, %cst_42 {dimension_numbers = #tpu.dot_dimension_numbers<[1], [1], [0], [0], [0, 0, 1, 0], [], []>} : vector<8x16xbf16>, vector<8x16xbf16>, vector<8x8xf32> -> vector<8x8xf32>
    %50 = vector.broadcast %24 : vector<1x8xf32> to vector<8x8xf32>
    %51 = arith.addf %49, %50 : vector<8x8xf32>
    %cst_43 = arith.constant dense<0xFF800000> : vector<8xf32>
    %52 = vector.multi_reduction <maximumf>, %51, %cst_43 [1] : vector<8x8xf32> to vector<8xf32>
    %53 = vector.shape_cast %52 : vector<8xf32> to vector<8x1xf32>
    %54 = vector.broadcast %53 : vector<8x1xf32> to vector<8x8xf32>
    %55 = arith.subf %51, %54 : vector<8x8xf32>
    %56 = math.exp %55 : vector<8x8xf32>
    %cst_44 = arith.constant dense<0.000000e+00> : vector<8xf32>
    %57 = vector.multi_reduction <add>, %56, %cst_44 [1] : vector<8x8xf32> to vector<8xf32>
    %58 = vector.shape_cast %57 : vector<8xf32> to vector<8x1xf32>
    %59 = tpu.reciprocal %58 {approx = true} : vector<8x1xf32> -> vector<8x1xf32>
    %60 = vector.broadcast %59 : vector<8x1xf32> to vector<8x8xf32>
    %61 = arith.mulf %56, %60 : vector<8x8xf32>
    %62 = arith.truncf %61 : vector<8x8xf32> to vector<8x8xbf16>
    %cst_45 = arith.constant dense<0.000000e+00> : vector<8x16xf32>
    %63 = tpu.matmul %62, %48, %cst_45 {dimension_numbers = #tpu.dot_dimension_numbers<[1], [0], [0], [1], [0, 0, 1, 1], [], []>} : vector<8x8xbf16>, vector<8x16xbf16>, vector<8x16xf32> -> vector<8x16xf32>
    %c0_46 = arith.constant 0 : index
    %c0_47 = arith.constant 0 : index
    %c16_48 = arith.constant 16 : index
    %64 = vector.load %arg8[%c0_46, %c0_47, %c16_48] : memref<1x8x32xf32, #tpu.memory_space<vmem>>, vector<1x8x16xf32>
    %65 = vector.shape_cast %64 : vector<1x8x16xf32> to vector<8x16xf32>
    %66 = vector.shape_cast %63 : vector<8x16xf32> to vector<1x8x16xf32>
    tpu.vector_store %arg8[%c0_46, %c0_47, %c16_48], %66 {strides = array<i32>} : memref<1x8x32xf32, #tpu.memory_space<vmem>>, vector<1x8x16xf32>,
    return
  }
  func.func @transform_0(%arg0: i32, %arg1: i32) -> (i32, i32, i32) {
    %c0_i32 = arith.constant 0 : i32
    %c0_i32_0 = arith.constant 0 : i32
    return %arg0, %arg1, %c0_i32 : i32, i32, i32
  }
  func.func @transform_1(%arg0: i32, %arg1: i32) -> (i32, i32, i32) {
    %c0_i32 = arith.constant 0 : i32
    %c0_i32_0 = arith.constant 0 : i32
    %c0_i32_1 = arith.constant 0 : i32
    return %arg0, %c0_i32, %c0_i32_0 : i32, i32, i32
  }
  func.func @transform_2(%arg0: i32, %arg1: i32) -> (i32, i32, i32) {
    %c0_i32 = arith.constant 0 : i32
    %c0_i32_0 = arith.constant 0 : i32
    %c0_i32_1 = arith.constant 0 : i32
    return %arg0, %c0_i32, %c0_i32_0 : i32, i32, i32
  }
  func.func @transform_3(%arg0: i32, %arg1: i32) -> (i32, i32) {
    %c0_i32 = arith.constant 0 : i32
    %c0_i32_0 = arith.constant 0 : i32
    %c0_i32_1 = arith.constant 0 : i32
    return %c0_i32, %c0_i32_0 : i32, i32
  }
  func.func @transform_4(%arg0: i32, %arg1: i32) -> (i32, i32) {
    %c0_i32 = arith.constant 0 : i32
    %c0_i32_0 = arith.constant 0 : i32
    %c0_i32_1 = arith.constant 0 : i32
    return %c0_i32, %c0_i32_0 : i32, i32
  }
  func.func @transform_5(%arg0: i32, %arg1: i32) -> (i32, i32) {
    %c0_i32 = arith.constant 0 : i32
    %c0_i32_0 = arith.constant 0 : i32
    %c0_i32_1 = arith.constant 0 : i32
    return %c0_i32, %c0_i32_0 : i32, i32
  }
  func.func @transform_6(%arg0: i32, %arg1: i32) -> (i32, i32, i32) {
    %c0_i32 = arith.constant 0 : i32
    %c0_i32_0 = arith.constant 0 : i32
    return %arg0, %arg1, %c0_i32 : i32, i32, i32
  }
}

module attributes {stable_mosaic.version = 11 : i64} {
  func.func @_ffn_kernel(%arg0: i32, %arg1: memref<16x32xf32, #tpu.memory_space<vmem>>, %arg2: memref<32x64xbf16, #tpu.memory_space<vmem>>, %arg3: memref<1x64xf32, #tpu.memory_space<vmem>>, %arg4: memref<64x32xbf16, #tpu.memory_space<vmem>>, %arg5: memref<1x32xf32, #tpu.memory_space<vmem>>, %arg6: memref<1x32xf32, #tpu.memory_space<vmem>>, %arg7: memref<1x32xf32, #tpu.memory_space<vmem>>, %arg8: memref<16x32xf32, #tpu.memory_space<vmem>>) attributes {dimension_semantics = [#tpu.dimension_semantics<parallel>], iteration_bounds = array<i64: 1>, scalar_prefetch = 0 : i64, scratch_operands = 0 : i64, tpu.core_type = #tpu.core_type<tc>, window_params = [{transform_indices = @transform_0, window_bounds = array<i64: 16, 32>}, {pipeline_mode = #tpu.pipeline_mode<synchronous>, transform_indices = @transform_1, window_bounds = array<i64: 32, 64>}, {pipeline_mode = #tpu.pipeline_mode<synchronous>, transform_indices = @transform_2, window_bounds = array<i64: 1, 64>}, {pipeline_mode = #tpu.pipeline_mode<synchronous>, transform_indices = @transform_3, window_bounds = array<i64: 64, 32>}, {pipeline_mode = #tpu.pipeline_mode<synchronous>, transform_indices = @transform_4, window_bounds = array<i64: 1, 32>}, {pipeline_mode = #tpu.pipeline_mode<synchronous>, transform_indices = @transform_5, window_bounds = array<i64: 1, 32>}, {pipeline_mode = #tpu.pipeline_mode<synchronous>, transform_indices = @transform_6, window_bounds = array<i64: 1, 32>}, {transform_indices = @transform_7, window_bounds = array<i64: 16, 32>}]} {
    %c0 = arith.constant 0 : index
    %c0_0 = arith.constant 0 : index
    %0 = vector.load %arg1[%c0, %c0_0] : memref<16x32xf32, #tpu.memory_space<vmem>>, vector<16x32xf32>
    %1 = arith.truncf %0 : vector<16x32xf32> to vector<16x32xbf16>
    %c0_1 = arith.constant 0 : index
    %c0_2 = arith.constant 0 : index
    %2 = vector.load %arg2[%c0_1, %c0_2] : memref<32x64xbf16, #tpu.memory_space<vmem>>, vector<32x64xbf16>
    %cst = arith.constant dense<0.000000e+00> : vector<16x64xf32>
    %3 = tpu.matmul %1, %2, %cst {dimension_numbers = #tpu.dot_dimension_numbers<[1], [0], [0], [1], [0, 0, 1, 1], [], []>} : vector<16x32xbf16>, vector<32x64xbf16>, vector<16x64xf32> -> vector<16x64xf32>
    %c0_3 = arith.constant 0 : index
    %c0_4 = arith.constant 0 : index
    %4 = vector.load %arg3[%c0_3, %c0_4] : memref<1x64xf32, #tpu.memory_space<vmem>>, vector<1x64xf32>
    %5 = vector.broadcast %4 : vector<1x64xf32> to vector<16x64xf32>
    %6 = arith.addf %3, %5 : vector<16x64xf32>
    %cst_5 = arith.constant 0.000000e+00 : f32
    %7 = vector.broadcast %cst_5 : f32 to vector<16x64xf32>
    %8 = arith.maximumf %6, %7 : vector<16x64xf32>
    %9 = arith.truncf %8 : vector<16x64xf32> to vector<16x64xbf16>
    %c0_6 = arith.constant 0 : index
    %c0_7 = arith.constant 0 : index
    %10 = vector.load %arg4[%c0_6, %c0_7] : memref<64x32xbf16, #tpu.memory_space<vmem>>, vector<64x32xbf16>
    %cst_8 = arith.constant dense<0.000000e+00> : vector<16x32xf32>
    %11 = tpu.matmul %9, %10, %cst_8 {dimension_numbers = #tpu.dot_dimension_numbers<[1], [0], [0], [1], [0, 0, 1, 1], [], []>} : vector<16x64xbf16>, vector<64x32xbf16>, vector<16x32xf32> -> vector<16x32xf32>
    %c0_9 = arith.constant 0 : index
    %c0_10 = arith.constant 0 : index
    %12 = vector.load %arg5[%c0_9, %c0_10] : memref<1x32xf32, #tpu.memory_space<vmem>>, vector<1x32xf32>
    %13 = vector.broadcast %12 : vector<1x32xf32> to vector<16x32xf32>
    %14 = arith.addf %11, %13 : vector<16x32xf32>
    %15 = arith.addf %14, %0 : vector<16x32xf32>
    %c0_11 = arith.constant 0 : index
    %c0_12 = arith.constant 0 : index
    %16 = vector.load %arg6[%c0_11, %c0_12] : memref<1x32xf32, #tpu.memory_space<vmem>>, vector<1x32xf32>
    %c0_13 = arith.constant 0 : index
    %c0_14 = arith.constant 0 : index
    %17 = vector.load %arg7[%c0_13, %c0_14] : memref<1x32xf32, #tpu.memory_space<vmem>>, vector<1x32xf32>
    %cst_15 = arith.constant dense<0.000000e+00> : vector<16xf32>
    %18 = vector.multi_reduction <add>, %15, %cst_15 [1] : vector<16x32xf32> to vector<16xf32>
    %19 = vector.shape_cast %18 : vector<16xf32> to vector<16x1xf32>
    %cst_16 = arith.constant 3.200000e+01 : f32
    %20 = vector.broadcast %cst_16 : f32 to vector<16x1xf32>
    %21 = arith.divf %19, %20 : vector<16x1xf32>
    %22 = vector.broadcast %21 : vector<16x1xf32> to vector<16x32xf32>
    %23 = arith.subf %15, %22 : vector<16x32xf32>
    %24 = arith.mulf %23, %23 : vector<16x32xf32>
    %cst_17 = arith.constant dense<0.000000e+00> : vector<16xf32>
    %25 = vector.multi_reduction <add>, %24, %cst_17 [1] : vector<16x32xf32> to vector<16xf32>
    %26 = vector.shape_cast %25 : vector<16xf32> to vector<16x1xf32>
    %cst_18 = arith.constant 3.200000e+01 : f32
    %27 = vector.broadcast %cst_18 : f32 to vector<16x1xf32>
    %28 = arith.divf %26, %27 : vector<16x1xf32>
    %29 = vector.broadcast %21 : vector<16x1xf32> to vector<16x32xf32>
    %30 = arith.subf %15, %29 : vector<16x32xf32>
    %cst_19 = arith.constant 9.99999997E-7 : f32
    %31 = vector.broadcast %cst_19 : f32 to vector<16x1xf32>
    %32 = arith.addf %28, %31 : vector<16x1xf32>
    %33 = math.rsqrt %32 : vector<16x1xf32>
    %34 = vector.broadcast %33 : vector<16x1xf32> to vector<16x32xf32>
    %35 = arith.mulf %30, %34 : vector<16x32xf32>
    %36 = vector.broadcast %16 : vector<1x32xf32> to vector<16x32xf32>
    %37 = arith.mulf %35, %36 : vector<16x32xf32>
    %38 = vector.broadcast %17 : vector<1x32xf32> to vector<16x32xf32>
    %39 = arith.addf %37, %38 : vector<16x32xf32>
    %c0_20 = arith.constant 0 : index
    %c0_21 = arith.constant 0 : index
    %40 = vector.load %arg8[%c0_20, %c0_21] : memref<16x32xf32, #tpu.memory_space<vmem>>, vector<16x32xf32>
    tpu.vector_store %arg8[%c0_20, %c0_21], %39 {strides = array<i32>} : memref<16x32xf32, #tpu.memory_space<vmem>>, vector<16x32xf32>,
    return
  }
  func.func @transform_0(%arg0: i32) -> (i32, i32) {
    %c0_i32 = arith.constant 0 : i32
    %c0_i32_0 = arith.constant 0 : i32
    return %arg0, %c0_i32 : i32, i32
  }
  func.func @transform_1(%arg0: i32) -> (i32, i32) {
    %c0_i32 = arith.constant 0 : i32
    %c0_i32_0 = arith.constant 0 : i32
    %c0_i32_1 = arith.constant 0 : i32
    return %c0_i32, %c0_i32_0 : i32, i32
  }
  func.func @transform_2(%arg0: i32) -> (i32, i32) {
    %c0_i32 = arith.constant 0 : i32
    %c0_i32_0 = arith.constant 0 : i32
    %c0_i32_1 = arith.constant 0 : i32
    return %c0_i32, %c0_i32_0 : i32, i32
  }
  func.func @transform_3(%arg0: i32) -> (i32, i32) {
    %c0_i32 = arith.constant 0 : i32
    %c0_i32_0 = arith.constant 0 : i32
    %c0_i32_1 = arith.constant 0 : i32
    return %c0_i32, %c0_i32_0 : i32, i32
  }
  func.func @transform_4(%arg0: i32) -> (i32, i32) {
    %c0_i32 = arith.constant 0 : i32
    %c0_i32_0 = arith.constant 0 : i32
    %c0_i32_1 = arith.constant 0 : i32
    return %c0_i32, %c0_i32_0 : i32, i32
  }
  func.func @transform_5(%arg0: i32) -> (i32, i32) {
    %c0_i32 = arith.constant 0 : i32
    %c0_i32_0 = arith.constant 0 : i32
    %c0_i32_1 = arith.constant 0 : i32
    return %c0_i32, %c0_i32_0 : i32, i32
  }
  func.func @transform_6(%arg0: i32) -> (i32, i32) {
    %c0_i32 = arith.constant 0 : i32
    %c0_i32_0 = arith.constant 0 : i32
    %c0_i32_1 = arith.constant 0 : i32
    return %c0_i32, %c0_i32_0 : i32, i32
  }
  func.func @transform_7(%arg0: i32) -> (i32, i32) {
    %c0_i32 = arith.constant 0 : i32
    %c0_i32_0 = arith.constant 0 : i32
    return %arg0, %c0_i32 : i32, i32
  }
}

module attributes {stable_mosaic.version = 11 : i64} {
  func.func @_ffn_kernel(%arg0: i32, %arg1: memref<16x32xf32, #tpu.memory_space<vmem>>, %arg2: memref<32x64xbf16, #tpu.memory_space<vmem>>, %arg3: memref<1x64xf32, #tpu.memory_space<vmem>>, %arg4: memref<64x32xbf16, #tpu.memory_space<vmem>>, %arg5: memref<1x32xf32, #tpu.memory_space<vmem>>, %arg6: memref<1x32xf32, #tpu.memory_space<vmem>>, %arg7: memref<1x32xf32, #tpu.memory_space<vmem>>, %arg8: memref<16x32xf32, #tpu.memory_space<vmem>>) attributes {dimension_semantics = [#tpu.dimension_semantics<parallel>], iteration_bounds = array<i64: 1>, scalar_prefetch = 0 : i64, scratch_operands = 0 : i64, tpu.core_type = #tpu.core_type<tc>, window_params = [{transform_indices = @transform_0, window_bounds = array<i64: 16, 32>}, {pipeline_mode = #tpu.pipeline_mode<synchronous>, transform_indices = @transform_1, window_bounds = array<i64: 32, 64>}, {pipeline_mode = #tpu.pipeline_mode<synchronous>, transform_indices = @transform_2, window_bounds = array<i64: 1, 64>}, {pipeline_mode = #tpu.pipeline_mode<synchronous>, transform_indices = @transform_3, window_bounds = array<i64: 64, 32>}, {pipeline_mode = #tpu.pipeline_mode<synchronous>, transform_indices = @transform_4, window_bounds = array<i64: 1, 32>}, {pipeline_mode = #tpu.pipeline_mode<synchronous>, transform_indices = @transform_5, window_bounds = array<i64: 1, 32>}, {pipeline_mode = #tpu.pipeline_mode<synchronous>, transform_indices = @transform_6, window_bounds = array<i64: 1, 32>}, {transform_indices = @transform_7, window_bounds = array<i64: 16, 32>}]} {
    %c0 = arith.constant 0 : index
    %c0_0 = arith.constant 0 : index
    %0 = vector.load %arg1[%c0, %c0_0] : memref<16x32xf32, #tpu.memory_space<vmem>>, vector<16x32xf32>
    %1 = arith.truncf %0 : vector<16x32xf32> to vector<16x32xbf16>
    %c0_1 = arith.constant 0 : index
    %c0_2 = arith.constant 0 : index
    %2 = vector.load %arg2[%c0_1, %c0_2] : memref<32x64xbf16, #tpu.memory_space<vmem>>, vector<32x64xbf16>
    %cst = arith.constant dense<0.000000e+00> : vector<16x64xf32>
    %3 = tpu.matmul %1, %2, %cst {dimension_numbers = #tpu.dot_dimension_numbers<[1], [0], [0], [1], [0, 0, 1, 1], [], []>} : vector<16x32xbf16>, vector<32x64xbf16>, vector<16x64xf32> -> vector<16x64xf32>
    %c0_3 = arith.constant 0 : index
    %c0_4 = arith.constant 0 : index
    %4 = vector.load %arg3[%c0_3, %c0_4] : memref<1x64xf32, #tpu.memory_space<vmem>>, vector<1x64xf32>
    %5 = vector.broadcast %4 : vector<1x64xf32> to vector<16x64xf32>
    %6 = arith.addf %3, %5 : vector<16x64xf32>
    %cst_5 = arith.constant 0.000000e+00 : f32
    %7 = vector.broadcast %cst_5 : f32 to vector<16x64xf32>
    %8 = arith.maximumf %6, %7 : vector<16x64xf32>
    %9 = arith.truncf %8 : vector<16x64xf32> to vector<16x64xbf16>
    %c0_6 = arith.constant 0 : index
    %c0_7 = arith.constant 0 : index
    %10 = vector.load %arg4[%c0_6, %c0_7] : memref<64x32xbf16, #tpu.memory_space<vmem>>, vector<64x32xbf16>
    %cst_8 = arith.constant dense<0.000000e+00> : vector<16x32xf32>
    %11 = tpu.matmul %9, %10, %cst_8 {dimension_numbers = #tpu.dot_dimension_numbers<[1], [0], [0], [1], [0, 0, 1, 1], [], []>} : vector<16x64xbf16>, vector<64x32xbf16>, vector<16x32xf32> -> vector<16x32xf32>
    %c0_9 = arith.constant 0 : index
    %c0_10 = arith.constant 0 : index
    %12 = vector.load %arg5[%c0_9, %c0_10] : memref<1x32xf32, #tpu.memory_space<vmem>>, vector<1x32xf32>
    %13 = vector.broadcast %12 : vector<1x32xf32> to vector<16x32xf32>
    %14 = arith.addf %11, %13 : vector<16x32xf32>
    %15 = arith.addf %14, %0 : vector<16x32xf32>
    %c0_11 = arith.constant 0 : index
    %c0_12 = arith.constant 0 : index
    %16 = vector.load %arg6[%c0_11, %c0_12] : memref<1x32xf32, #tpu.memory_space<vmem>>, vector<1x32xf32>
    %c0_13 = arith.constant 0 : index
    %c0_14 = arith.constant 0 : index
    %17 = vector.load %arg7[%c0_13, %c0_14] : memref<1x32xf32, #tpu.memory_space<vmem>>, vector<1x32xf32>
    %cst_15 = arith.constant dense<0.000000e+00> : vector<16xf32>
    %18 = vector.multi_reduction <add>, %15, %cst_15 [1] : vector<16x32xf32> to vector<16xf32>
    %19 = vector.shape_cast %18 : vector<16xf32> to vector<16x1xf32>
    %cst_16 = arith.constant 3.200000e+01 : f32
    %20 = vector.broadcast %cst_16 : f32 to vector<16x1xf32>
    %21 = arith.divf %19, %20 : vector<16x1xf32>
    %22 = vector.broadcast %21 : vector<16x1xf32> to vector<16x32xf32>
    %23 = arith.subf %15, %22 : vector<16x32xf32>
    %24 = arith.mulf %23, %23 : vector<16x32xf32>
    %cst_17 = arith.constant dense<0.000000e+00> : vector<16xf32>
    %25 = vector.multi_reduction <add>, %24, %cst_17 [1] : vector<16x32xf32> to vector<16xf32>
    %26 = vector.shape_cast %25 : vector<16xf32> to vector<16x1xf32>
    %cst_18 = arith.constant 3.200000e+01 : f32
    %27 = vector.broadcast %cst_18 : f32 to vector<16x1xf32>
    %28 = arith.divf %26, %27 : vector<16x1xf32>
    %29 = vector.broadcast %21 : vector<16x1xf32> to vector<16x32xf32>
    %30 = arith.subf %15, %29 : vector<16x32xf32>
    %cst_19 = arith.constant 9.99999997E-7 : f32
    %31 = vector.broadcast %cst_19 : f32 to vector<16x1xf32>
    %32 = arith.addf %28, %31 : vector<16x1xf32>
    %33 = math.rsqrt %32 : vector<16x1xf32>
    %34 = vector.broadcast %33 : vector<16x1xf32> to vector<16x32xf32>
    %35 = arith.mulf %30, %34 : vector<16x32xf32>
    %36 = vector.broadcast %16 : vector<1x32xf32> to vector<16x32xf32>
    %37 = arith.mulf %35, %36 : vector<16x32xf32>
    %38 = vector.broadcast %17 : vector<1x32xf32> to vector<16x32xf32>
    %39 = arith.addf %37, %38 : vector<16x32xf32>
    %c0_20 = arith.constant 0 : index
    %c0_21 = arith.constant 0 : index
    %40 = vector.load %arg8[%c0_20, %c0_21] : memref<16x32xf32, #tpu.memory_space<vmem>>, vector<16x32xf32>
    tpu.vector_store %arg8[%c0_20, %c0_21], %39 {strides = array<i32>} : memref<16x32xf32, #tpu.memory_space<vmem>>, vector<16x32xf32>,
    return
  }
  func.func @transform_0(%arg0: i32) -> (i32, i32) {
    %c0_i32 = arith.constant 0 : i32
    %c0_i32_0 = arith.constant 0 : i32
    return %arg0, %c0_i32 : i32, i32
  }
  func.func @transform_1(%arg0: i32) -> (i32, i32) {
    %c0_i32 = arith.constant 0 : i32
    %c0_i32_0 = arith.constant 0 : i32
    %c0_i32_1 = arith.constant 0 : i32
    return %c0_i32, %c0_i32_0 : i32, i32
  }
  func.func @transform_2(%arg0: i32) -> (i32, i32) {
    %c0_i32 = arith.constant 0 : i32
    %c0_i32_0 = arith.constant 0 : i32
    %c0_i32_1 = arith.constant 0 : i32
    return %c0_i32, %c0_i32_0 : i32, i32
  }
  func.func @transform_3(%arg0: i32) -> (i32, i32) {
    %c0_i32 = arith.constant 0 : i32
    %c0_i32_0 = arith.constant 0 : i32
    %c0_i32_1 = arith.constant 0 : i32
    return %c0_i32, %c0_i32_0 : i32, i32
  }
  func.func @transform_4(%arg0: i32) -> (i32, i32) {
    %c0_i32 = arith.constant 0 : i32
    %c0_i32_0 = arith.constant 0 : i32
    %c0_i32_1 = arith.constant 0 : i32
    return %c0_i32, %c0_i32_0 : i32, i32
  }
  func.func @transform_5(%arg0: i32) -> (i32, i32) {
    %c0_i32 = arith.constant 0 : i32
    %c0_i32_0 = arith.constant 0 : i32
    %c0_i32_1 = arith.constant 0 : i32
    return %c0_i32, %c0_i32_0 : i32, i32
  }
  func.func @transform_6(%arg0: i32) -> (i32, i32) {
    %c0_i32 = arith.constant 0 : i32
    %c0_i32_0 = arith.constant 0 : i32
    %c0_i32_1 = arith.constant 0 : i32
    return %c0_i32, %c0_i32_0 : i32, i32
  }
  func.func @transform_7(%arg0: i32) -> (i32, i32) {
    %c0_i32 = arith.constant 0 : i32
    %c0_i32_0 = arith.constant 0 : i32
    return %arg0, %c0_i32 : i32, i32
  }
}

</mosaic_0001>

<llo_original>
// kernel: decoder_forward.13
$region0: #{decoder_forward.13}
  #allocation0 [shape = 'u32[]', space=smem, size = 0x4, offset = 0x4, fixed_abs, tag = 'smem constant byte address 0x4 - core index']
  #allocation1 [shape = 'u32[144,128]{1,0:T(1,128)}', space=vmem, size = 0x12000, scoped, tag = 'internal scratch']
  %s0 = inlined_call_operand.vmem [shape: f32[16,32], index: 0, kind: input, shape index: {}]
  %s1 = inlined_call_operand.vmem [shape: bf16[32,32], index: 1, kind: input, shape index: {}]
  %s2 = inlined_call_operand.vmem [shape: f32[16,32], index: 2, kind: input, shape index: {}]
  %s3 = inlined_call_operand.vmem [shape: f32[1,32], index: 3, kind: input, shape index: {}]
  %s4 = inlined_call_operand.vmem [shape: f32[1,32], index: 4, kind: input, shape index: {}]
  %s5 = inlined_call_operand.vmem [shape: f32[16,32], index: 5, kind: output, shape index: {}]
  %s6 = sld [smem:[#allocation0]]
  $region30: #{decoder_forward.13} parent=0
    _
  %s8 = ssub.s32 1, %s6
  %s9 = scalar_select 0, %s8, %s6
  // Predicated region
  $region2: #{decoder_forward.13} parent=0 // pred_check
    _
  $region3: #{decoder_forward.13} parent=0 // pred_check_branch
    %11 = sbr.rel (0) target = $region5
  $region4: #{decoder_forward.13} parent=0 // pred_region
    _
  $region5: #{decoder_forward.13} parent=0 // pred_fallthru
    _
  // Predicated region
  $region6: #{decoder_forward.13} parent=0 // pred_check
    _
  $region7: #{decoder_forward.13} parent=0 // pred_check_branch
    %13 = sbr.rel (0) target = $region9
  $region8: #{decoder_forward.13} parent=0 // pred_region
    _
  $region9: #{decoder_forward.13} parent=0 // pred_fallthru
    _
  // Predicated region
  $region10: #{decoder_forward.13} parent=0 // pred_check
    _
  $region11: #{decoder_forward.13} parent=0 // pred_check_branch
    %15 = sbr.rel (0) target = $region13
  $region12: #{decoder_forward.13} parent=0 // pred_region
    _
  $region13: #{decoder_forward.13} parent=0 // pred_fallthru
    _
  // Predicated region
  $region14: #{decoder_forward.13} parent=0 // pred_check
    _
  $region15: #{decoder_forward.13} parent=0 // pred_check_branch
    %17 = sbr.rel (0) target = $region17
  $region16: #{decoder_forward.13} parent=0 // pred_region
    _
  $region17: #{decoder_forward.13} parent=0 // pred_fallthru
    _
  // Predicated region
  $region18: #{decoder_forward.13} parent=0 // pred_check
    _
  $region19: #{decoder_forward.13} parent=0 // pred_check_branch
    %19 = sbr.rel (0) target = $region21
  $region20: #{decoder_forward.13} parent=0 // pred_region
    _
  $region21: #{decoder_forward.13} parent=0 // pred_fallthru
    _
  %v21 = vld [vmem:[%s0] sm:$0xff]
  %v22 = vld [vmem:[%s0 + $0x8] sm:$0xff]
  %v23 = vpack.c.bf16 %v22, %v21
  %v24 = vld [vmem:[%s1] sm:$0xf]
  %v25 = vld [vmem:[%s1 + $0x4] sm:$0xf]
  %v26 = vld [vmem:[%s1 + $0x8] sm:$0xf]
  %v27 = vld [vmem:[%s1 + $0xc] sm:$0xf]
  %v28 = vld [vmem:[%s2] sm:$0xff]
  %v29 = vld [vmem:[%s2 + $0x8] sm:$0xff]
  %v34 = vunpack.c.l.b16 %v24
  %v35 = vunpack.c.l.b16 %v25
  %v36 = vunpack.c.l.b16 %v26
  %v37 = vunpack.c.l.b16 %v27
  %v38 = vpack.c.b16 %v35, %v34
  %v39 = vpack.c.b16 %v37, %v36
  %vm42 = vcmask 261120
  %v44 = vsel %vm42, %v23, 0
  %46 = vmatprep.subr.bf16.mxu0 0
  %47 = vmatpush1.bf16.msra.mxu0 %v38
  %48 = vmatprep.subr.bf16.mxu0 0
  %49 = vmatpush1.bf16.msra.mxu0 %v39
  %50 = vmatprep.subr.bf16.mxu0 0
  %51 = vmatpush1.bf16.msra.mxu0 0
  %52 = vmatprep.subr.bf16.mxu0 0
  %53 = vmatpush1.bf16.msra.mxu0 0
  %54 = vmatprep.subr.bf16.mxu0 0
  %55 = vmatpush1.bf16.msra.mxu0 0
  %56 = vmatprep.subr.bf16.mxu0 0
  %57 = vmatpush1.bf16.msra.mxu0 0
  %58 = vmatprep.subr.bf16.mxu0 0
  %59 = vmatpush1.bf16.msra.mxu0 0
  %60 = vmatprep.subr.bf16.mxu0 0
  %61 = vmatpush1.bf16.msra.mxu0 0
  %62 = vmatprep.subr.bf16.mxu0 0
  %63 = vmatpush1.bf16.msra.mxu0 0
  %64 = vmatprep.subr.bf16.mxu0 0
  %65 = vmatpush1.bf16.msra.mxu0 0
  %66 = vmatprep.subr.bf16.mxu0 0
  %67 = vmatpush1.bf16.msra.mxu0 0
  %68 = vmatprep.subr.bf16.mxu0 0
  %69 = vmatpush1.bf16.msra.mxu0 0
  %70 = vmatprep.subr.bf16.mxu0 0
  %71 = vmatpush1.bf16.msra.mxu0 0
  %72 = vmatprep.subr.bf16.mxu0 0
  %73 = vmatpush1.bf16.msra.mxu0 0
  %74 = vmatprep.subr.bf16.mxu0 0
  %75 = vmatpush1.bf16.msra.mxu0 0
  %76 = vmatprep.subr.bf16.mxu0 0
  %77 = vmatpush1.bf16.msra.mxu0 0
  %78 = vmatprep.mubr.bf16.mxu0 0
  %79 = vmatmul.mubr.bf16.gmra.mrb[0].mxu0 %v44
  %v80 = vpop.f32.mrb[0].mxu0
  %v81 = vadd.f32 %v28, %v80
  %v82 = vpop.f32.mrb[0].mxu0
  %v83 = vpop.f32.mrb[0].mxu0
  %v84 = vadd.f32 %v29, %v83
  %v85 = vpop.f32.mrb[0].mxu0
  %86 = vdwg.mxu0
  %v87 = vld [vmem:[%s3] sm:$0x1]
  %v88 = vld [vmem:[%s4] sm:$0x1]
  %v89 = vsel %vm42, %v81, 0.0
  %90 = vadd.xlane.f32.xlu0 %v89
  %v91 = vpop.xlane.xlu0 %90
  %v92 = vsel %vm42, %v84, 0.0
  %93 = vadd.xlane.f32.xlu0 %v92
  %v94 = vpop.xlane.xlu0 %93
  %v95 = vrcp.pop 32.0
  %v96 = vmul.f32 %v91, %v95
  %v97 = vmul.f32 %v94, %v95
  %v98 = vsub.f32 %v81, %v96
  %v99 = vsub.f32 %v84, %v97
  %v100 = vmul.f32 %v98, %v98
  %v101 = vmul.f32 %v99, %v99
  %v102 = vsel %vm42, %v100, 0.0
  %103 = vadd.xlane.f32.xlu0 %v102
  %v104 = vpop.xlane.xlu0 %103
  %v105 = vsel %vm42, %v101, 0.0
  %106 = vadd.xlane.f32.xlu0 %v105
  %v107 = vpop.xlane.xlu0 %106
  %v108 = vmul.f32 %v104, %v95
  %v109 = vmul.f32 %v107, %v95
  %v110 = vadd.f32 %v108, 1e-06
  %v111 = vadd.f32 %v109, 1e-06
  %v112 = vrsqrt.pop %v110
  %v113 = vrsqrt.pop %v111
  %v114 = vmul.f32 %v98, %v112
  %v115 = vmul.f32 %v99, %v113
  %v117 = vlaneseq
  %v118 = vshrl.u32 %v117, 7
  %v119 = vsub.s32 0, %v118
  %v120 = vrot.slane %v87, %v119
  %v122 = vmul.f32 %v114, %v120
  %v123 = vmul.f32 %v115, %v120
  %v125 = vlaneseq
  %v126 = vshrl.u32 %v125, 7
  %v127 = vsub.s32 0, %v126
  %v128 = vrot.slane %v88, %v127
  %v130 = vadd.f32 %v122, %v128
  %v131 = vadd.f32 %v123, %v128
  %132 = vst.msk [vmem:[%s5] sm:$0xff] %vm42, %v130
  %133 = vst.msk [vmem:[%s5 + $0x8] sm:$0xff] %vm42, %v131
  // Predicated region
  $region22: #{decoder_forward.13} parent=0 // pred_check
    _
  $region23: #{decoder_forward.13} parent=0 // pred_check_branch
    %135 = sbr.rel (0) target = $region25
  $region24: #{decoder_forward.13} parent=0 // pred_region
    _
  $region25: #{decoder_forward.13} parent=0 // pred_fallthru
    _
  // Predicated region
  $region26: #{decoder_forward.13} parent=0 // pred_check
    _
  $region27: #{decoder_forward.13} parent=0 // pred_check_branch
    %137 = sbr.rel (0) target = $region29
  $region28: #{decoder_forward.13} parent=0 // pred_region
    _
  $region29: #{decoder_forward.13} parent=0 // pred_fallthru
    _

// kernel: decoder_forward.11
$region0: #{decoder_forward.11}
  #allocation0 [shape = 'u32[]', space=smem, size = 0x4, offset = 0x4, fixed_abs, tag = 'smem constant byte address 0x4 - core index']
  #allocation1 [shape = 'u32[144,128]{1,0:T(1,128)}', space=vmem, size = 0x12000, scoped, tag = 'internal scratch']
  %s0 = inlined_call_operand.vmem [shape: f32[16,32], index: 0, kind: input, shape index: {}]
  %s1 = inlined_call_operand.vmem [shape: f32[1,32], index: 1, kind: input, shape index: {}]
  %s2 = inlined_call_operand.vmem [shape: f32[1,32], index: 2, kind: input, shape index: {}]
  %s3 = inlined_call_operand.vmem [shape: f32[16,32], index: 3, kind: output, shape index: {}]
  %s4 = sld [smem:[#allocation0]]
  $region22: #{decoder_forward.11} parent=0
    _
  %s6 = ssub.s32 1, %s4
  %s7 = scalar_select 0, %s6, %s4
  // Predicated region
  $region2: #{decoder_forward.11} parent=0 // pred_check
    _
  $region3: #{decoder_forward.11} parent=0 // pred_check_branch
    %9 = sbr.rel (0) target = $region5
  $region4: #{decoder_forward.11} parent=0 // pred_region
    _
  $region5: #{decoder_forward.11} parent=0 // pred_fallthru
    _
  // Predicated region
  $region6: #{decoder_forward.11} parent=0 // pred_check
    _
  $region7: #{decoder_forward.11} parent=0 // pred_check_branch
    %11 = sbr.rel (0) target = $region9
  $region8: #{decoder_forward.11} parent=0 // pred_region
    _
  $region9: #{decoder_forward.11} parent=0 // pred_fallthru
    _
  // Predicated region
  $region10: #{decoder_forward.11} parent=0 // pred_check
    _
  $region11: #{decoder_forward.11} parent=0 // pred_check_branch
    %13 = sbr.rel (0) target = $region13
  $region12: #{decoder_forward.11} parent=0 // pred_region
    _
  $region13: #{decoder_forward.11} parent=0 // pred_fallthru
    _
  %v14 = vld [vmem:[%s0] sm:$0xff]
  %v15 = vld [vmem:[%s0 + $0x8] sm:$0xff]
  %v16 = vld [vmem:[%s1] sm:$0x1]
  %v17 = vld [vmem:[%s2] sm:$0x1]
  %vm18 = vcmask 261120
  %v19 = vsel %vm18, %v14, 0.0
  %20 = vadd.xlane.f32.xlu0 %v19
  %v21 = vpop.xlane.xlu0 %20
  %v22 = vsel %vm18, %v15, 0.0
  %23 = vadd.xlane.f32.xlu0 %v22
  %v24 = vpop.xlane.xlu0 %23
  %v25 = vrcp.pop 32.0
  %v26 = vmul.f32 %v21, %v25
  %v27 = vmul.f32 %v24, %v25
  %v28 = vsub.f32 %v14, %v26
  %v29 = vsub.f32 %v15, %v27
  %v30 = vmul.f32 %v28, %v28
  %v31 = vmul.f32 %v29, %v29
  %v32 = vsel %vm18, %v30, 0.0
  %33 = vadd.xlane.f32.xlu0 %v32
  %v34 = vpop.xlane.xlu0 %33
  %v35 = vsel %vm18, %v31, 0.0
  %36 = vadd.xlane.f32.xlu0 %v35
  %v37 = vpop.xlane.xlu0 %36
  %v38 = vmul.f32 %v34, %v25
  %v39 = vmul.f32 %v37, %v25
  %v40 = vadd.f32 %v38, 1e-06
  %v41 = vadd.f32 %v39, 1e-06
  %v42 = vrsqrt.pop %v40
  %v43 = vrsqrt.pop %v41
  %v44 = vmul.f32 %v28, %v42
  %v45 = vmul.f32 %v29, %v43
  %v47 = vlaneseq
  %v48 = vshrl.u32 %v47, 7
  %v49 = vsub.s32 0, %v48
  %v50 = vrot.slane %v16, %v49
  %v52 = vmul.f32 %v44, %v50
  %v53 = vmul.f32 %v45, %v50
  %v55 = vlaneseq
  %v56 = vshrl.u32 %v55, 7
  %v57 = vsub.s32 0, %v56
  %v58 = vrot.slane %v17, %v57
  %v60 = vadd.f32 %v52, %v58
  %v61 = vadd.f32 %v53, %v58
  %62 = vst.msk [vmem:[%s3] sm:$0xff] %vm18, %v60
  %63 = vst.msk [vmem:[%s3 + $0x8] sm:$0xff] %vm18, %v61
  // Predicated region
  $region14: #{decoder_forward.11} parent=0 // pred_check
    _
  $region15: #{decoder_forward.11} parent=0 // pred_check_branch
    %65 = sbr.rel (0) target = $region17
  $region16: #{decoder_forward.11} parent=0 // pred_region
    _
  $region17: #{decoder_forward.11} parent=0 // pred_fallthru
    _
  // Predicated region
  $region18: #{decoder_forward.11} parent=0 // pred_check
    _
  $region19: #{decoder_forward.11} parent=0 // pred_check_branch
    %67 = sbr.rel (0) target = $region21
  $region20: #{decoder_forward.11} parent=0 // pred_region
    _
  $region21: #{decoder_forward.11} parent=0 // pred_fallthru
    _

// kernel: decoder_forward.12
$region0: #{decoder_forward.12}
  #allocation0 [shape = 'u32[]', space=smem, size = 0x4, offset = 0x4, fixed_abs, tag = 'smem constant byte address 0x4 - core index']
  #allocation1 [shape = 'u32[144,128]{1,0:T(1,128)}', space=vmem, size = 0x12000, scoped, tag = 'internal scratch']
  #allocation2 [shape = 'bf16[8,32]{1,0:T(8,128)(2,1)}', space=vmem, size = 0x800, scoped, tag = 'scratch operand']
  #allocation3 [shape = 'bf16[8,32]{1,0:T(8,128)(2,1)}', space=vmem, size = 0x800, scoped, tag = 'scratch operand']
  #allocation4 [shape = 'bf16[8,32]{1,0:T(8,128)(2,1)}', space=vmem, size = 0x800, scoped, tag = 'scratch operand']
  %s0 = inlined_call_operand.vmem [shape: f32[2,8,32], index: 0, kind: input, shape index: {}, may-alias: {0,1}]
  %s1 = inlined_call_operand.vmem [shape: f32[2,8,32], index: 1, kind: input, shape index: {}, may-alias: {0,1}]
  %s2 = inlined_call_operand.vmem [shape: s32[2,1,8], index: 2, kind: input, shape index: {}]
  %s3 = inlined_call_operand.vmem [shape: bf16[32,32], index: 3, kind: input, shape index: {}]
  %s4 = inlined_call_operand.vmem [shape: bf16[32,32], index: 4, kind: input, shape index: {}]
  %s5 = inlined_call_operand.vmem [shape: bf16[32,32], index: 5, kind: input, shape index: {}]
  %s6 = inlined_call_operand.vmem [shape: f32[2,8,32], index: 6, kind: output, shape index: {}]
  %s7 = sld [smem:[#allocation0]]
  $region57: #{decoder_forward.12} parent=0
    _
  %s9 = ssub.s32 1, %s7
  %s10 = scalar_select 0, %s9, %s7
  loop: start=0, step=1, limit=4
  $region2: #{decoder_forward.12} parent=0 // loop_pre_header
    _
  $region3: #{decoder_forward.12} parent=0 // loop_header
    %s12 = sphi 0, %s16
    %p13 = scmp.ge.s32.totalorder %s12, 4
    %s19 = sphi 0, %s31
    %s20 = sphi 0, %s27
    %s21 = sphi 0, %s19
    %s22 = sphi 0, %s20
    %s23 = sphi 0, %s21
    %s24 = sphi 0, %s22
    %s36 = sphi 0, %s38
    %s39 = sphi 0, %s36
    %s40 = sphi 0, %s39
    %s56 = sphi 0, %s40
    %s62 = sphi 0, %s64
    %s65 = sphi 0, %s62
    %s66 = sphi 0, %s65
    %s82 = sphi 0, %s66
    %s88 = sphi 0, %s90
    %s91 = sphi 0, %s88
    %s92 = sphi 0, %s91
    %s108 = sphi 0, %s92
    %s112 = sphi 0, %s112
    %s114 = sphi 0, %s112
    %s115 = sphi 0, %s114
    %s129 = sphi 0, %s115
    %s133 = sphi 0, %s133
    %s135 = sphi 0, %s133
    %s136 = sphi 0, %s135
    %s150 = sphi 0, %s136
    %s154 = sphi 0, %s154
    %s156 = sphi 0, %s154
    %s157 = sphi 0, %s156
    %s171 = sphi 0, %s157
    %s179 = sphi 0, %s181
    %s182 = sphi 0, %s179
    %s183 = sphi 0, %s182
    %s199 = sphi 0, %s183
  $region4: #{decoder_forward.12} parent=0 // loop_header_branch
    %15 = sbr.rel (%p13) target = $region8
  $region5: #{decoder_forward.12} parent=0 // loop_body
    %s17 = ssub.s32 %s12, 1
    %s18 = ssub.s32 %s12, 2
    %s25 = sadd.s32 1, %s20
    %p26 = scmp.ge.s32.totalorder %s25, 1
    %s27 = scalar_select %p26, 0, %s25
    %s28 = sadd.s32 1, %s19
    %s29 = scalar_select %p26, %s28, %s19
    %p30 = scmp.ge.s32.totalorder %s29, 2
    %s31 = scalar_select %p30, 0, %s29
    %s32 = ssub.s32 %s19, %s31
    %s33 = ssub.s32 %s20, %s27
    %s34 = sor.u32 %s32, %s33
    %p35 = scmp.eq.s32.totalorder %s34, 0
    %s37 = sadd.s32 %s36, 1
    %s38 = scalar_select %p35, %s36, %s37
    %p41 = pneg %p35
    %p42 = scmp.eq.s32.totalorder %s12, 1
    %p43 = por %p41, %p42
    %p44 = scmp.ne.s32.totalorder %s36, %s39
    %p45 = scmp.eq.s32.totalorder %s12, 0
    %p46 = por %p44, %p45
    %p47 = scmp.ne.s32.totalorder %s36, %s39
    %p48 = scmp.eq.s32.totalorder %s17, 1
    %p49 = por %p47, %p48
    %p50 = scmp.ne.s32.totalorder %s39, %s40
    %p51 = scmp.eq.s32.totalorder %s17, 0
    %p52 = por %p50, %p51
    %p53 = scmp.ne.s32.totalorder %s39, %s40
    %p54 = scmp.eq.s32.totalorder %s18, 1
    %p55 = por %p53, %p54
    %p57 = scmp.ne.s32.totalorder %s40, %s56
    %p58 = scmp.eq.s32.totalorder %s18, 0
    %p59 = por %p57, %p58
    %s60 = ssub.s32 %s19, %s31
    %p61 = scmp.eq.s32.totalorder %s60, 0
    %s63 = sadd.s32 %s62, 1
    %s64 = scalar_select %p61, %s62, %s63
    %p67 = pneg %p61
    %p68 = scmp.eq.s32.totalorder %s12, 1
    %p69 = por %p67, %p68
    %p70 = scmp.ne.s32.totalorder %s62, %s65
    %p71 = scmp.eq.s32.totalorder %s12, 0
    %p72 = por %p70, %p71
    %p73 = scmp.ne.s32.totalorder %s62, %s65
    %p74 = scmp.eq.s32.totalorder %s17, 1
    %p75 = por %p73, %p74
    %p76 = scmp.ne.s32.totalorder %s65, %s66
    %p77 = scmp.eq.s32.totalorder %s17, 0
    %p78 = por %p76, %p77
    %p79 = scmp.ne.s32.totalorder %s65, %s66
    %p80 = scmp.eq.s32.totalorder %s18, 1
    %p81 = por %p79, %p80
    %p83 = scmp.ne.s32.totalorder %s66, %s82
    %p84 = scmp.eq.s32.totalorder %s18, 0
    %p85 = por %p83, %p84
    %s86 = ssub.s32 %s19, %s31
    %p87 = scmp.eq.s32.totalorder %s86, 0
    %s89 = sadd.s32 %s88, 1
    %s90 = scalar_select %p87, %s88, %s89
    %p93 = pneg %p87
    %p94 = scmp.eq.s32.totalorder %s12, 1
    %p95 = por %p93, %p94
    %p96 = scmp.ne.s32.totalorder %s88, %s91
    %p97 = scmp.eq.s32.totalorder %s12, 0
    %p98 = por %p96, %p97
    %p99 = scmp.ne.s32.totalorder %s88, %s91
    %p100 = scmp.eq.s32.totalorder %s17, 1
    %p101 = por %p99, %p100
    %p102 = scmp.ne.s32.totalorder %s91, %s92
    %p103 = scmp.eq.s32.totalorder %s17, 0
    %p104 = por %p102, %p103
    %p105 = scmp.ne.s32.totalorder %s91, %s92
    %p106 = scmp.eq.s32.totalorder %s18, 1
    %p107 = por %p105, %p106
    %p109 = scmp.ne.s32.totalorder %s92, %s108
    %p110 = scmp.eq.s32.totalorder %s18, 0
    %p111 = por %p109, %p110
    %s113 = sadd.s32 %s112, 1
    %p116 = scmp.eq.s32.totalorder %s12, 1
    %p117 = scmp.ne.s32.totalorder %s112, %s114
    %p118 = scmp.eq.s32.totalorder %s12, 0
    %p119 = por %p117, %p118
    %p120 = scmp.ne.s32.totalorder %s112, %s114
    %p121 = scmp.eq.s32.totalorder %s17, 1
    %p122 = por %p120, %p121
    %p123 = scmp.ne.s32.totalorder %s114, %s115
    %p124 = scmp.eq.s32.totalorder %s17, 0
    %p125 = por %p123, %p124
    %p126 = scmp.ne.s32.totalorder %s114, %s115
    %p127 = scmp.eq.s32.totalorder %s18, 1
    %p128 = por %p126, %p127
    %p130 = scmp.ne.s32.totalorder %s115, %s129
    %p131 = scmp.eq.s32.totalorder %s18, 0
    %p132 = por %p130, %p131
    %s134 = sadd.s32 %s133, 1
    %p137 = scmp.eq.s32.totalorder %s12, 1
    %p138 = scmp.ne.s32.totalorder %s133, %s135
    %p139 = scmp.eq.s32.totalorder %s12, 0
    %p140 = por %p138, %p139
    %p141 = scmp.ne.s32.totalorder %s133, %s135
    %p142 = scmp.eq.s32.totalorder %s17, 1
    %p143 = por %p141, %p142
    %p144 = scmp.ne.s32.totalorder %s135, %s136
    %p145 = scmp.eq.s32.totalorder %s17, 0
    %p146 = por %p144, %p145
    %p147 = scmp.ne.s32.totalorder %s135, %s136
    %p148 = scmp.eq.s32.totalorder %s18, 1
    %p149 = por %p147, %p148
    %p151 = scmp.ne.s32.totalorder %s136, %s150
    %p152 = scmp.eq.s32.totalorder %s18, 0
    %p153 = por %p151, %p152
    %s155 = sadd.s32 %s154, 1
    %p158 = scmp.eq.s32.totalorder %s12, 1
    %p159 = scmp.ne.s32.totalorder %s154, %s156
    %p160 = scmp.eq.s32.totalorder %s12, 0
    %p161 = por %p159, %p160
    %p162 = scmp.ne.s32.totalorder %s154, %s156
    %p163 = scmp.eq.s32.totalorder %s17, 1
    %p164 = por %p162, %p163
    %p165 = scmp.ne.s32.totalorder %s156, %s157
    %p166 = scmp.eq.s32.totalorder %s17, 0
    %p167 = por %p165, %p166
    %p168 = scmp.ne.s32.totalorder %s156, %s157
    %p169 = scmp.eq.s32.totalorder %s18, 1
    %p170 = por %p168, %p169
    %p172 = scmp.ne.s32.totalorder %s157, %s171
    %p173 = scmp.eq.s32.totalorder %s18, 0
    %p174 = por %p172, %p173
    %s175 = ssub.s32 %s19, %s31
    %s176 = ssub.s32 %s20, %s27
    %s177 = sor.u32 %s175, %s176
    %p178 = scmp.eq.s32.totalorder %s177, 0
    %s180 = sadd.s32 %s179, 1
    %s181 = scalar_select %p178, %s179, %s180
    %p184 = pneg %p178
    %p185 = scmp.eq.s32.totalorder %s12, 1
    %p186 = por %p184, %p185
    %p187 = scmp.ne.s32.totalorder %s179, %s182
    %p188 = scmp.eq.s32.totalorder %s12, 0
    %p189 = por %p187, %p188
    %p190 = scmp.ne.s32.totalorder %s179, %s182
    %p191 = scmp.eq.s32.totalorder %s17, 1
    %p192 = por %p190, %p191
    %p193 = scmp.ne.s32.totalorder %s182, %s183
    %p194 = scmp.eq.s32.totalorder %s17, 0
    %p195 = por %p193, %p194
    %p196 = scmp.ne.s32.totalorder %s182, %s183
    %p197 = scmp.eq.s32.totalorder %s18, 1
    %p198 = por %p196, %p197
    %p200 = scmp.ne.s32.totalorder %s183, %s199
    %p201 = scmp.eq.s32.totalorder %s18, 0
    %p202 = por %p200, %p201
    %p203 = scmp.le.s32.totalorder 1, %s12
    %p204 = scmp.lt.s32.totalorder %s12, 3
    %p205 = pnand %p203, %p204
    %p206 = pneg %p205
    // Predicated region
    $region9: #{decoder_forward.12} parent=5 // pred_check
      _
    $region10: #{decoder_forward.12} parent=5 // pred_check_branch
      %208 = sbr.rel (%p205) target = $region12
    $region11: #{decoder_forward.12} parent=5 // pred_region
      %s209 = ssub.s32 %s12, 1
      // Predicated region
      $region13: #{decoder_forward.12} parent=11 // pred_check
        %p210 = pneg %p125
      $region14: #{decoder_forward.12} parent=11 // pred_check_branch
        %212 = sbr.rel (%p210) target = $region16
      $region15: #{decoder_forward.12} parent=11 // pred_region
        _
      $region16: #{decoder_forward.12} parent=11 // pred_fallthru
        _
      // Predicated region
      $region17: #{decoder_forward.12} parent=11 // pred_check
        %p213 = pneg %p146
      $region18: #{decoder_forward.12} parent=11 // pred_check_branch
        %215 = sbr.rel (%p213) target = $region20
      $region19: #{decoder_forward.12} parent=11 // pred_region
        _
      $region20: #{decoder_forward.12} parent=11 // pred_fallthru
        _
      // Predicated region
      $region21: #{decoder_forward.12} parent=11 // pred_check
        %p216 = pneg %p167
      $region22: #{decoder_forward.12} parent=11 // pred_check_branch
        %218 = sbr.rel (%p216) target = $region24
      $region23: #{decoder_forward.12} parent=11 // pred_region
        _
      $region24: #{decoder_forward.12} parent=11 // pred_fallthru
        _
    $region12: #{decoder_forward.12} parent=5 // pred_fallthru
      _
    %p219 = scmp.lt.s32.totalorder %s12, 2
    // Predicated region
    $region25: #{decoder_forward.12} parent=5 // pred_check
      %p220 = pneg %p219
    $region26: #{decoder_forward.12} parent=5 // pred_check_branch
      %222 = sbr.rel (%p220) target = $region28
    $region27: #{decoder_forward.12} parent=5 // pred_region
      // Predicated region
      $region29: #{decoder_forward.12} parent=27 // pred_check
        %p223 = pneg %p46
      $region30: #{decoder_forward.12} parent=27 // pred_check_branch
        %225 = sbr.rel (%p223) target = $region32
      $region31: #{decoder_forward.12} parent=27 // pred_region
        %p226 = scmp.lt.s32.totalorder %s19, 1
        %s227 = scalar_select %p226, %s19, 1
        %p228 = scmp.lt.s32.totalorder %s20, 0
        %s229 = scalar_select %p228, %s20, 0
        %s230 = sadd.s32 %s229, %s227
        %s231 = smul.addr %s230, 8
        %s232 = scalar_lea.vmem %s0, %s231
      $region32: #{decoder_forward.12} parent=27 // pred_fallthru
        _
      // Predicated region
      $region33: #{decoder_forward.12} parent=27 // pred_check
        %p233 = pneg %p72
      $region34: #{decoder_forward.12} parent=27 // pred_check_branch
        %235 = sbr.rel (%p233) target = $region36
      $region35: #{decoder_forward.12} parent=27 // pred_region
        %p236 = scmp.lt.s32.totalorder %s19, 1
        %s237 = scalar_select %p236, %s19, 1
        %s238 = smul.addr %s237, 8
        %s239 = scalar_lea.vmem %s1, %s238
      $region36: #{decoder_forward.12} parent=27 // pred_fallthru
        _
      // Predicated region
      $region37: #{decoder_forward.12} parent=27 // pred_check
        %p240 = pneg %p98
      $region38: #{decoder_forward.12} parent=27 // pred_check_branch
        %242 = sbr.rel (%p240) target = $region40
      $region39: #{decoder_forward.12} parent=27 // pred_region
        %p243 = scmp.lt.s32.totalorder %s19, 1
        %s244 = scalar_select %p243, %s19, 1
        %s245 = scalar_lea.vmem %s2, %s244
      $region40: #{decoder_forward.12} parent=27 // pred_fallthru
        _
    $region28: #{decoder_forward.12} parent=5 // pred_fallthru
      _
    %p246 = scmp.le.s32.totalorder 1, %s12
    %p247 = scmp.lt.s32.totalorder %s12, 3
    %p248 = pnand %p246, %p247
    %p249 = pneg %p248
    // Predicated region
    $region41: #{decoder_forward.12} parent=5 // pred_check
      _
    $region42: #{decoder_forward.12} parent=5 // pred_check_branch
      %251 = sbr.rel (%p248) target = $region44
    $region43: #{decoder_forward.12} parent=5 // pred_region
      %s252 = ssub.s32 %s12, 1
      %p253 = scmp.lt.s32.totalorder %s21, 1
      %s254 = scalar_select %p253, %s21, 1
      %p255 = scmp.lt.s32.totalorder %s22, 0
      %s256 = scalar_select %p255, %s22, 0
      %s257 = sadd.s32 %s256, %s254
      %s258 = smul.addr %s257, 8
      %s259 = scalar_lea.vmem %s0, %s258
      %p260 = pneg %p52
      %p261 = pneg %p49
      %p262 = scmp.lt.s32.totalorder %s21, 1
      %s263 = scalar_select %p262, %s21, 1
      %s264 = smul.addr %s263, 8
      %s265 = scalar_lea.vmem %s1, %s264
      %p266 = pneg %p78
      %p267 = pneg %p75
      %p268 = scmp.lt.s32.totalorder %s21, 1
      %s269 = scalar_select %p268, %s21, 1
      %s270 = scalar_lea.vmem %s2, %s269
      %p271 = pneg %p104
      %p272 = pneg %p101
      %p273 = pneg %p125
      %p274 = pneg %p122
      %p275 = pneg %p146
      %p276 = pneg %p143
      %p277 = pneg %p167
      %p278 = pneg %p164
      %p279 = pneg %p195
      %p280 = pneg %p192
      %p281 = scmp.lt.s32.totalorder %s21, 1
      %s282 = scalar_select %p281, %s21, 1
      %p283 = scmp.lt.s32.totalorder %s22, 0
      %s284 = scalar_select %p283, %s22, 0
      %s285 = sadd.s32 %s284, %s282
      %s286 = smul.addr %s285, 8
      %s287 = scalar_lea.vmem %s6, %s286
      %p288 = scmp.lt.s32.totalorder %s21, 1
      %s289 = scalar_select %p288, %s21, 1
      %p290 = scmp.lt.s32.totalorder %s22, 0
      %s291 = scalar_select %p290, %s22, 0
      %s292 = sadd.s32 %s291, %s289
      %s293 = smul.addr %s292, 8
      %s294 = scalar_lea.vmem %s0, %s293
      %p295 = scmp.lt.s32.totalorder %s21, 1
      %s296 = scalar_select %p295, %s21, 1
      %s297 = smul.addr %s296, 8
      %s298 = scalar_lea.vmem %s1, %s297
      %p299 = scmp.lt.s32.totalorder %s21, 1
      %s300 = scalar_select %p299, %s21, 1
      %s301 = scalar_lea.vmem %s2, %s300
      %p302 = scmp.lt.s32.totalorder %s21, 1
      %s303 = scalar_select %p302, %s21, 1
      %p304 = scmp.lt.s32.totalorder %s22, 0
      %s305 = scalar_select %p304, %s22, 0
      %s306 = sadd.s32 %s305, %s303
      %s307 = smul.addr %s306, 8
      %s308 = scalar_lea.vmem %s6, %s307
      %v310 = vld [vmem:[%s294] sm:$0xff]
      %v311 = vpack.c.bf16 %v310, %v310
      %v312 = vld [vmem:[%s298] sm:$0xff]
      %v313 = vpack.c.bf16 %v312, %v312
      %v314 = vld [vmem:[%s3] sm:$0xf]
      %v315 = vld [vmem:[%s3 + $0x4] sm:$0xf]
      %v316 = vld [vmem:[%s3 + $0x8] sm:$0xf]
      %v317 = vld [vmem:[%s3 + $0xc] sm:$0xf]
      %v322 = vunpack.c.l.b16 %v314
      %v323 = vunpack.c.l.b16 %v315
      %v324 = vunpack.c.l.b16 %v316
      %v325 = vunpack.c.l.b16 %v317
      %v326 = vpack.c.b16 %v323, %v322
      %v327 = vpack.c.b16 %v325, %v324
      %vm330 = vcmask 261120
      %v332 = vsel %vm330, %v311, 0
      %334 = vmatprep.subr.bf16.mxu0 0
      %335 = vmatpush1.bf16.msra.mxu0 %v326
      %336 = vmatprep.subr.bf16.mxu0 0
      %337 = vmatpush1.bf16.msra.mxu0 %v327
      %338 = vmatprep.subr.bf16.mxu0 0
      %339 = vmatpush1.bf16.msra.mxu0 0
      %340 = vmatprep.subr.bf16.mxu0 0
      %341 = vmatpush1.bf16.msra.mxu0 0
      %342 = vmatprep.subr.bf16.mxu0 0
      %343 = vmatpush1.bf16.msra.mxu0 0
      %344 = vmatprep.subr.bf16.mxu0 0
      %345 = vmatpush1.bf16.msra.mxu0 0
      %346 = vmatprep.subr.bf16.mxu0 0
      %347 = vmatpush1.bf16.msra.mxu0 0
      %348 = vmatprep.subr.bf16.mxu0 0
      %349 = vmatpush1.bf16.msra.mxu0 0
      %350 = vmatprep.subr.bf16.mxu0 0
      %351 = vmatpush1.bf16.msra.mxu0 0
      %352 = vmatprep.subr.bf16.mxu0 0
      %353 = vmatpush1.bf16.msra.mxu0 0
      %354 = vmatprep.subr.bf16.mxu0 0
      %355 = vmatpush1.bf16.msra.mxu0 0
      %356 = vmatprep.subr.bf16.mxu0 0
      %357 = vmatpush1.bf16.msra.mxu0 0
      %358 = vmatprep.subr.bf16.mxu0 0
      %359 = vmatpush1.bf16.msra.mxu0 0
      %360 = vmatprep.subr.bf16.mxu0 0
      %361 = vmatpush1.bf16.msra.mxu0 0
      %362 = vmatprep.subr.bf16.mxu0 0
      %363 = vmatpush1.bf16.msra.mxu0 0
      %364 = vmatprep.subr.bf16.mxu0 0
      %365 = vmatpush1.bf16.msra.mxu0 0
      %366 = vmatprep.mubr.bf16.mxu0 0
      %367 = vmatmul.mubr.bf16.gmra.mrb[0].mxu0 %v332
      %v368 = vpop.f32.mrb[0].mxu0
      %v369 = vadd.f32 0.0, %v368
      %v370 = vpop.f32.mrb[0].mxu0
      %v371 = vpop.f32.mrb[0].mxu0
      %v372 = vpop.f32.mrb[0].mxu0
      %373 = vdwg.mxu0
      %v374 = vpack.c.bf16 %v369, %v369
      %vm375 = vcmask 257024
      %376 = vst.msk [vmem:[#allocation2] sm:$0xf] %vm375, %v374
      %v377 = vld [vmem:[%s4] sm:$0xf]
      %v378 = vld [vmem:[%s4 + $0x4] sm:$0xf]
      %v379 = vld [vmem:[%s4 + $0x8] sm:$0xf]
      %v380 = vld [vmem:[%s4 + $0xc] sm:$0xf]
      %v385 = vunpack.c.l.b16 %v377
      %v386 = vunpack.c.l.b16 %v378
      %v387 = vunpack.c.l.b16 %v379
      %v388 = vunpack.c.l.b16 %v380
      %v389 = vpack.c.b16 %v386, %v385
      %v390 = vpack.c.b16 %v388, %v387
      %v394 = vsel %vm330, %v313, 0
      %396 = vmatprep.subr.bf16.mxu0 0
      %397 = vmatpush1.bf16.msra.mxu0 %v389
      %398 = vmatprep.subr.bf16.mxu0 0
      %399 = vmatpush1.bf16.msra.mxu0 %v390
      %400 = vmatprep.subr.bf16.mxu0 0
      %401 = vmatpush1.bf16.msra.mxu0 0
      %402 = vmatprep.subr.bf16.mxu0 0
      %403 = vmatpush1.bf16.msra.mxu0 0
      %404 = vmatprep.subr.bf16.mxu0 0
      %405 = vmatpush1.bf16.msra.mxu0 0
      %406 = vmatprep.subr.bf16.mxu0 0
      %407 = vmatpush1.bf16.msra.mxu0 0
      %408 = vmatprep.subr.bf16.mxu0 0
      %409 = vmatpush1.bf16.msra.mxu0 0
      %410 = vmatprep.subr.bf16.mxu0 0
      %411 = vmatpush1.bf16.msra.mxu0 0
      %412 = vmatprep.subr.bf16.mxu0 0
      %413 = vmatpush1.bf16.msra.mxu0 0
      %414 = vmatprep.subr.bf16.mxu0 0
      %415 = vmatpush1.bf16.msra.mxu0 0
      %416 = vmatprep.subr.bf16.mxu0 0
      %417 = vmatpush1.bf16.msra.mxu0 0
      %418 = vmatprep.subr.bf16.mxu0 0
      %419 = vmatpush1.bf16.msra.mxu0 0
      %420 = vmatprep.subr.bf16.mxu0 0
      %421 = vmatpush1.bf16.msra.mxu0 0
      %422 = vmatprep.subr.bf16.mxu0 0
      %423 = vmatpush1.bf16.msra.mxu0 0
      %424 = vmatprep.subr.bf16.mxu0 0
      %425 = vmatpush1.bf16.msra.mxu0 0
      %426 = vmatprep.subr.bf16.mxu0 0
      %427 = vmatpush1.bf16.msra.mxu0 0
      %428 = vmatprep.mubr.bf16.mxu0 0
      %429 = vmatmul.mubr.bf16.gmra.mrb[0].mxu0 %v394
      %v430 = vpop.f32.mrb[0].mxu0
      %v431 = vadd.f32 0.0, %v430
      %v432 = vpop.f32.mrb[0].mxu0
      %v433 = vpop.f32.mrb[0].mxu0
      %v434 = vpop.f32.mrb[0].mxu0
      %435 = vdwg.mxu0
      %v436 = vpack.c.bf16 %v431, %v431
      %437 = vst.msk [vmem:[#allocation3] sm:$0xf] %vm375, %v436
      %v438 = vld [vmem:[%s5] sm:$0xf]
      %v439 = vld [vmem:[%s5 + $0x4] sm:$0xf]
      %v440 = vld [vmem:[%s5 + $0x8] sm:$0xf]
      %v441 = vld [vmem:[%s5 + $0xc] sm:$0xf]
      %v446 = vunpack.c.l.b16 %v438
      %v447 = vunpack.c.l.b16 %v439
      %v448 = vunpack.c.l.b16 %v440
      %v449 = vunpack.c.l.b16 %v441
      %v450 = vpack.c.b16 %v447, %v446
      %v451 = vpack.c.b16 %v449, %v448
      %454 = vmatprep.subr.bf16.mxu0 0
      %455 = vmatpush1.bf16.msra.mxu0 %v450
      %456 = vmatprep.subr.bf16.mxu0 0
      %457 = vmatpush1.bf16.msra.mxu0 %v451
      %458 = vmatprep.subr.bf16.mxu0 0
      %459 = vmatpush1.bf16.msra.mxu0 0
      %460 = vmatprep.subr.bf16.mxu0 0
      %461 = vmatpush1.bf16.msra.mxu0 0
      %462 = vmatprep.subr.bf16.mxu0 0
      %463 = vmatpush1.bf16.msra.mxu0 0
      %464 = vmatprep.subr.bf16.mxu0 0
      %465 = vmatpush1.bf16.msra.mxu0 0
      %466 = vmatprep.subr.bf16.mxu0 0
      %467 = vmatpush1.bf16.msra.mxu0 0
      %468 = vmatprep.subr.bf16.mxu0 0
      %469 = vmatpush1.bf16.msra.mxu0 0
      %470 = vmatprep.subr.bf16.mxu0 0
      %471 = vmatpush1.bf16.msra.mxu0 0
      %472 = vmatprep.subr.bf16.mxu0 0
      %473 = vmatpush1.bf16.msra.mxu0 0
      %474 = vmatprep.subr.bf16.mxu0 0
      %475 = vmatpush1.bf16.msra.mxu0 0
      %476 = vmatprep.subr.bf16.mxu0 0
      %477 = vmatpush1.bf16.msra.mxu0 0
      %478 = vmatprep.subr.bf16.mxu0 0
      %479 = vmatpush1.bf16.msra.mxu0 0
      %480 = vmatprep.subr.bf16.mxu0 0
      %481 = vmatpush1.bf16.msra.mxu0 0
      %482 = vmatprep.subr.bf16.mxu0 0
      %483 = vmatpush1.bf16.msra.mxu0 0
      %484 = vmatprep.subr.bf16.mxu0 0
      %485 = vmatpush1.bf16.msra.mxu0 0
      %486 = vmatprep.mubr.bf16.mxu0 0
      %487 = vmatmul.mubr.bf16.gmra.mrb[0].mxu0 %v394
      %v488 = vpop.f32.mrb[0].mxu0
      %v489 = vadd.f32 0.0, %v488
      %v490 = vpop.f32.mrb[0].mxu0
      %v491 = vpop.f32.mrb[0].mxu0
      %v492 = vpop.f32.mrb[0].mxu0
      %493 = vdwg.mxu0
      %v494 = vpack.c.bf16 %v489, %v489
      %495 = vst.msk [vmem:[#allocation4] sm:$0xf] %vm375, %v494
      %v496 = vld [vmem:[%s301] sm:$0x1]
      %vm497 = vcmp.ne.s32.totalorder %v496, 0
      %v498 = vsel %vm497, 0.0, -1e+09
      %s499 = smul.u32 %s22, 8
      %v500 = vlaneseq
      %v501 = vshrl.u32 %v500, 7
      %v502 = vstv %s499
      %v503 = vadd.s32 %v502, %v501
      %v504 = vlaneseq
      %v505 = vand.u32 %v504, 127
      %vm506 = vcmp.le.s32.totalorder %v505, %v503
      %v507 = vsel %vm506, 0.0, -1e+09
      %v509 = vlaneseq
      %v510 = vshrl.u32 %v509, 7
      %v511 = vsub.s32 0, %v510
      %v512 = vrot.slane %v498, %v511
      %v514 = vadd.f32 %v512, %v507
      %v515 = vld [vmem:[#allocation2] sm:$0xf]
      %v516 = vld [vmem:[#allocation3] sm:$0xf]
      %v517 = vld [vmem:[#allocation4] sm:$0xf]
      %vm518 = vcmask 130048
      %v520 = vsel %vm518, %v515, 0
      %v523 = vsel %vm518, %v516, 0
      %525 = vmatprep.subr.bf16.mxu0 0
      %526 = vmatpush1.bf16.xpose.msra.mxu0 %v523
      %527 = vmatprep.subr.bf16.mxu0 0
      %528 = vmatpush1.bf16.xpose.msra.mxu0 0
      %529 = vmatprep.subr.bf16.mxu0 0
      %530 = vmatpush1.bf16.xpose.msra.mxu0 0
      %531 = vmatprep.subr.bf16.mxu0 0
      %532 = vmatpush1.bf16.xpose.msra.mxu0 0
      %533 = vmatprep.subr.bf16.mxu0 0
      %534 = vmatpush1.bf16.xpose.msra.mxu0 0
      %535 = vmatprep.subr.bf16.mxu0 0
      %536 = vmatpush1.bf16.xpose.msra.mxu0 0
      %537 = vmatprep.subr.bf16.mxu0 0
      %538 = vmatpush1.bf16.xpose.msra.mxu0 0
      %539 = vmatprep.subr.bf16.mxu0 0
      %540 = vmatpush1.bf16.xpose.msra.mxu0 0
      %541 = vmatprep.subr.bf16.mxu0 0
      %542 = vmatpush1.bf16.xpose.msra.mxu0 0
      %543 = vmatprep.subr.bf16.mxu0 0
      %544 = vmatpush1.bf16.xpose.msra.mxu0 0
      %545 = vmatprep.subr.bf16.mxu0 0
      %546 = vmatpush1.bf16.xpose.msra.mxu0 0
      %547 = vmatprep.subr.bf16.mxu0 0
      %548 = vmatpush1.bf16.xpose.msra.mxu0 0
      %549 = vmatprep.subr.bf16.mxu0 0
      %550 = vmatpush1.bf16.xpose.msra.mxu0 0
      %551 = vmatprep.subr.bf16.mxu0 0
      %552 = vmatpush1.bf16.xpose.msra.mxu0 0
      %553 = vmatprep.subr.bf16.mxu0 0
      %554 = vmatpush1.bf16.xpose.msra.mxu0 0
      %555 = vmatprep.subr.bf16.mxu0 0
      %556 = vmatpush1.bf16.xpose.msra.mxu0 0
      %557 = vmatprep.mubr.bf16.mxu0 0
      %558 = vmatmul.mubr.bf16.gmra.mrb[0].mxu0 %v520
      %v559 = vpop.f32.mrb[0].mxu0
      %v560 = vadd.f32 %v514, %v559
      %v561 = vpop.f32.mrb[0].mxu0
      %v562 = vpop.f32.mrb[0].mxu0
      %v563 = vpop.f32.mrb[0].mxu0
      %564 = vdwg.mxu0
      %vm565 = vcmask 64512
      %v566 = vsel %vm565, %v560, -inf
      %567 = vmax.xlane.f32.xlu0 %v566
      %v568 = vpop.xlane.xlu0 %567
      %v569 = vsub.f32 %v560, %v568
      %v570 = vmul.f32 %v569, 1.442695
      %v571 = vpow.pop %v570
      %v572 = vsel %vm565, %v571, 0.0
      %573 = vadd.xlane.f32.xlu0 %v572
      %v574 = vpop.xlane.xlu0 %573
      %v575 = vrcp.pop %v574
      %v576 = vmul.f32 %v571, %v575
      %v577 = vpack.c.bf16 %v576, %v576
      %v579 = vsel %vm565, %v577, 0
      %vm581 = vcmask 1043456
      %v583 = vsel %vm581, %v517, 0
      %585 = vmatprep.subr.bf16.mxu0 0
      %586 = vmatpush1.bf16.msra.mxu0 %v583
      %587 = vmatprep.subr.bf16.mxu0 0
      %588 = vmatpush1.bf16.msra.mxu0 0
      %589 = vmatprep.subr.bf16.mxu0 0
      %590 = vmatpush1.bf16.msra.mxu0 0
      %591 = vmatprep.subr.bf16.mxu0 0
      %592 = vmatpush1.bf16.msra.mxu0 0
      %593 = vmatprep.subr.bf16.mxu0 0
      %594 = vmatpush1.bf16.msra.mxu0 0
      %595 = vmatprep.subr.bf16.mxu0 0
      %596 = vmatpush1.bf16.msra.mxu0 0
      %597 = vmatprep.subr.bf16.mxu0 0
      %598 = vmatpush1.bf16.msra.mxu0 0
      %599 = vmatprep.subr.bf16.mxu0 0
      %600 = vmatpush1.bf16.msra.mxu0 0
      %601 = vmatprep.subr.bf16.mxu0 0
      %602 = vmatpush1.bf16.msra.mxu0 0
      %603 = vmatprep.subr.bf16.mxu0 0
      %604 = vmatpush1.bf16.msra.mxu0 0
      %605 = vmatprep.subr.bf16.mxu0 0
      %606 = vmatpush1.bf16.msra.mxu0 0
      %607 = vmatprep.subr.bf16.mxu0 0
      %608 = vmatpush1.bf16.msra.mxu0 0
      %609 = vmatprep.subr.bf16.mxu0 0
      %610 = vmatpush1.bf16.msra.mxu0 0
      %611 = vmatprep.subr.bf16.mxu0 0
      %612 = vmatpush1.bf16.msra.mxu0 0
      %613 = vmatprep.subr.bf16.mxu0 0
      %614 = vmatpush1.bf16.msra.mxu0 0
      %615 = vmatprep.subr.bf16.mxu0 0
      %616 = vmatpush1.bf16.msra.mxu0 0
      %617 = vmatprep.mubr.bf16.mxu0 0
      %618 = vmatmul.mubr.bf16.gmra.mrb[0].mxu0 %v579
      %v619 = vpop.f32.mrb[0].mxu0
      %v620 = vadd.f32 0.0, %v619
      %v621 = vpop.f32.mrb[0].mxu0
      %v622 = vpop.f32.mrb[0].mxu0
      %v623 = vpop.f32.mrb[0].mxu0
      %624 = vdwg.mxu0
      %625 = vst.msk [vmem:[%s308] sm:$0xff] %vm518, %v620
      %v626 = vld [vmem:[#allocation2] sm:$0xf]
      %v627 = vld [vmem:[#allocation3] sm:$0xf]
      %v628 = vld [vmem:[#allocation4] sm:$0xf]
      %v630 = vunpack.c.l.b16 %v626
      %v631 = vpack.c.b16 %v630, %v630
      %632 = vrot.lane.b32.xlu0 %v631, 112
      %v633 = vpop.permute.xlu0 %632
      %v635 = vunpack.c.l.b16 %v627
      %v636 = vpack.c.b16 %v635, %v635
      %637 = vrot.lane.b32.xlu0 %v636, 112
      %v638 = vpop.permute.xlu0 %637
      %v640 = vsel %vm518, %v633, 0
      %v643 = vsel %vm518, %v638, 0
      %645 = vmatprep.subr.bf16.mxu0 0
      %646 = vmatpush1.bf16.xpose.msra.mxu0 %v643
      %647 = vmatprep.subr.bf16.mxu0 0
      %648 = vmatpush1.bf16.xpose.msra.mxu0 0
      %649 = vmatprep.subr.bf16.mxu0 0
      %650 = vmatpush1.bf16.xpose.msra.mxu0 0
      %651 = vmatprep.subr.bf16.mxu0 0
      %652 = vmatpush1.bf16.xpose.msra.mxu0 0
      %653 = vmatprep.subr.bf16.mxu0 0
      %654 = vmatpush1.bf16.xpose.msra.mxu0 0
      %655 = vmatprep.subr.bf16.mxu0 0
      %656 = vmatpush1.bf16.xpose.msra.mxu0 0
      %657 = vmatprep.subr.bf16.mxu0 0
      %658 = vmatpush1.bf16.xpose.msra.mxu0 0
      %659 = vmatprep.subr.bf16.mxu0 0
      %660 = vmatpush1.bf16.xpose.msra.mxu0 0
      %661 = vmatprep.subr.bf16.mxu0 0
      %662 = vmatpush1.bf16.xpose.msra.mxu0 0
      %663 = vmatprep.subr.bf16.mxu0 0
      %664 = vmatpush1.bf16.xpose.msra.mxu0 0
      %665 = vmatprep.subr.bf16.mxu0 0
      %666 = vmatpush1.bf16.xpose.msra.mxu0 0
      %667 = vmatprep.subr.bf16.mxu0 0
      %668 = vmatpush1.bf16.xpose.msra.mxu0 0
      %669 = vmatprep.subr.bf16.mxu0 0
      %670 = vmatpush1.bf16.xpose.msra.mxu0 0
      %671 = vmatprep.subr.bf16.mxu0 0
      %672 = vmatpush1.bf16.xpose.msra.mxu0 0
      %673 = vmatprep.subr.bf16.mxu0 0
      %674 = vmatpush1.bf16.xpose.msra.mxu0 0
      %675 = vmatprep.subr.bf16.mxu0 0
      %676 = vmatpush1.bf16.xpose.msra.mxu0 0
      %677 = vmatprep.mubr.bf16.mxu0 0
      %678 = vmatmul.mubr.bf16.gmra.mrb[0].mxu0 %v640
      %v679 = vpop.f32.mrb[0].mxu0
      %v680 = vadd.f32 %v514, %v679
      %v681 = vpop.f32.mrb[0].mxu0
      %v682 = vpop.f32.mrb[0].mxu0
      %v683 = vpop.f32.mrb[0].mxu0
      %684 = vdwg.mxu0
      %v685 = vsel %vm565, %v680, -inf
      %686 = vmax.xlane.f32.xlu0 %v685
      %v687 = vpop.xlane.xlu0 %686
      %v688 = vsub.f32 %v680, %v687
      %v689 = vmul.f32 %v688, 1.442695
      %v690 = vpow.pop %v689
      %v691 = vsel %vm565, %v690, 0.0
      %692 = vadd.xlane.f32.xlu0 %v691
      %v693 = vpop.xlane.xlu0 %692
      %v694 = vrcp.pop %v693
      %v695 = vmul.f32 %v690, %v694
      %v696 = vpack.c.bf16 %v695, %v695
      %v698 = vunpack.c.l.b16 %v628
      %v699 = vpack.c.b16 %v698, %v698
      %700 = vrot.lane.b32.xlu0 %v699, 112
      %v701 = vpop.permute.xlu0 %700
      %v703 = vsel %vm565, %v696, 0
      %v706 = vsel %vm581, %v701, 0
      %708 = vmatprep.subr.bf16.mxu0 0
      %709 = vmatpush1.bf16.msra.mxu0 %v706
      %710 = vmatprep.subr.bf16.mxu0 0
      %711 = vmatpush1.bf16.msra.mxu0 0
      %712 = vmatprep.subr.bf16.mxu0 0
      %713 = vmatpush1.bf16.msra.mxu0 0
      %714 = vmatprep.subr.bf16.mxu0 0
      %715 = vmatpush1.bf16.msra.mxu0 0
      %716 = vmatprep.subr.bf16.mxu0 0
      %717 = vmatpush1.bf16.msra.mxu0 0
      %718 = vmatprep.subr.bf16.mxu0 0
      %719 = vmatpush1.bf16.msra.mxu0 0
      %720 = vmatprep.subr.bf16.mxu0 0
      %721 = vmatpush1.bf16.msra.mxu0 0
      %722 = vmatprep.subr.bf16.mxu0 0
      %723 = vmatpush1.bf16.msra.mxu0 0
      %724 = vmatprep.subr.bf16.mxu0 0
      %725 = vmatpush1.bf16.msra.mxu0 0
      %726 = vmatprep.subr.bf16.mxu0 0
      %727 = vmatpush1.bf16.msra.mxu0 0
      %728 = vmatprep.subr.bf16.mxu0 0
      %729 = vmatpush1.bf16.msra.mxu0 0
      %730 = vmatprep.subr.bf16.mxu0 0
      %731 = vmatpush1.bf16.msra.mxu0 0
      %732 = vmatprep.subr.bf16.mxu0 0
      %733 = vmatpush1.bf16.msra.mxu0 0
      %734 = vmatprep.subr.bf16.mxu0 0
      %735 = vmatpush1.bf16.msra.mxu0 0
      %736 = vmatprep.subr.bf16.mxu0 0
      %737 = vmatpush1.bf16.msra.mxu0 0
      %738 = vmatprep.subr.bf16.mxu0 0
      %739 = vmatpush1.bf16.msra.mxu0 0
      %740 = vmatprep.mubr.bf16.mxu0 0
      %741 = vmatmul.mubr.bf16.gmra.mrb[0].mxu0 %v703
      %v742 = vpop.f32.mrb[0].mxu0
      %v743 = vadd.f32 0.0, %v742
      %v744 = vpop.f32.mrb[0].mxu0
      %v745 = vpop.f32.mrb[0].mxu0
      %v746 = vpop.f32.mrb[0].mxu0
      %747 = vdwg.mxu0
      %749 = vrot.lane.b32.xlu0 %v743, 16
      %v750 = vpop.permute.xlu0 %749
      %vm752 = vcmask 261248
      %753 = vst.msk [vmem:[%s308] sm:$0xff] %vm752, %v750
      %p754 = scmp.lt.s32.totalorder %s21, 1
      %s755 = scalar_select %p754, %s21, 1
      %p756 = scmp.lt.s32.totalorder %s22, 0
      %s757 = scalar_select %p756, %s22, 0
      %s758 = sadd.s32 %s757, %s755
      %s759 = smul.addr %s758, 8
      %s760 = scalar_lea.vmem %s6, %s759
      // Predicated region
      $region45: #{decoder_forward.12} parent=43 // pred_check
        %p761 = pneg %p192
      $region46: #{decoder_forward.12} parent=43 // pred_check_branch
        %763 = sbr.rel (%p761) target = $region48
      $region47: #{decoder_forward.12} parent=43 // pred_region
        _
      $region48: #{decoder_forward.12} parent=43 // pred_fallthru
        _
    $region44: #{decoder_forward.12} parent=5 // pred_fallthru
      _
    %p764 = scmp.le.s32.totalorder 2, %s12
    // Predicated region
    $region49: #{decoder_forward.12} parent=5 // pred_check
      %p765 = pneg %p764
    $region50: #{decoder_forward.12} parent=5 // pred_check_branch
      %767 = sbr.rel (%p765) target = $region52
    $region51: #{decoder_forward.12} parent=5 // pred_region
      %s768 = ssub.s32 %s12, 2
      // Predicated region
      $region53: #{decoder_forward.12} parent=51 // pred_check
        %p769 = pneg %p198
      $region54: #{decoder_forward.12} parent=51 // pred_check_branch
        %771 = sbr.rel (%p769) target = $region56
      $region55: #{decoder_forward.12} parent=51 // pred_region
        %p772 = scmp.lt.s32.totalorder %s23, 1
        %s773 = scalar_select %p772, %s23, 1
        %p774 = scmp.lt.s32.totalorder %s24, 0
        %s775 = scalar_select %p774, %s24, 0
        %s776 = sadd.s32 %s775, %s773
        %s777 = smul.addr %s776, 8
        %s778 = scalar_lea.vmem %s6, %s777
      $region56: #{decoder_forward.12} parent=51 // pred_fallthru
        _
    $region52: #{decoder_forward.12} parent=5 // pred_fallthru
      _
  $region6: #{decoder_forward.12} parent=0 // loop_footer
    %s16 = sadd.s32 1, %s12
  $region7: #{decoder_forward.12} parent=0 // loop_footer_branch
    %11 = sbr.rel target = $region3
  $region8: #{decoder_forward.12} parent=0 // loop_exit
    _

// kernel: decoder_forward.14
$region0: #{decoder_forward.14}
  #allocation0 [shape = 'u32[]', space=smem, size = 0x4, offset = 0x4, fixed_abs, tag = 'smem constant byte address 0x4 - core index']
  #allocation1 [shape = 'u32[144,128]{1,0:T(1,128)}', space=vmem, size = 0x12000, scoped, tag = 'internal scratch']
  #allocation2 [shape = 'bf16[8,32]{1,0:T(8,128)(2,1)}', space=vmem, size = 0x800, scoped, tag = 'scratch operand']
  #allocation3 [shape = 'bf16[8,32]{1,0:T(8,128)(2,1)}', space=vmem, size = 0x800, scoped, tag = 'scratch operand']
  #allocation4 [shape = 'bf16[8,32]{1,0:T(8,128)(2,1)}', space=vmem, size = 0x800, scoped, tag = 'scratch operand']
  %s0 = inlined_call_operand.vmem [shape: f32[2,8,32], index: 0, kind: input, shape index: {}]
  %s1 = inlined_call_operand.vmem [shape: f32[2,8,32], index: 1, kind: input, shape index: {}]
  %s2 = inlined_call_operand.vmem [shape: s32[2,1,8], index: 2, kind: input, shape index: {}]
  %s3 = inlined_call_operand.vmem [shape: bf16[32,32], index: 3, kind: input, shape index: {}]
  %s4 = inlined_call_operand.vmem [shape: bf16[32,32], index: 4, kind: input, shape index: {}]
  %s5 = inlined_call_operand.vmem [shape: bf16[32,32], index: 5, kind: input, shape index: {}]
  %s6 = inlined_call_operand.vmem [shape: f32[2,8,32], index: 6, kind: output, shape index: {}]
  %s7 = sld [smem:[#allocation0]]
  $region57: #{decoder_forward.14} parent=0
    _
  %s9 = ssub.s32 1, %s7
  %s10 = scalar_select 0, %s9, %s7
  loop: start=0, step=1, limit=4
  $region2: #{decoder_forward.14} parent=0 // loop_pre_header
    _
  $region3: #{decoder_forward.14} parent=0 // loop_header
    %s12 = sphi 0, %s16
    %p13 = scmp.ge.s32.totalorder %s12, 4
    %s19 = sphi 0, %s31
    %s20 = sphi 0, %s27
    %s21 = sphi 0, %s19
    %s22 = sphi 0, %s20
    %s23 = sphi 0, %s21
    %s24 = sphi 0, %s22
    %s36 = sphi 0, %s38
    %s39 = sphi 0, %s36
    %s40 = sphi 0, %s39
    %s56 = sphi 0, %s40
    %s62 = sphi 0, %s64
    %s65 = sphi 0, %s62
    %s66 = sphi 0, %s65
    %s82 = sphi 0, %s66
    %s88 = sphi 0, %s90
    %s91 = sphi 0, %s88
    %s92 = sphi 0, %s91
    %s108 = sphi 0, %s92
    %s112 = sphi 0, %s112
    %s114 = sphi 0, %s112
    %s115 = sphi 0, %s114
    %s129 = sphi 0, %s115
    %s133 = sphi 0, %s133
    %s135 = sphi 0, %s133
    %s136 = sphi 0, %s135
    %s150 = sphi 0, %s136
    %s154 = sphi 0, %s154
    %s156 = sphi 0, %s154
    %s157 = sphi 0, %s156
    %s171 = sphi 0, %s157
    %s179 = sphi 0, %s181
    %s182 = sphi 0, %s179
    %s183 = sphi 0, %s182
    %s199 = sphi 0, %s183
  $region4: #{decoder_forward.14} parent=0 // loop_header_branch
    %15 = sbr.rel (%p13) target = $region8
  $region5: #{decoder_forward.14} parent=0 // loop_body
    %s17 = ssub.s32 %s12, 1
    %s18 = ssub.s32 %s12, 2
    %s25 = sadd.s32 1, %s20
    %p26 = scmp.ge.s32.totalorder %s25, 1
    %s27 = scalar_select %p26, 0, %s25
    %s28 = sadd.s32 1, %s19
    %s29 = scalar_select %p26, %s28, %s19
    %p30 = scmp.ge.s32.totalorder %s29, 2
    %s31 = scalar_select %p30, 0, %s29
    %s32 = ssub.s32 %s19, %s31
    %s33 = ssub.s32 %s20, %s27
    %s34 = sor.u32 %s32, %s33
    %p35 = scmp.eq.s32.totalorder %s34, 0
    %s37 = sadd.s32 %s36, 1
    %s38 = scalar_select %p35, %s36, %s37
    %p41 = pneg %p35
    %p42 = scmp.eq.s32.totalorder %s12, 1
    %p43 = por %p41, %p42
    %p44 = scmp.ne.s32.totalorder %s36, %s39
    %p45 = scmp.eq.s32.totalorder %s12, 0
    %p46 = por %p44, %p45
    %p47 = scmp.ne.s32.totalorder %s36, %s39
    %p48 = scmp.eq.s32.totalorder %s17, 1
    %p49 = por %p47, %p48
    %p50 = scmp.ne.s32.totalorder %s39, %s40
    %p51 = scmp.eq.s32.totalorder %s17, 0
    %p52 = por %p50, %p51
    %p53 = scmp.ne.s32.totalorder %s39, %s40
    %p54 = scmp.eq.s32.totalorder %s18, 1
    %p55 = por %p53, %p54
    %p57 = scmp.ne.s32.totalorder %s40, %s56
    %p58 = scmp.eq.s32.totalorder %s18, 0
    %p59 = por %p57, %p58
    %s60 = ssub.s32 %s19, %s31
    %p61 = scmp.eq.s32.totalorder %s60, 0
    %s63 = sadd.s32 %s62, 1
    %s64 = scalar_select %p61, %s62, %s63
    %p67 = pneg %p61
    %p68 = scmp.eq.s32.totalorder %s12, 1
    %p69 = por %p67, %p68
    %p70 = scmp.ne.s32.totalorder %s62, %s65
    %p71 = scmp.eq.s32.totalorder %s12, 0
    %p72 = por %p70, %p71
    %p73 = scmp.ne.s32.totalorder %s62, %s65
    %p74 = scmp.eq.s32.totalorder %s17, 1
    %p75 = por %p73, %p74
    %p76 = scmp.ne.s32.totalorder %s65, %s66
    %p77 = scmp.eq.s32.totalorder %s17, 0
    %p78 = por %p76, %p77
    %p79 = scmp.ne.s32.totalorder %s65, %s66
    %p80 = scmp.eq.s32.totalorder %s18, 1
    %p81 = por %p79, %p80
    %p83 = scmp.ne.s32.totalorder %s66, %s82
    %p84 = scmp.eq.s32.totalorder %s18, 0
    %p85 = por %p83, %p84
    %s86 = ssub.s32 %s19, %s31
    %p87 = scmp.eq.s32.totalorder %s86, 0
    %s89 = sadd.s32 %s88, 1
    %s90 = scalar_select %p87, %s88, %s89
    %p93 = pneg %p87
    %p94 = scmp.eq.s32.totalorder %s12, 1
    %p95 = por %p93, %p94
    %p96 = scmp.ne.s32.totalorder %s88, %s91
    %p97 = scmp.eq.s32.totalorder %s12, 0
    %p98 = por %p96, %p97
    %p99 = scmp.ne.s32.totalorder %s88, %s91
    %p100 = scmp.eq.s32.totalorder %s17, 1
    %p101 = por %p99, %p100
    %p102 = scmp.ne.s32.totalorder %s91, %s92
    %p103 = scmp.eq.s32.totalorder %s17, 0
    %p104 = por %p102, %p103
    %p105 = scmp.ne.s32.totalorder %s91, %s92
    %p106 = scmp.eq.s32.totalorder %s18, 1
    %p107 = por %p105, %p106
    %p109 = scmp.ne.s32.totalorder %s92, %s108
    %p110 = scmp.eq.s32.totalorder %s18, 0
    %p111 = por %p109, %p110
    %s113 = sadd.s32 %s112, 1
    %p116 = scmp.eq.s32.totalorder %s12, 1
    %p117 = scmp.ne.s32.totalorder %s112, %s114
    %p118 = scmp.eq.s32.totalorder %s12, 0
    %p119 = por %p117, %p118
    %p120 = scmp.ne.s32.totalorder %s112, %s114
    %p121 = scmp.eq.s32.totalorder %s17, 1
    %p122 = por %p120, %p121
    %p123 = scmp.ne.s32.totalorder %s114, %s115
    %p124 = scmp.eq.s32.totalorder %s17, 0
    %p125 = por %p123, %p124
    %p126 = scmp.ne.s32.totalorder %s114, %s115
    %p127 = scmp.eq.s32.totalorder %s18, 1
    %p128 = por %p126, %p127
    %p130 = scmp.ne.s32.totalorder %s115, %s129
    %p131 = scmp.eq.s32.totalorder %s18, 0
    %p132 = por %p130, %p131
    %s134 = sadd.s32 %s133, 1
    %p137 = scmp.eq.s32.totalorder %s12, 1
    %p138 = scmp.ne.s32.totalorder %s133, %s135
    %p139 = scmp.eq.s32.totalorder %s12, 0
    %p140 = por %p138, %p139
    %p141 = scmp.ne.s32.totalorder %s133, %s135
    %p142 = scmp.eq.s32.totalorder %s17, 1
    %p143 = por %p141, %p142
    %p144 = scmp.ne.s32.totalorder %s135, %s136
    %p145 = scmp.eq.s32.totalorder %s17, 0
    %p146 = por %p144, %p145
    %p147 = scmp.ne.s32.totalorder %s135, %s136
    %p148 = scmp.eq.s32.totalorder %s18, 1
    %p149 = por %p147, %p148
    %p151 = scmp.ne.s32.totalorder %s136, %s150
    %p152 = scmp.eq.s32.totalorder %s18, 0
    %p153 = por %p151, %p152
    %s155 = sadd.s32 %s154, 1
    %p158 = scmp.eq.s32.totalorder %s12, 1
    %p159 = scmp.ne.s32.totalorder %s154, %s156
    %p160 = scmp.eq.s32.totalorder %s12, 0
    %p161 = por %p159, %p160
    %p162 = scmp.ne.s32.totalorder %s154, %s156
    %p163 = scmp.eq.s32.totalorder %s17, 1
    %p164 = por %p162, %p163
    %p165 = scmp.ne.s32.totalorder %s156, %s157
    %p166 = scmp.eq.s32.totalorder %s17, 0
    %p167 = por %p165, %p166
    %p168 = scmp.ne.s32.totalorder %s156, %s157
    %p169 = scmp.eq.s32.totalorder %s18, 1
    %p170 = por %p168, %p169
    %p172 = scmp.ne.s32.totalorder %s157, %s171
    %p173 = scmp.eq.s32.totalorder %s18, 0
    %p174 = por %p172, %p173
    %s175 = ssub.s32 %s19, %s31
    %s176 = ssub.s32 %s20, %s27
    %s177 = sor.u32 %s175, %s176
    %p178 = scmp.eq.s32.totalorder %s177, 0
    %s180 = sadd.s32 %s179, 1
    %s181 = scalar_select %p178, %s179, %s180
    %p184 = pneg %p178
    %p185 = scmp.eq.s32.totalorder %s12, 1
    %p186 = por %p184, %p185
    %p187 = scmp.ne.s32.totalorder %s179, %s182
    %p188 = scmp.eq.s32.totalorder %s12, 0
    %p189 = por %p187, %p188
    %p190 = scmp.ne.s32.totalorder %s179, %s182
    %p191 = scmp.eq.s32.totalorder %s17, 1
    %p192 = por %p190, %p191
    %p193 = scmp.ne.s32.totalorder %s182, %s183
    %p194 = scmp.eq.s32.totalorder %s17, 0
    %p195 = por %p193, %p194
    %p196 = scmp.ne.s32.totalorder %s182, %s183
    %p197 = scmp.eq.s32.totalorder %s18, 1
    %p198 = por %p196, %p197
    %p200 = scmp.ne.s32.totalorder %s183, %s199
    %p201 = scmp.eq.s32.totalorder %s18, 0
    %p202 = por %p200, %p201
    %p203 = scmp.le.s32.totalorder 1, %s12
    %p204 = scmp.lt.s32.totalorder %s12, 3
    %p205 = pnand %p203, %p204
    %p206 = pneg %p205
    // Predicated region
    $region9: #{decoder_forward.14} parent=5 // pred_check
      _
    $region10: #{decoder_forward.14} parent=5 // pred_check_branch
      %208 = sbr.rel (%p205) target = $region12
    $region11: #{decoder_forward.14} parent=5 // pred_region
      %s209 = ssub.s32 %s12, 1
      // Predicated region
      $region13: #{decoder_forward.14} parent=11 // pred_check
        %p210 = pneg %p125
      $region14: #{decoder_forward.14} parent=11 // pred_check_branch
        %212 = sbr.rel (%p210) target = $region16
      $region15: #{decoder_forward.14} parent=11 // pred_region
        _
      $region16: #{decoder_forward.14} parent=11 // pred_fallthru
        _
      // Predicated region
      $region17: #{decoder_forward.14} parent=11 // pred_check
        %p213 = pneg %p146
      $region18: #{decoder_forward.14} parent=11 // pred_check_branch
        %215 = sbr.rel (%p213) target = $region20
      $region19: #{decoder_forward.14} parent=11 // pred_region
        _
      $region20: #{decoder_forward.14} parent=11 // pred_fallthru
        _
      // Predicated region
      $region21: #{decoder_forward.14} parent=11 // pred_check
        %p216 = pneg %p167
      $region22: #{decoder_forward.14} parent=11 // pred_check_branch
        %218 = sbr.rel (%p216) target = $region24
      $region23: #{decoder_forward.14} parent=11 // pred_region
        _
      $region24: #{decoder_forward.14} parent=11 // pred_fallthru
        _
    $region12: #{decoder_forward.14} parent=5 // pred_fallthru
      _
    %p219 = scmp.lt.s32.totalorder %s12, 2
    // Predicated region
    $region25: #{decoder_forward.14} parent=5 // pred_check
      %p220 = pneg %p219
    $region26: #{decoder_forward.14} parent=5 // pred_check_branch
      %222 = sbr.rel (%p220) target = $region28
    $region27: #{decoder_forward.14} parent=5 // pred_region
      // Predicated region
      $region29: #{decoder_forward.14} parent=27 // pred_check
        %p223 = pneg %p46
      $region30: #{decoder_forward.14} parent=27 // pred_check_branch
        %225 = sbr.rel (%p223) target = $region32
      $region31: #{decoder_forward.14} parent=27 // pred_region
        %p226 = scmp.lt.s32.totalorder %s19, 1
        %s227 = scalar_select %p226, %s19, 1
        %p228 = scmp.lt.s32.totalorder %s20, 0
        %s229 = scalar_select %p228, %s20, 0
        %s230 = sadd.s32 %s229, %s227
        %s231 = smul.addr %s230, 8
        %s232 = scalar_lea.vmem %s0, %s231
      $region32: #{decoder_forward.14} parent=27 // pred_fallthru
        _
      // Predicated region
      $region33: #{decoder_forward.14} parent=27 // pred_check
        %p233 = pneg %p72
      $region34: #{decoder_forward.14} parent=27 // pred_check_branch
        %235 = sbr.rel (%p233) target = $region36
      $region35: #{decoder_forward.14} parent=27 // pred_region
        %p236 = scmp.lt.s32.totalorder %s19, 1
        %s237 = scalar_select %p236, %s19, 1
        %s238 = smul.addr %s237, 8
        %s239 = scalar_lea.vmem %s1, %s238
      $region36: #{decoder_forward.14} parent=27 // pred_fallthru
        _
      // Predicated region
      $region37: #{decoder_forward.14} parent=27 // pred_check
        %p240 = pneg %p98
      $region38: #{decoder_forward.14} parent=27 // pred_check_branch
        %242 = sbr.rel (%p240) target = $region40
      $region39: #{decoder_forward.14} parent=27 // pred_region
        %p243 = scmp.lt.s32.totalorder %s19, 1
        %s244 = scalar_select %p243, %s19, 1
        %s245 = scalar_lea.vmem %s2, %s244
      $region40: #{decoder_forward.14} parent=27 // pred_fallthru
        _
    $region28: #{decoder_forward.14} parent=5 // pred_fallthru
      _
    %p246 = scmp.le.s32.totalorder 1, %s12
    %p247 = scmp.lt.s32.totalorder %s12, 3
    %p248 = pnand %p246, %p247
    %p249 = pneg %p248
    // Predicated region
    $region41: #{decoder_forward.14} parent=5 // pred_check
      _
    $region42: #{decoder_forward.14} parent=5 // pred_check_branch
      %251 = sbr.rel (%p248) target = $region44
    $region43: #{decoder_forward.14} parent=5 // pred_region
      %s252 = ssub.s32 %s12, 1
      %p253 = scmp.lt.s32.totalorder %s21, 1
      %s254 = scalar_select %p253, %s21, 1
      %p255 = scmp.lt.s32.totalorder %s22, 0
      %s256 = scalar_select %p255, %s22, 0
      %s257 = sadd.s32 %s256, %s254
      %s258 = smul.addr %s257, 8
      %s259 = scalar_lea.vmem %s0, %s258
      %p260 = pneg %p52
      %p261 = pneg %p49
      %p262 = scmp.lt.s32.totalorder %s21, 1
      %s263 = scalar_select %p262, %s21, 1
      %s264 = smul.addr %s263, 8
      %s265 = scalar_lea.vmem %s1, %s264
      %p266 = pneg %p78
      %p267 = pneg %p75
      %p268 = scmp.lt.s32.totalorder %s21, 1
      %s269 = scalar_select %p268, %s21, 1
      %s270 = scalar_lea.vmem %s2, %s269
      %p271 = pneg %p104
      %p272 = pneg %p101
      %p273 = pneg %p125
      %p274 = pneg %p122
      %p275 = pneg %p146
      %p276 = pneg %p143
      %p277 = pneg %p167
      %p278 = pneg %p164
      %p279 = pneg %p195
      %p280 = pneg %p192
      %p281 = scmp.lt.s32.totalorder %s21, 1
      %s282 = scalar_select %p281, %s21, 1
      %p283 = scmp.lt.s32.totalorder %s22, 0
      %s284 = scalar_select %p283, %s22, 0
      %s285 = sadd.s32 %s284, %s282
      %s286 = smul.addr %s285, 8
      %s287 = scalar_lea.vmem %s6, %s286
      %p288 = scmp.lt.s32.totalorder %s21, 1
      %s289 = scalar_select %p288, %s21, 1
      %p290 = scmp.lt.s32.totalorder %s22, 0
      %s291 = scalar_select %p290, %s22, 0
      %s292 = sadd.s32 %s291, %s289
      %s293 = smul.addr %s292, 8
      %s294 = scalar_lea.vmem %s0, %s293
      %p295 = scmp.lt.s32.totalorder %s21, 1
      %s296 = scalar_select %p295, %s21, 1
      %s297 = smul.addr %s296, 8
      %s298 = scalar_lea.vmem %s1, %s297
      %p299 = scmp.lt.s32.totalorder %s21, 1
      %s300 = scalar_select %p299, %s21, 1
      %s301 = scalar_lea.vmem %s2, %s300
      %p302 = scmp.lt.s32.totalorder %s21, 1
      %s303 = scalar_select %p302, %s21, 1
      %p304 = scmp.lt.s32.totalorder %s22, 0
      %s305 = scalar_select %p304, %s22, 0
      %s306 = sadd.s32 %s305, %s303
      %s307 = smul.addr %s306, 8
      %s308 = scalar_lea.vmem %s6, %s307
      %v310 = vld [vmem:[%s294] sm:$0xff]
      %v311 = vpack.c.bf16 %v310, %v310
      %v312 = vld [vmem:[%s298] sm:$0xff]
      %v313 = vpack.c.bf16 %v312, %v312
      %v314 = vld [vmem:[%s3] sm:$0xf]
      %v315 = vld [vmem:[%s3 + $0x4] sm:$0xf]
      %v316 = vld [vmem:[%s3 + $0x8] sm:$0xf]
      %v317 = vld [vmem:[%s3 + $0xc] sm:$0xf]
      %v322 = vunpack.c.l.b16 %v314
      %v323 = vunpack.c.l.b16 %v315
      %v324 = vunpack.c.l.b16 %v316
      %v325 = vunpack.c.l.b16 %v317
      %v326 = vpack.c.b16 %v323, %v322
      %v327 = vpack.c.b16 %v325, %v324
      %vm330 = vcmask 261120
      %v332 = vsel %vm330, %v311, 0
      %334 = vmatprep.subr.bf16.mxu0 0
      %335 = vmatpush1.bf16.msra.mxu0 %v326
      %336 = vmatprep.subr.bf16.mxu0 0
      %337 = vmatpush1.bf16.msra.mxu0 %v327
      %338 = vmatprep.subr.bf16.mxu0 0
      %339 = vmatpush1.bf16.msra.mxu0 0
      %340 = vmatprep.subr.bf16.mxu0 0
      %341 = vmatpush1.bf16.msra.mxu0 0
      %342 = vmatprep.subr.bf16.mxu0 0
      %343 = vmatpush1.bf16.msra.mxu0 0
      %344 = vmatprep.subr.bf16.mxu0 0
      %345 = vmatpush1.bf16.msra.mxu0 0
      %346 = vmatprep.subr.bf16.mxu0 0
      %347 = vmatpush1.bf16.msra.mxu0 0
      %348 = vmatprep.subr.bf16.mxu0 0
      %349 = vmatpush1.bf16.msra.mxu0 0
      %350 = vmatprep.subr.bf16.mxu0 0
      %351 = vmatpush1.bf16.msra.mxu0 0
      %352 = vmatprep.subr.bf16.mxu0 0
      %353 = vmatpush1.bf16.msra.mxu0 0
      %354 = vmatprep.subr.bf16.mxu0 0
      %355 = vmatpush1.bf16.msra.mxu0 0
      %356 = vmatprep.subr.bf16.mxu0 0
      %357 = vmatpush1.bf16.msra.mxu0 0
      %358 = vmatprep.subr.bf16.mxu0 0
      %359 = vmatpush1.bf16.msra.mxu0 0
      %360 = vmatprep.subr.bf16.mxu0 0
      %361 = vmatpush1.bf16.msra.mxu0 0
      %362 = vmatprep.subr.bf16.mxu0 0
      %363 = vmatpush1.bf16.msra.mxu0 0
      %364 = vmatprep.subr.bf16.mxu0 0
      %365 = vmatpush1.bf16.msra.mxu0 0
      %366 = vmatprep.mubr.bf16.mxu0 0
      %367 = vmatmul.mubr.bf16.gmra.mrb[0].mxu0 %v332
      %v368 = vpop.f32.mrb[0].mxu0
      %v369 = vadd.f32 0.0, %v368
      %v370 = vpop.f32.mrb[0].mxu0
      %v371 = vpop.f32.mrb[0].mxu0
      %v372 = vpop.f32.mrb[0].mxu0
      %373 = vdwg.mxu0
      %v374 = vpack.c.bf16 %v369, %v369
      %vm375 = vcmask 257024
      %376 = vst.msk [vmem:[#allocation2] sm:$0xf] %vm375, %v374
      %v377 = vld [vmem:[%s4] sm:$0xf]
      %v378 = vld [vmem:[%s4 + $0x4] sm:$0xf]
      %v379 = vld [vmem:[%s4 + $0x8] sm:$0xf]
      %v380 = vld [vmem:[%s4 + $0xc] sm:$0xf]
      %v385 = vunpack.c.l.b16 %v377
      %v386 = vunpack.c.l.b16 %v378
      %v387 = vunpack.c.l.b16 %v379
      %v388 = vunpack.c.l.b16 %v380
      %v389 = vpack.c.b16 %v386, %v385
      %v390 = vpack.c.b16 %v388, %v387
      %v394 = vsel %vm330, %v313, 0
      %396 = vmatprep.subr.bf16.mxu0 0
      %397 = vmatpush1.bf16.msra.mxu0 %v389
      %398 = vmatprep.subr.bf16.mxu0 0
      %399 = vmatpush1.bf16.msra.mxu0 %v390
      %400 = vmatprep.subr.bf16.mxu0 0
      %401 = vmatpush1.bf16.msra.mxu0 0
      %402 = vmatprep.subr.bf16.mxu0 0
      %403 = vmatpush1.bf16.msra.mxu0 0
      %404 = vmatprep.subr.bf16.mxu0 0
      %405 = vmatpush1.bf16.msra.mxu0 0
      %406 = vmatprep.subr.bf16.mxu0 0
      %407 = vmatpush1.bf16.msra.mxu0 0
      %408 = vmatprep.subr.bf16.mxu0 0
      %409 = vmatpush1.bf16.msra.mxu0 0
      %410 = vmatprep.subr.bf16.mxu0 0
      %411 = vmatpush1.bf16.msra.mxu0 0
      %412 = vmatprep.subr.bf16.mxu0 0
      %413 = vmatpush1.bf16.msra.mxu0 0
      %414 = vmatprep.subr.bf16.mxu0 0
      %415 = vmatpush1.bf16.msra.mxu0 0
      %416 = vmatprep.subr.bf16.mxu0 0
      %417 = vmatpush1.bf16.msra.mxu0 0
      %418 = vmatprep.subr.bf16.mxu0 0
      %419 = vmatpush1.bf16.msra.mxu0 0
      %420 = vmatprep.subr.bf16.mxu0 0
      %421 = vmatpush1.bf16.msra.mxu0 0
      %422 = vmatprep.subr.bf16.mxu0 0
      %423 = vmatpush1.bf16.msra.mxu0 0
      %424 = vmatprep.subr.bf16.mxu0 0
      %425 = vmatpush1.bf16.msra.mxu0 0
      %426 = vmatprep.subr.bf16.mxu0 0
      %427 = vmatpush1.bf16.msra.mxu0 0
      %428 = vmatprep.mubr.bf16.mxu0 0
      %429 = vmatmul.mubr.bf16.gmra.mrb[0].mxu0 %v394
      %v430 = vpop.f32.mrb[0].mxu0
      %v431 = vadd.f32 0.0, %v430
      %v432 = vpop.f32.mrb[0].mxu0
      %v433 = vpop.f32.mrb[0].mxu0
      %v434 = vpop.f32.mrb[0].mxu0
      %435 = vdwg.mxu0
      %v436 = vpack.c.bf16 %v431, %v431
      %437 = vst.msk [vmem:[#allocation3] sm:$0xf] %vm375, %v436
      %v438 = vld [vmem:[%s5] sm:$0xf]
      %v439 = vld [vmem:[%s5 + $0x4] sm:$0xf]
      %v440 = vld [vmem:[%s5 + $0x8] sm:$0xf]
      %v441 = vld [vmem:[%s5 + $0xc] sm:$0xf]
      %v446 = vunpack.c.l.b16 %v438
      %v447 = vunpack.c.l.b16 %v439
      %v448 = vunpack.c.l.b16 %v440
      %v449 = vunpack.c.l.b16 %v441
      %v450 = vpack.c.b16 %v447, %v446
      %v451 = vpack.c.b16 %v449, %v448
      %454 = vmatprep.subr.bf16.mxu0 0
      %455 = vmatpush1.bf16.msra.mxu0 %v450
      %456 = vmatprep.subr.bf16.mxu0 0
      %457 = vmatpush1.bf16.msra.mxu0 %v451
      %458 = vmatprep.subr.bf16.mxu0 0
      %459 = vmatpush1.bf16.msra.mxu0 0
      %460 = vmatprep.subr.bf16.mxu0 0
      %461 = vmatpush1.bf16.msra.mxu0 0
      %462 = vmatprep.subr.bf16.mxu0 0
      %463 = vmatpush1.bf16.msra.mxu0 0
      %464 = vmatprep.subr.bf16.mxu0 0
      %465 = vmatpush1.bf16.msra.mxu0 0
      %466 = vmatprep.subr.bf16.mxu0 0
      %467 = vmatpush1.bf16.msra.mxu0 0
      %468 = vmatprep.subr.bf16.mxu0 0
      %469 = vmatpush1.bf16.msra.mxu0 0
      %470 = vmatprep.subr.bf16.mxu0 0
      %471 = vmatpush1.bf16.msra.mxu0 0
      %472 = vmatprep.subr.bf16.mxu0 0
      %473 = vmatpush1.bf16.msra.mxu0 0
      %474 = vmatprep.subr.bf16.mxu0 0
      %475 = vmatpush1.bf16.msra.mxu0 0
      %476 = vmatprep.subr.bf16.mxu0 0
      %477 = vmatpush1.bf16.msra.mxu0 0
      %478 = vmatprep.subr.bf16.mxu0 0
      %479 = vmatpush1.bf16.msra.mxu0 0
      %480 = vmatprep.subr.bf16.mxu0 0
      %481 = vmatpush1.bf16.msra.mxu0 0
      %482 = vmatprep.subr.bf16.mxu0 0
      %483 = vmatpush1.bf16.msra.mxu0 0
      %484 = vmatprep.subr.bf16.mxu0 0
      %485 = vmatpush1.bf16.msra.mxu0 0
      %486 = vmatprep.mubr.bf16.mxu0 0
      %487 = vmatmul.mubr.bf16.gmra.mrb[0].mxu0 %v394
      %v488 = vpop.f32.mrb[0].mxu0
      %v489 = vadd.f32 0.0, %v488
      %v490 = vpop.f32.mrb[0].mxu0
      %v491 = vpop.f32.mrb[0].mxu0
      %v492 = vpop.f32.mrb[0].mxu0
      %493 = vdwg.mxu0
      %v494 = vpack.c.bf16 %v489, %v489
      %495 = vst.msk [vmem:[#allocation4] sm:$0xf] %vm375, %v494
      %v496 = vld [vmem:[%s301] sm:$0x1]
      %vm497 = vcmp.ne.s32.totalorder %v496, 0
      %v498 = vsel %vm497, 0.0, -1e+09
      %v499 = vld [vmem:[#allocation2] sm:$0xf]
      %v500 = vld [vmem:[#allocation3] sm:$0xf]
      %v501 = vld [vmem:[#allocation4] sm:$0xf]
      %v503 = vlaneseq
      %v504 = vshrl.u32 %v503, 7
      %v505 = vsub.s32 0, %v504
      %v506 = vrot.slane %v498, %v505
      %vm508 = vcmask 130048
      %v510 = vsel %vm508, %v499, 0
      %v513 = vsel %vm508, %v500, 0
      %515 = vmatprep.subr.bf16.mxu0 0
      %516 = vmatpush1.bf16.xpose.msra.mxu0 %v513
      %517 = vmatprep.subr.bf16.mxu0 0
      %518 = vmatpush1.bf16.xpose.msra.mxu0 0
      %519 = vmatprep.subr.bf16.mxu0 0
      %520 = vmatpush1.bf16.xpose.msra.mxu0 0
      %521 = vmatprep.subr.bf16.mxu0 0
      %522 = vmatpush1.bf16.xpose.msra.mxu0 0
      %523 = vmatprep.subr.bf16.mxu0 0
      %524 = vmatpush1.bf16.xpose.msra.mxu0 0
      %525 = vmatprep.subr.bf16.mxu0 0
      %526 = vmatpush1.bf16.xpose.msra.mxu0 0
      %527 = vmatprep.subr.bf16.mxu0 0
      %528 = vmatpush1.bf16.xpose.msra.mxu0 0
      %529 = vmatprep.subr.bf16.mxu0 0
      %530 = vmatpush1.bf16.xpose.msra.mxu0 0
      %531 = vmatprep.subr.bf16.mxu0 0
      %532 = vmatpush1.bf16.xpose.msra.mxu0 0
      %533 = vmatprep.subr.bf16.mxu0 0
      %534 = vmatpush1.bf16.xpose.msra.mxu0 0
      %535 = vmatprep.subr.bf16.mxu0 0
      %536 = vmatpush1.bf16.xpose.msra.mxu0 0
      %537 = vmatprep.subr.bf16.mxu0 0
      %538 = vmatpush1.bf16.xpose.msra.mxu0 0
      %539 = vmatprep.subr.bf16.mxu0 0
      %540 = vmatpush1.bf16.xpose.msra.mxu0 0
      %541 = vmatprep.subr.bf16.mxu0 0
      %542 = vmatpush1.bf16.xpose.msra.mxu0 0
      %543 = vmatprep.subr.bf16.mxu0 0
      %544 = vmatpush1.bf16.xpose.msra.mxu0 0
      %545 = vmatprep.subr.bf16.mxu0 0
      %546 = vmatpush1.bf16.xpose.msra.mxu0 0
      %547 = vmatprep.mubr.bf16.mxu0 0
      %548 = vmatmul.mubr.bf16.gmra.mrb[0].mxu0 %v510
      %v549 = vpop.f32.mrb[0].mxu0
      %v550 = vadd.f32 %v506, %v549
      %v551 = vpop.f32.mrb[0].mxu0
      %v552 = vpop.f32.mrb[0].mxu0
      %v553 = vpop.f32.mrb[0].mxu0
      %554 = vdwg.mxu0
      %vm555 = vcmask 64512
      %v556 = vsel %vm555, %v550, -inf
      %557 = vmax.xlane.f32.xlu0 %v556
      %v558 = vpop.xlane.xlu0 %557
      %v559 = vsub.f32 %v550, %v558
      %v560 = vmul.f32 %v559, 1.442695
      %v561 = vpow.pop %v560
      %v562 = vsel %vm555, %v561, 0.0
      %563 = vadd.xlane.f32.xlu0 %v562
      %v564 = vpop.xlane.xlu0 %563
      %v565 = vrcp.pop %v564
      %v566 = vmul.f32 %v561, %v565
      %v567 = vpack.c.bf16 %v566, %v566
      %v569 = vsel %vm555, %v567, 0
      %vm571 = vcmask 1043456
      %v573 = vsel %vm571, %v501, 0
      %575 = vmatprep.subr.bf16.mxu0 0
      %576 = vmatpush1.bf16.msra.mxu0 %v573
      %577 = vmatprep.subr.bf16.mxu0 0
      %578 = vmatpush1.bf16.msra.mxu0 0
      %579 = vmatprep.subr.bf16.mxu0 0
      %580 = vmatpush1.bf16.msra.mxu0 0
      %581 = vmatprep.subr.bf16.mxu0 0
      %582 = vmatpush1.bf16.msra.mxu0 0
      %583 = vmatprep.subr.bf16.mxu0 0
      %584 = vmatpush1.bf16.msra.mxu0 0
      %585 = vmatprep.subr.bf16.mxu0 0
      %586 = vmatpush1.bf16.msra.mxu0 0
      %587 = vmatprep.subr.bf16.mxu0 0
      %588 = vmatpush1.bf16.msra.mxu0 0
      %589 = vmatprep.subr.bf16.mxu0 0
      %590 = vmatpush1.bf16.msra.mxu0 0
      %591 = vmatprep.subr.bf16.mxu0 0
      %592 = vmatpush1.bf16.msra.mxu0 0
      %593 = vmatprep.subr.bf16.mxu0 0
      %594 = vmatpush1.bf16.msra.mxu0 0
      %595 = vmatprep.subr.bf16.mxu0 0
      %596 = vmatpush1.bf16.msra.mxu0 0
      %597 = vmatprep.subr.bf16.mxu0 0
      %598 = vmatpush1.bf16.msra.mxu0 0
      %599 = vmatprep.subr.bf16.mxu0 0
      %600 = vmatpush1.bf16.msra.mxu0 0
      %601 = vmatprep.subr.bf16.mxu0 0
      %602 = vmatpush1.bf16.msra.mxu0 0
      %603 = vmatprep.subr.bf16.mxu0 0
      %604 = vmatpush1.bf16.msra.mxu0 0
      %605 = vmatprep.subr.bf16.mxu0 0
      %606 = vmatpush1.bf16.msra.mxu0 0
      %607 = vmatprep.mubr.bf16.mxu0 0
      %608 = vmatmul.mubr.bf16.gmra.mrb[0].mxu0 %v569
      %v609 = vpop.f32.mrb[0].mxu0
      %v610 = vadd.f32 0.0, %v609
      %v611 = vpop.f32.mrb[0].mxu0
      %v612 = vpop.f32.mrb[0].mxu0
      %v613 = vpop.f32.mrb[0].mxu0
      %614 = vdwg.mxu0
      %615 = vst.msk [vmem:[%s308] sm:$0xff] %vm508, %v610
      %v616 = vld [vmem:[#allocation2] sm:$0xf]
      %v617 = vld [vmem:[#allocation3] sm:$0xf]
      %v618 = vld [vmem:[#allocation4] sm:$0xf]
      %v620 = vunpack.c.l.b16 %v616
      %v621 = vpack.c.b16 %v620, %v620
      %622 = vrot.lane.b32.xlu0 %v621, 112
      %v623 = vpop.permute.xlu0 %622
      %v625 = vunpack.c.l.b16 %v617
      %v626 = vpack.c.b16 %v625, %v625
      %627 = vrot.lane.b32.xlu0 %v626, 112
      %v628 = vpop.permute.xlu0 %627
      %v630 = vsel %vm508, %v623, 0
      %v633 = vsel %vm508, %v628, 0
      %635 = vmatprep.subr.bf16.mxu0 0
      %636 = vmatpush1.bf16.xpose.msra.mxu0 %v633
      %637 = vmatprep.subr.bf16.mxu0 0
      %638 = vmatpush1.bf16.xpose.msra.mxu0 0
      %639 = vmatprep.subr.bf16.mxu0 0
      %640 = vmatpush1.bf16.xpose.msra.mxu0 0
      %641 = vmatprep.subr.bf16.mxu0 0
      %642 = vmatpush1.bf16.xpose.msra.mxu0 0
      %643 = vmatprep.subr.bf16.mxu0 0
      %644 = vmatpush1.bf16.xpose.msra.mxu0 0
      %645 = vmatprep.subr.bf16.mxu0 0
      %646 = vmatpush1.bf16.xpose.msra.mxu0 0
      %647 = vmatprep.subr.bf16.mxu0 0
      %648 = vmatpush1.bf16.xpose.msra.mxu0 0
      %649 = vmatprep.subr.bf16.mxu0 0
      %650 = vmatpush1.bf16.xpose.msra.mxu0 0
      %651 = vmatprep.subr.bf16.mxu0 0
      %652 = vmatpush1.bf16.xpose.msra.mxu0 0
      %653 = vmatprep.subr.bf16.mxu0 0
      %654 = vmatpush1.bf16.xpose.msra.mxu0 0
      %655 = vmatprep.subr.bf16.mxu0 0
      %656 = vmatpush1.bf16.xpose.msra.mxu0 0
      %657 = vmatprep.subr.bf16.mxu0 0
      %658 = vmatpush1.bf16.xpose.msra.mxu0 0
      %659 = vmatprep.subr.bf16.mxu0 0
      %660 = vmatpush1.bf16.xpose.msra.mxu0 0
      %661 = vmatprep.subr.bf16.mxu0 0
      %662 = vmatpush1.bf16.xpose.msra.mxu0 0
      %663 = vmatprep.subr.bf16.mxu0 0
      %664 = vmatpush1.bf16.xpose.msra.mxu0 0
      %665 = vmatprep.subr.bf16.mxu0 0
      %666 = vmatpush1.bf16.xpose.msra.mxu0 0
      %667 = vmatprep.mubr.bf16.mxu0 0
      %668 = vmatmul.mubr.bf16.gmra.mrb[0].mxu0 %v630
      %v669 = vpop.f32.mrb[0].mxu0
      %v670 = vadd.f32 %v506, %v669
      %v671 = vpop.f32.mrb[0].mxu0
      %v672 = vpop.f32.mrb[0].mxu0
      %v673 = vpop.f32.mrb[0].mxu0
      %674 = vdwg.mxu0
      %v675 = vsel %vm555, %v670, -inf
      %676 = vmax.xlane.f32.xlu0 %v675
      %v677 = vpop.xlane.xlu0 %676
      %v678 = vsub.f32 %v670, %v677
      %v679 = vmul.f32 %v678, 1.442695
      %v680 = vpow.pop %v679
      %v681 = vsel %vm555, %v680, 0.0
      %682 = vadd.xlane.f32.xlu0 %v681
      %v683 = vpop.xlane.xlu0 %682
      %v684 = vrcp.pop %v683
      %v685 = vmul.f32 %v680, %v684
      %v686 = vpack.c.bf16 %v685, %v685
      %v688 = vunpack.c.l.b16 %v618
      %v689 = vpack.c.b16 %v688, %v688
      %690 = vrot.lane.b32.xlu0 %v689, 112
      %v691 = vpop.permute.xlu0 %690
      %v693 = vsel %vm555, %v686, 0
      %v696 = vsel %vm571, %v691, 0
      %698 = vmatprep.subr.bf16.mxu0 0
      %699 = vmatpush1.bf16.msra.mxu0 %v696
      %700 = vmatprep.subr.bf16.mxu0 0
      %701 = vmatpush1.bf16.msra.mxu0 0
      %702 = vmatprep.subr.bf16.mxu0 0
      %703 = vmatpush1.bf16.msra.mxu0 0
      %704 = vmatprep.subr.bf16.mxu0 0
      %705 = vmatpush1.bf16.msra.mxu0 0
      %706 = vmatprep.subr.bf16.mxu0 0
      %707 = vmatpush1.bf16.msra.mxu0 0
      %708 = vmatprep.subr.bf16.mxu0 0
      %709 = vmatpush1.bf16.msra.mxu0 0
      %710 = vmatprep.subr.bf16.mxu0 0
      %711 = vmatpush1.bf16.msra.mxu0 0
      %712 = vmatprep.subr.bf16.mxu0 0
      %713 = vmatpush1.bf16.msra.mxu0 0
      %714 = vmatprep.subr.bf16.mxu0 0
      %715 = vmatpush1.bf16.msra.mxu0 0
      %716 = vmatprep.subr.bf16.mxu0 0
      %717 = vmatpush1.bf16.msra.mxu0 0
      %718 = vmatprep.subr.bf16.mxu0 0
      %719 = vmatpush1.bf16.msra.mxu0 0
      %720 = vmatprep.subr.bf16.mxu0 0
      %721 = vmatpush1.bf16.msra.mxu0 0
      %722 = vmatprep.subr.bf16.mxu0 0
      %723 = vmatpush1.bf16.msra.mxu0 0
      %724 = vmatprep.subr.bf16.mxu0 0
      %725 = vmatpush1.bf16.msra.mxu0 0
      %726 = vmatprep.subr.bf16.mxu0 0
      %727 = vmatpush1.bf16.msra.mxu0 0
      %728 = vmatprep.subr.bf16.mxu0 0
      %729 = vmatpush1.bf16.msra.mxu0 0
      %730 = vmatprep.mubr.bf16.mxu0 0
      %731 = vmatmul.mubr.bf16.gmra.mrb[0].mxu0 %v693
      %v732 = vpop.f32.mrb[0].mxu0
      %v733 = vadd.f32 0.0, %v732
      %v734 = vpop.f32.mrb[0].mxu0
      %v735 = vpop.f32.mrb[0].mxu0
      %v736 = vpop.f32.mrb[0].mxu0
      %737 = vdwg.mxu0
      %739 = vrot.lane.b32.xlu0 %v733, 16
      %v740 = vpop.permute.xlu0 %739
      %vm742 = vcmask 261248
      %743 = vst.msk [vmem:[%s308] sm:$0xff] %vm742, %v740
      %p744 = scmp.lt.s32.totalorder %s21, 1
      %s745 = scalar_select %p744, %s21, 1
      %p746 = scmp.lt.s32.totalorder %s22, 0
      %s747 = scalar_select %p746, %s22, 0
      %s748 = sadd.s32 %s747, %s745
      %s749 = smul.addr %s748, 8
      %s750 = scalar_lea.vmem %s6, %s749
      // Predicated region
      $region45: #{decoder_forward.14} parent=43 // pred_check
        %p751 = pneg %p192
      $region46: #{decoder_forward.14} parent=43 // pred_check_branch
        %753 = sbr.rel (%p751) target = $region48
      $region47: #{decoder_forward.14} parent=43 // pred_region
        _
      $region48: #{decoder_forward.14} parent=43 // pred_fallthru
        _
    $region44: #{decoder_forward.14} parent=5 // pred_fallthru
      _
    %p754 = scmp.le.s32.totalorder 2, %s12
    // Predicated region
    $region49: #{decoder_forward.14} parent=5 // pred_check
      %p755 = pneg %p754
    $region50: #{decoder_forward.14} parent=5 // pred_check_branch
      %757 = sbr.rel (%p755) target = $region52
    $region51: #{decoder_forward.14} parent=5 // pred_region
      %s758 = ssub.s32 %s12, 2
      // Predicated region
      $region53: #{decoder_forward.14} parent=51 // pred_check
        %p759 = pneg %p198
      $region54: #{decoder_forward.14} parent=51 // pred_check_branch
        %761 = sbr.rel (%p759) target = $region56
      $region55: #{decoder_forward.14} parent=51 // pred_region
        %p762 = scmp.lt.s32.totalorder %s23, 1
        %s763 = scalar_select %p762, %s23, 1
        %p764 = scmp.lt.s32.totalorder %s24, 0
        %s765 = scalar_select %p764, %s24, 0
        %s766 = sadd.s32 %s765, %s763
        %s767 = smul.addr %s766, 8
        %s768 = scalar_lea.vmem %s6, %s767
      $region56: #{decoder_forward.14} parent=51 // pred_fallthru
        _
    $region52: #{decoder_forward.14} parent=5 // pred_fallthru
      _
  $region6: #{decoder_forward.14} parent=0 // loop_footer
    %s16 = sadd.s32 1, %s12
  $region7: #{decoder_forward.14} parent=0 // loop_footer_branch
    %11 = sbr.rel target = $region3
  $region8: #{decoder_forward.14} parent=0 // loop_exit
    _

// kernel: decoder_forward.21
$region0: #{decoder_forward.21}
  #allocation0 [shape = 'u32[]', space=smem, size = 0x4, offset = 0x4, fixed_abs, tag = 'smem constant byte address 0x4 - core index']
  #allocation1 [shape = 'u32[144,128]{1,0:T(1,128)}', space=vmem, size = 0x12000, scoped, tag = 'internal scratch']
  %s0 = inlined_call_operand.vmem [shape: f32[16,32], index: 0, kind: input, shape index: {}]
  %s1 = inlined_call_operand.vmem [shape: bf16[32,64], index: 1, kind: input, shape index: {}]
  %s2 = inlined_call_operand.vmem [shape: f32[1,64], index: 2, kind: input, shape index: {}]
  %s3 = inlined_call_operand.vmem [shape: bf16[64,32], index: 3, kind: input, shape index: {}]
  %s4 = inlined_call_operand.vmem [shape: f32[1,32], index: 4, kind: input, shape index: {}]
  %s5 = inlined_call_operand.vmem [shape: f32[1,32], index: 5, kind: input, shape index: {}]
  %s6 = inlined_call_operand.vmem [shape: f32[1,32], index: 6, kind: input, shape index: {}]
  %s7 = inlined_call_operand.hbm [shape: f32[16,32], index: 7, kind: output, shape index: {}]
  %s8 = sld [smem:[#allocation0]]
  $region38: #{decoder_forward.21} parent=0
    _
  %s10 = ssub.s32 1, %s8
  %s11 = scalar_select 0, %s10, %s8
  $region1: #{decoder_forward.21} parent=0
    #allocation2 [shape = 'u8[8192]{0}', space=vmem, size = 0x2000, scoped, tag = 'output window, operand 0, single buffered']
    #allocation3 [shape = 's32[1]{0}', space=sflag, size = 0x4, scoped, tag = 'scoped memory for decoder_forward.21']
    %12 = vsyncpa [#allocation3], 0
    // Predicated region
    $region2: #{decoder_forward.21} parent=1 // pred_check
      _
    $region3: #{decoder_forward.21} parent=1 // pred_check_branch
      %14 = sbr.rel (0) target = $region5
    $region4: #{decoder_forward.21} parent=1 // pred_region
      _
    $region5: #{decoder_forward.21} parent=1 // pred_fallthru
      _
    // Predicated region
    $region6: #{decoder_forward.21} parent=1 // pred_check
      _
    $region7: #{decoder_forward.21} parent=1 // pred_check_branch
      %16 = sbr.rel (0) target = $region9
    $region8: #{decoder_forward.21} parent=1 // pred_region
      _
    $region9: #{decoder_forward.21} parent=1 // pred_fallthru
      _
    // Predicated region
    $region10: #{decoder_forward.21} parent=1 // pred_check
      _
    $region11: #{decoder_forward.21} parent=1 // pred_check_branch
      %18 = sbr.rel (0) target = $region13
    $region12: #{decoder_forward.21} parent=1 // pred_region
      _
    $region13: #{decoder_forward.21} parent=1 // pred_fallthru
      _
    // Predicated region
    $region14: #{decoder_forward.21} parent=1 // pred_check
      _
    $region15: #{decoder_forward.21} parent=1 // pred_check_branch
      %20 = sbr.rel (0) target = $region17
    $region16: #{decoder_forward.21} parent=1 // pred_region
      _
    $region17: #{decoder_forward.21} parent=1 // pred_fallthru
      _
    // Predicated region
    $region18: #{decoder_forward.21} parent=1 // pred_check
      _
    $region19: #{decoder_forward.21} parent=1 // pred_check_branch
      %22 = sbr.rel (0) target = $region21
    $region20: #{decoder_forward.21} parent=1 // pred_region
      _
    $region21: #{decoder_forward.21} parent=1 // pred_fallthru
      _
    // Predicated region
    $region22: #{decoder_forward.21} parent=1 // pred_check
      _
    $region23: #{decoder_forward.21} parent=1 // pred_check_branch
      %24 = sbr.rel (0) target = $region25
    $region24: #{decoder_forward.21} parent=1 // pred_region
      _
    $region25: #{decoder_forward.21} parent=1 // pred_fallthru
      _
    // Predicated region
    $region26: #{decoder_forward.21} parent=1 // pred_check
      _
    $region27: #{decoder_forward.21} parent=1 // pred_check_branch
      %26 = sbr.rel (0) target = $region29
    $region28: #{decoder_forward.21} parent=1 // pred_region
      _
    $region29: #{decoder_forward.21} parent=1 // pred_fallthru
      _
    %v28 = vld [vmem:[%s0] sm:$0xff]
    %v29 = vld [vmem:[%s0 + $0x8] sm:$0xff]
    %v30 = vpack.c.bf16 %v29, %v28
    %v31 = vld [vmem:[%s1] sm:$0xf]
    %v32 = vld [vmem:[%s1 + $0x4] sm:$0xf]
    %v33 = vld [vmem:[%s1 + $0x8] sm:$0xf]
    %v34 = vld [vmem:[%s1 + $0xc] sm:$0xf]
    %v35 = vld [vmem:[%s2] sm:$0x1]
    %v37 = vlaneseq
    %v38 = vshrl.u32 %v37, 7
    %v39 = vsub.s32 0, %v38
    %v40 = vrot.slane %v35, %v39
    %v46 = vunpack.c.l.b16 %v31
    %v47 = vunpack.c.l.b16 %v32
    %v48 = vunpack.c.l.b16 %v33
    %v49 = vunpack.c.l.b16 %v34
    %v50 = vpack.c.b16 %v47, %v46
    %v51 = vpack.c.b16 %v49, %v48
    %vm54 = vcmask 261120
    %v56 = vsel %vm54, %v30, 0
    %58 = vmatprep.subr.bf16.mxu0 0
    %59 = vmatpush1.bf16.msra.mxu0 %v50
    %60 = vmatprep.subr.bf16.mxu0 0
    %61 = vmatpush1.bf16.msra.mxu0 %v51
    %62 = vmatprep.subr.bf16.mxu0 0
    %63 = vmatpush1.bf16.msra.mxu0 0
    %64 = vmatprep.subr.bf16.mxu0 0
    %65 = vmatpush1.bf16.msra.mxu0 0
    %66 = vmatprep.subr.bf16.mxu0 0
    %67 = vmatpush1.bf16.msra.mxu0 0
    %68 = vmatprep.subr.bf16.mxu0 0
    %69 = vmatpush1.bf16.msra.mxu0 0
    %70 = vmatprep.subr.bf16.mxu0 0
    %71 = vmatpush1.bf16.msra.mxu0 0
    %72 = vmatprep.subr.bf16.mxu0 0
    %73 = vmatpush1.bf16.msra.mxu0 0
    %74 = vmatprep.subr.bf16.mxu0 0
    %75 = vmatpush1.bf16.msra.mxu0 0
    %76 = vmatprep.subr.bf16.mxu0 0
    %77 = vmatpush1.bf16.msra.mxu0 0
    %78 = vmatprep.subr.bf16.mxu0 0
    %79 = vmatpush1.bf16.msra.mxu0 0
    %80 = vmatprep.subr.bf16.mxu0 0
    %81 = vmatpush1.bf16.msra.mxu0 0
    %82 = vmatprep.subr.bf16.mxu0 0
    %83 = vmatpush1.bf16.msra.mxu0 0
    %84 = vmatprep.subr.bf16.mxu0 0
    %85 = vmatpush1.bf16.msra.mxu0 0
    %86 = vmatprep.subr.bf16.mxu0 0
    %87 = vmatpush1.bf16.msra.mxu0 0
    %88 = vmatprep.subr.bf16.mxu0 0
    %89 = vmatpush1.bf16.msra.mxu0 0
    %90 = vmatprep.mubr.bf16.mxu0 0
    %91 = vmatmul.mubr.bf16.gmra.mrb[0].mxu0 %v56
    %v92 = vpop.f32.mrb[0].mxu0
    %v93 = vadd.f32 %v40, %v92
    %v94 = vpop.f32.mrb[0].mxu0
    %v95 = vpop.f32.mrb[0].mxu0
    %v96 = vadd.f32 %v40, %v95
    %v97 = vpop.f32.mrb[0].mxu0
    %98 = vdwg.mxu0
    %v99 = vmax.f32 %v93, 0.0
    %v100 = vmax.f32 %v96, 0.0
    %v101 = vpack.c.bf16 %v100, %v99
    %v102 = vld [vmem:[%s3] sm:$0xf]
    %v103 = vld [vmem:[%s3 + $0x4] sm:$0xf]
    %v104 = vld [vmem:[%s3 + $0x8] sm:$0xf]
    %v105 = vld [vmem:[%s3 + $0xc] sm:$0xf]
    %v106 = vld [vmem:[%s3 + $0x10] sm:$0xf]
    %v107 = vld [vmem:[%s3 + $0x14] sm:$0xf]
    %v108 = vld [vmem:[%s3 + $0x18] sm:$0xf]
    %v109 = vld [vmem:[%s3 + $0x1c] sm:$0xf]
    %v110 = vld [vmem:[%s4] sm:$0x1]
    %v112 = vlaneseq
    %v113 = vshrl.u32 %v112, 7
    %v114 = vsub.s32 0, %v113
    %v115 = vrot.slane %v110, %v114
    %v125 = vunpack.c.l.b16 %v102
    %v126 = vunpack.c.l.b16 %v103
    %v127 = vunpack.c.l.b16 %v104
    %v128 = vunpack.c.l.b16 %v105
    %v129 = vunpack.c.l.b16 %v106
    %v130 = vunpack.c.l.b16 %v107
    %v131 = vunpack.c.l.b16 %v108
    %v132 = vunpack.c.l.b16 %v109
    %v133 = vpack.c.b16 %v126, %v125
    %v134 = vpack.c.b16 %v128, %v127
    %v135 = vpack.c.b16 %v130, %v129
    %v136 = vpack.c.b16 %v132, %v131
    %vm141 = vcmask 523264
    %v143 = vsel %vm141, %v101, 0
    %145 = vmatprep.subr.bf16.mxu0 0
    %146 = vmatpush1.bf16.msra.mxu0 %v133
    %147 = vmatprep.subr.bf16.mxu0 0
    %148 = vmatpush1.bf16.msra.mxu0 %v134
    %149 = vmatprep.subr.bf16.mxu0 0
    %150 = vmatpush1.bf16.msra.mxu0 %v135
    %151 = vmatprep.subr.bf16.mxu0 0
    %152 = vmatpush1.bf16.msra.mxu0 %v136
    %153 = vmatprep.subr.bf16.mxu0 0
    %154 = vmatpush1.bf16.msra.mxu0 0
    %155 = vmatprep.subr.bf16.mxu0 0
    %156 = vmatpush1.bf16.msra.mxu0 0
    %157 = vmatprep.subr.bf16.mxu0 0
    %158 = vmatpush1.bf16.msra.mxu0 0
    %159 = vmatprep.subr.bf16.mxu0 0
    %160 = vmatpush1.bf16.msra.mxu0 0
    %161 = vmatprep.subr.bf16.mxu0 0
    %162 = vmatpush1.bf16.msra.mxu0 0
    %163 = vmatprep.subr.bf16.mxu0 0
    %164 = vmatpush1.bf16.msra.mxu0 0
    %165 = vmatprep.subr.bf16.mxu0 0
    %166 = vmatpush1.bf16.msra.mxu0 0
    %167 = vmatprep.subr.bf16.mxu0 0
    %168 = vmatpush1.bf16.msra.mxu0 0
    %169 = vmatprep.subr.bf16.mxu0 0
    %170 = vmatpush1.bf16.msra.mxu0 0
    %171 = vmatprep.subr.bf16.mxu0 0
    %172 = vmatpush1.bf16.msra.mxu0 0
    %173 = vmatprep.subr.bf16.mxu0 0
    %174 = vmatpush1.bf16.msra.mxu0 0
    %175 = vmatprep.subr.bf16.mxu0 0
    %176 = vmatpush1.bf16.msra.mxu0 0
    %177 = vmatprep.mubr.bf16.mxu0 0
    %178 = vmatmul.mubr.bf16.gmra.mrb[0].mxu0 %v143
    %v179 = vpop.f32.mrb[0].mxu0
    %v180 = vadd.f32 %v115, %v179
    %v181 = vpop.f32.mrb[0].mxu0
    %v182 = vpop.f32.mrb[0].mxu0
    %v183 = vadd.f32 %v115, %v182
    %v184 = vpop.f32.mrb[0].mxu0
    %185 = vdwg.mxu0
    %v186 = vadd.f32 %v180, %v28
    %v187 = vadd.f32 %v183, %v29
    %v188 = vld [vmem:[%s5] sm:$0x1]
    %v189 = vld [vmem:[%s6] sm:$0x1]
    %v190 = vsel %vm54, %v186, 0.0
    %191 = vadd.xlane.f32.xlu0 %v190
    %v192 = vpop.xlane.xlu0 %191
    %v193 = vsel %vm54, %v187, 0.0
    %194 = vadd.xlane.f32.xlu0 %v193
    %v195 = vpop.xlane.xlu0 %194
    %v196 = vrcp.pop 32.0
    %v197 = vmul.f32 %v192, %v196
    %v198 = vmul.f32 %v195, %v196
    %v199 = vsub.f32 %v186, %v197
    %v200 = vsub.f32 %v187, %v198
    %v201 = vmul.f32 %v199, %v199
    %v202 = vmul.f32 %v200, %v200
    %v203 = vsel %vm54, %v201, 0.0
    %204 = vadd.xlane.f32.xlu0 %v203
    %v205 = vpop.xlane.xlu0 %204
    %v206 = vsel %vm54, %v202, 0.0
    %207 = vadd.xlane.f32.xlu0 %v206
    %v208 = vpop.xlane.xlu0 %207
    %v209 = vmul.f32 %v205, %v196
    %v210 = vmul.f32 %v208, %v196
    %v211 = vadd.f32 %v209, 1e-06
    %v212 = vadd.f32 %v210, 1e-06
    %v213 = vrsqrt.pop %v211
    %v214 = vrsqrt.pop %v212
    %v215 = vmul.f32 %v199, %v213
    %v216 = vmul.f32 %v200, %v214
    %v218 = vlaneseq
    %v219 = vshrl.u32 %v218, 7
    %v220 = vsub.s32 0, %v219
    %v221 = vrot.slane %v188, %v220
    %v223 = vmul.f32 %v215, %v221
    %v224 = vmul.f32 %v216, %v221
    %v226 = vlaneseq
    %v227 = vshrl.u32 %v226, 7
    %v228 = vsub.s32 0, %v227
    %v229 = vrot.slane %v189, %v228
    %v231 = vadd.f32 %v223, %v229
    %v232 = vadd.f32 %v224, %v229
    %233 = vst.msk [vmem:[#allocation2] sm:$0xff] %vm54, %v231
    %234 = vst.msk [vmem:[#allocation2 + $0x8] sm:$0xff] %vm54, %v232
    // Predicated region
    $region30: #{decoder_forward.21} parent=1 // pred_check
      _
    $region31: #{decoder_forward.21} parent=1 // pred_check_branch
      %236 = sbr.rel (0) target = $region33
    $region32: #{decoder_forward.21} parent=1 // pred_region
      %s238 = ssub.s32 256, 256
      %239 = vsyncadd [#allocation3], %s238
      %s240 = sshll.u32 [#allocation2], 4
      %s241 = int_to_ptr.vmem [resolvable:$true] %s240
      %246 = dma.vmem_to_hbm [thread:$0]  %s241, 256, %s7, [#allocation3], 128, 128, 8
    $region33: #{decoder_forward.21} parent=1 // pred_fallthru
      _
    // Predicated region
    $region34: #{decoder_forward.21} parent=1 // pred_check
      _
    $region35: #{decoder_forward.21} parent=1 // pred_check_branch
      %248 = sbr.rel (0) target = $region37
    $region36: #{decoder_forward.21} parent=1 // pred_region
      %249 = dma.done [#allocation3], 256
    $region37: #{decoder_forward.21} parent=1 // pred_fallthru
      _
    %250 = vsyncpa [#allocation3], 1

// kernel: decoder_forward.16
$region0: #{decoder_forward.16}
  #allocation0 [shape = 'u32[]', space=smem, size = 0x4, offset = 0x4, fixed_abs, tag = 'smem constant byte address 0x4 - core index']
  #allocation1 [shape = 'u32[144,128]{1,0:T(1,128)}', space=vmem, size = 0x12000, scoped, tag = 'internal scratch']
  %s0 = inlined_call_operand.vmem [shape: f32[16,32], index: 0, kind: input, shape index: {}]
  %s1 = inlined_call_operand.vmem [shape: bf16[32,64], index: 1, kind: input, shape index: {}]
  %s2 = inlined_call_operand.vmem [shape: f32[1,64], index: 2, kind: input, shape index: {}]
  %s3 = inlined_call_operand.vmem [shape: bf16[64,32], index: 3, kind: input, shape index: {}]
  %s4 = inlined_call_operand.vmem [shape: f32[1,32], index: 4, kind: input, shape index: {}]
  %s5 = inlined_call_operand.vmem [shape: f32[1,32], index: 5, kind: input, shape index: {}]
  %s6 = inlined_call_operand.vmem [shape: f32[1,32], index: 6, kind: input, shape index: {}]
  %s7 = inlined_call_operand.vmem [shape: f32[16,32], index: 7, kind: output, shape index: {}]
  %s8 = sld [smem:[#allocation0]]
  $region38: #{decoder_forward.16} parent=0
    _
  %s10 = ssub.s32 1, %s8
  %s11 = scalar_select 0, %s10, %s8
  // Predicated region
  $region2: #{decoder_forward.16} parent=0 // pred_check
    _
  $region3: #{decoder_forward.16} parent=0 // pred_check_branch
    %13 = sbr.rel (0) target = $region5
  $region4: #{decoder_forward.16} parent=0 // pred_region
    _
  $region5: #{decoder_forward.16} parent=0 // pred_fallthru
    _
  // Predicated region
  $region6: #{decoder_forward.16} parent=0 // pred_check
    _
  $region7: #{decoder_forward.16} parent=0 // pred_check_branch
    %15 = sbr.rel (0) target = $region9
  $region8: #{decoder_forward.16} parent=0 // pred_region
    _
  $region9: #{decoder_forward.16} parent=0 // pred_fallthru
    _
  // Predicated region
  $region10: #{decoder_forward.16} parent=0 // pred_check
    _
  $region11: #{decoder_forward.16} parent=0 // pred_check_branch
    %17 = sbr.rel (0) target = $region13
  $region12: #{decoder_forward.16} parent=0 // pred_region
    _
  $region13: #{decoder_forward.16} parent=0 // pred_fallthru
    _
  // Predicated region
  $region14: #{decoder_forward.16} parent=0 // pred_check
    _
  $region15: #{decoder_forward.16} parent=0 // pred_check_branch
    %19 = sbr.rel (0) target = $region17
  $region16: #{decoder_forward.16} parent=0 // pred_region
    _
  $region17: #{decoder_forward.16} parent=0 // pred_fallthru
    _
  // Predicated region
  $region18: #{decoder_forward.16} parent=0 // pred_check
    _
  $region19: #{decoder_forward.16} parent=0 // pred_check_branch
    %21 = sbr.rel (0) target = $region21
  $region20: #{decoder_forward.16} parent=0 // pred_region
    _
  $region21: #{decoder_forward.16} parent=0 // pred_fallthru
    _
  // Predicated region
  $region22: #{decoder_forward.16} parent=0 // pred_check
    _
  $region23: #{decoder_forward.16} parent=0 // pred_check_branch
    %23 = sbr.rel (0) target = $region25
  $region24: #{decoder_forward.16} parent=0 // pred_region
    _
  $region25: #{decoder_forward.16} parent=0 // pred_fallthru
    _
  // Predicated region
  $region26: #{decoder_forward.16} parent=0 // pred_check
    _
  $region27: #{decoder_forward.16} parent=0 // pred_check_branch
    %25 = sbr.rel (0) target = $region29
  $region28: #{decoder_forward.16} parent=0 // pred_region
    _
  $region29: #{decoder_forward.16} parent=0 // pred_fallthru
    _
  %v27 = vld [vmem:[%s0] sm:$0xff]
  %v28 = vld [vmem:[%s0 + $0x8] sm:$0xff]
  %v29 = vpack.c.bf16 %v28, %v27
  %v30 = vld [vmem:[%s1] sm:$0xf]
  %v31 = vld [vmem:[%s1 + $0x4] sm:$0xf]
  %v32 = vld [vmem:[%s1 + $0x8] sm:$0xf]
  %v33 = vld [vmem:[%s1 + $0xc] sm:$0xf]
  %v34 = vld [vmem:[%s2] sm:$0x1]
  %v36 = vlaneseq
  %v37 = vshrl.u32 %v36, 7
  %v38 = vsub.s32 0, %v37
  %v39 = vrot.slane %v34, %v38
  %v45 = vunpack.c.l.b16 %v30
  %v46 = vunpack.c.l.b16 %v31
  %v47 = vunpack.c.l.b16 %v32
  %v48 = vunpack.c.l.b16 %v33
  %v49 = vpack.c.b16 %v46, %v45
  %v50 = vpack.c.b16 %v48, %v47
  %vm53 = vcmask 261120
  %v55 = vsel %vm53, %v29, 0
  %57 = vmatprep.subr.bf16.mxu0 0
  %58 = vmatpush1.bf16.msra.mxu0 %v49
  %59 = vmatprep.subr.bf16.mxu0 0
  %60 = vmatpush1.bf16.msra.mxu0 %v50
  %61 = vmatprep.subr.bf16.mxu0 0
  %62 = vmatpush1.bf16.msra.mxu0 0
  %63 = vmatprep.subr.bf16.mxu0 0
  %64 = vmatpush1.bf16.msra.mxu0 0
  %65 = vmatprep.subr.bf16.mxu0 0
  %66 = vmatpush1.bf16.msra.mxu0 0
  %67 = vmatprep.subr.bf16.mxu0 0
  %68 = vmatpush1.bf16.msra.mxu0 0
  %69 = vmatprep.subr.bf16.mxu0 0
  %70 = vmatpush1.bf16.msra.mxu0 0
  %71 = vmatprep.subr.bf16.mxu0 0
  %72 = vmatpush1.bf16.msra.mxu0 0
  %73 = vmatprep.subr.bf16.mxu0 0
  %74 = vmatpush1.bf16.msra.mxu0 0
  %75 = vmatprep.subr.bf16.mxu0 0
  %76 = vmatpush1.bf16.msra.mxu0 0
  %77 = vmatprep.subr.bf16.mxu0 0
  %78 = vmatpush1.bf16.msra.mxu0 0
  %79 = vmatprep.subr.bf16.mxu0 0
  %80 = vmatpush1.bf16.msra.mxu0 0
  %81 = vmatprep.subr.bf16.mxu0 0
  %82 = vmatpush1.bf16.msra.mxu0 0
  %83 = vmatprep.subr.bf16.mxu0 0
  %84 = vmatpush1.bf16.msra.mxu0 0
  %85 = vmatprep.subr.bf16.mxu0 0
  %86 = vmatpush1.bf16.msra.mxu0 0
  %87 = vmatprep.subr.bf16.mxu0 0
  %88 = vmatpush1.bf16.msra.mxu0 0
  %89 = vmatprep.mubr.bf16.mxu0 0
  %90 = vmatmul.mubr.bf16.gmra.mrb[0].mxu0 %v55
  %v91 = vpop.f32.mrb[0].mxu0
  %v92 = vadd.f32 %v39, %v91
  %v93 = vpop.f32.mrb[0].mxu0
  %v94 = vpop.f32.mrb[0].mxu0
  %v95 = vadd.f32 %v39, %v94
  %v96 = vpop.f32.mrb[0].mxu0
  %97 = vdwg.mxu0
  %v98 = vmax.f32 %v92, 0.0
  %v99 = vmax.f32 %v95, 0.0
  %v100 = vpack.c.bf16 %v99, %v98
  %v101 = vld [vmem:[%s3] sm:$0xf]
  %v102 = vld [vmem:[%s3 + $0x4] sm:$0xf]
  %v103 = vld [vmem:[%s3 + $0x8] sm:$0xf]
  %v104 = vld [vmem:[%s3 + $0xc] sm:$0xf]
  %v105 = vld [vmem:[%s3 + $0x10] sm:$0xf]
  %v106 = vld [vmem:[%s3 + $0x14] sm:$0xf]
  %v107 = vld [vmem:[%s3 + $0x18] sm:$0xf]
  %v108 = vld [vmem:[%s3 + $0x1c] sm:$0xf]
  %v109 = vld [vmem:[%s4] sm:$0x1]
  %v111 = vlaneseq
  %v112 = vshrl.u32 %v111, 7
  %v113 = vsub.s32 0, %v112
  %v114 = vrot.slane %v109, %v113
  %v124 = vunpack.c.l.b16 %v101
  %v125 = vunpack.c.l.b16 %v102
  %v126 = vunpack.c.l.b16 %v103
  %v127 = vunpack.c.l.b16 %v104
  %v128 = vunpack.c.l.b16 %v105
  %v129 = vunpack.c.l.b16 %v106
  %v130 = vunpack.c.l.b16 %v107
  %v131 = vunpack.c.l.b16 %v108
  %v132 = vpack.c.b16 %v125, %v124
  %v133 = vpack.c.b16 %v127, %v126
  %v134 = vpack.c.b16 %v129, %v128
  %v135 = vpack.c.b16 %v131, %v130
  %vm140 = vcmask 523264
  %v142 = vsel %vm140, %v100, 0
  %144 = vmatprep.subr.bf16.mxu0 0
  %145 = vmatpush1.bf16.msra.mxu0 %v132
  %146 = vmatprep.subr.bf16.mxu0 0
  %147 = vmatpush1.bf16.msra.mxu0 %v133
  %148 = vmatprep.subr.bf16.mxu0 0
  %149 = vmatpush1.bf16.msra.mxu0 %v134
  %150 = vmatprep.subr.bf16.mxu0 0
  %151 = vmatpush1.bf16.msra.mxu0 %v135
  %152 = vmatprep.subr.bf16.mxu0 0
  %153 = vmatpush1.bf16.msra.mxu0 0
  %154 = vmatprep.subr.bf16.mxu0 0
  %155 = vmatpush1.bf16.msra.mxu0 0
  %156 = vmatprep.subr.bf16.mxu0 0
  %157 = vmatpush1.bf16.msra.mxu0 0
  %158 = vmatprep.subr.bf16.mxu0 0
  %159 = vmatpush1.bf16.msra.mxu0 0
  %160 = vmatprep.subr.bf16.mxu0 0
  %161 = vmatpush1.bf16.msra.mxu0 0
  %162 = vmatprep.subr.bf16.mxu0 0
  %163 = vmatpush1.bf16.msra.mxu0 0
  %164 = vmatprep.subr.bf16.mxu0 0
  %165 = vmatpush1.bf16.msra.mxu0 0
  %166 = vmatprep.subr.bf16.mxu0 0
  %167 = vmatpush1.bf16.msra.mxu0 0
  %168 = vmatprep.subr.bf16.mxu0 0
  %169 = vmatpush1.bf16.msra.mxu0 0
  %170 = vmatprep.subr.bf16.mxu0 0
  %171 = vmatpush1.bf16.msra.mxu0 0
  %172 = vmatprep.subr.bf16.mxu0 0
  %173 = vmatpush1.bf16.msra.mxu0 0
  %174 = vmatprep.subr.bf16.mxu0 0
  %175 = vmatpush1.bf16.msra.mxu0 0
  %176 = vmatprep.mubr.bf16.mxu0 0
  %177 = vmatmul.mubr.bf16.gmra.mrb[0].mxu0 %v142
  %v178 = vpop.f32.mrb[0].mxu0
  %v179 = vadd.f32 %v114, %v178
  %v180 = vpop.f32.mrb[0].mxu0
  %v181 = vpop.f32.mrb[0].mxu0
  %v182 = vadd.f32 %v114, %v181
  %v183 = vpop.f32.mrb[0].mxu0
  %184 = vdwg.mxu0
  %v185 = vadd.f32 %v179, %v27
  %v186 = vadd.f32 %v182, %v28
  %v187 = vld [vmem:[%s5] sm:$0x1]
  %v188 = vld [vmem:[%s6] sm:$0x1]
  %v189 = vsel %vm53, %v185, 0.0
  %190 = vadd.xlane.f32.xlu0 %v189
  %v191 = vpop.xlane.xlu0 %190
  %v192 = vsel %vm53, %v186, 0.0
  %193 = vadd.xlane.f32.xlu0 %v192
  %v194 = vpop.xlane.xlu0 %193
  %v195 = vrcp.pop 32.0
  %v196 = vmul.f32 %v191, %v195
  %v197 = vmul.f32 %v194, %v195
  %v198 = vsub.f32 %v185, %v196
  %v199 = vsub.f32 %v186, %v197
  %v200 = vmul.f32 %v198, %v198
  %v201 = vmul.f32 %v199, %v199
  %v202 = vsel %vm53, %v200, 0.0
  %203 = vadd.xlane.f32.xlu0 %v202
  %v204 = vpop.xlane.xlu0 %203
  %v205 = vsel %vm53, %v201, 0.0
  %206 = vadd.xlane.f32.xlu0 %v205
  %v207 = vpop.xlane.xlu0 %206
  %v208 = vmul.f32 %v204, %v195
  %v209 = vmul.f32 %v207, %v195
  %v210 = vadd.f32 %v208, 1e-06
  %v211 = vadd.f32 %v209, 1e-06
  %v212 = vrsqrt.pop %v210
  %v213 = vrsqrt.pop %v211
  %v214 = vmul.f32 %v198, %v212
  %v215 = vmul.f32 %v199, %v213
  %v217 = vlaneseq
  %v218 = vshrl.u32 %v217, 7
  %v219 = vsub.s32 0, %v218
  %v220 = vrot.slane %v187, %v219
  %v222 = vmul.f32 %v214, %v220
  %v223 = vmul.f32 %v215, %v220
  %v225 = vlaneseq
  %v226 = vshrl.u32 %v225, 7
  %v227 = vsub.s32 0, %v226
  %v228 = vrot.slane %v188, %v227
  %v230 = vadd.f32 %v222, %v228
  %v231 = vadd.f32 %v223, %v228
  %232 = vst.msk [vmem:[%s7] sm:$0xff] %vm53, %v230
  %233 = vst.msk [vmem:[%s7 + $0x8] sm:$0xff] %vm53, %v231
  // Predicated region
  $region30: #{decoder_forward.16} parent=0 // pred_check
    _
  $region31: #{decoder_forward.16} parent=0 // pred_check_branch
    %235 = sbr.rel (0) target = $region33
  $region32: #{decoder_forward.16} parent=0 // pred_region
    _
  $region33: #{decoder_forward.16} parent=0 // pred_fallthru
    _
  // Predicated region
  $region34: #{decoder_forward.16} parent=0 // pred_check
    _
  $region35: #{decoder_forward.16} parent=0 // pred_check_branch
    %237 = sbr.rel (0) target = $region37
  $region36: #{decoder_forward.16} parent=0 // pred_region
    _
  $region37: #{decoder_forward.16} parent=0 // pred_fallthru
    _

</llo_original>
